<compile_context>
chip_gen: v7x
topology: tpu7x:2x2x1
jax: 0.10.0
libtpu: 0.0.40
codegen_flags: <defaults>
</compile_context>

<pallas_src>
import functools

import jax
import jax.numpy as jnp
from jax import lax
from jax.experimental import pallas as pl
from jax.experimental.pallas import tpu as pltpu

_EPS = 1e-5


def _round_up(x, m):
    return ((x + m - 1) // m) * m


def _vmem_caps():
    """Generation-aware VMEM limit and K2 tile budget (bytes)."""
    cap = 64 * 1024 * 1024
    try:
        info = pltpu.get_tpu_info()
        cap = int(getattr(info, "vmem_capacity_bytes", cap)) or cap
    except Exception:
        pass
    # 48 MiB on v7x (64 MiB physical), 96 MiB on v5e/v6e (128 MiB physical).
    vmem_limit = max((cap * 3) // 4, cap - (32 << 20))
    k2_budget = max(vmem_limit - (16 << 20), 12 << 20)
    return vmem_limit, k2_budget


def _divisor_tiles(ss):
    cands = [t for t in range(1, ss + 1)
             if ss % t == 0 and (t % 8 == 0 or t == ss)]
    return cands or [t for t in range(1, ss + 1) if ss % t == 0]


def _pick_tile(ss, bytes_per_row, budget):
    cands = _divisor_tiles(ss)
    fitting = [t for t in cands if t * bytes_per_row <= budget]
    return max(fitting) if fitting else min(cands)


def _k1_tile(l, d, h, budget):
    lp = max(8, _round_up(l, 8))
    per_row = lp * (2 * d * 2 + h * 4) + 2 * d * 4   # bf16 feat halves + f32 pre + zi
    t = max(8, (int(budget) // per_row) // 8 * 8)
    return min(t, 256, max(8, _round_up(l, 8)))


def _f1_pre(zi, zall, wd, wm, b):
    """F1 pre-activation for one row tile: |zi-zj| @ Wd + (zi*zj) @ Wm + b."""
    a = zi[:, None, :]                                   # (tile, 1, D)  f32
    c = zall[None, :, :]                                 # (1, Lp, D)    f32
    dif = jnp.abs(a - c).astype(jnp.bfloat16)            # (tile, Lp, D)
    mul = (a * c).astype(jnp.bfloat16)
    pre = jnp.dot(dif, wd, preferred_element_type=jnp.float32)
    pre = pre + jnp.dot(mul, wm, preferred_element_type=jnp.float32)
    return pre + b                                       # (tile, Lp, H) f32


# ----------------------------------------------------------------------------
# Kernel 1: F1 InstanceNorm statistics only (per-row-tile partial sum / sumsq).
# ----------------------------------------------------------------------------
def f1_stats_kernel(zi_ref, zall_ref, wd_ref, wm_ref, b_ref, stats_ref, *, l, tile):
    i = pl.program_id(1)
    pre = _f1_pre(zi_ref[0], zall_ref[0], wd_ref[...], wm_ref[...], b_ref[...])
    lp = pre.shape[1]
    h = pre.shape[2]
    if lp != l:  # padded rows/cols must not pollute the stats
        row = lax.broadcasted_iota(jnp.int32, pre.shape, 0) + i * tile
        col = lax.broadcasted_iota(jnp.int32, pre.shape, 1)
        pre = jnp.where((row < l) & (col < l), pre, 0.0)
    flat = pre.reshape(-1, h)
    stats_ref[0, 0, 0:1, :] = jnp.sum(flat, axis=0, keepdims=True)
    stats_ref[0, 0, 1:2, :] = jnp.sum(flat * flat, axis=0, keepdims=True)


def f1_stats_forward(z_pad, wd, wm, b, *, l, tile, vmem_limit):
    B, Lp, D = z_pad.shape
    H = wd.shape[1]
    nblk = Lp // tile
    kernel = functools.partial(f1_stats_kernel, l=l, tile=tile)
    part = pl.pallas_call(
        kernel,
        out_shape=jax.ShapeDtypeStruct((B, nblk, 2, H), jnp.float32),
        grid=(B, nblk),
        in_specs=[
            pl.BlockSpec((1, tile, D), lambda bb, i: (bb, i, 0)),
            pl.BlockSpec((1, Lp, D), lambda bb, i: (bb, 0, 0)),
            pl.BlockSpec((D, H), lambda bb, i: (0, 0)),
            pl.BlockSpec((D, H), lambda bb, i: (0, 0)),
            pl.BlockSpec((1, H), lambda bb, i: (0, 0)),
        ],
        out_specs=pl.BlockSpec((1, 1, 2, H), lambda bb, i: (bb, i, 0, 0)),
        compiler_params=pltpu.CompilerParams(
            dimension_semantics=("parallel", "parallel"),
            vmem_limit_bytes=vmem_limit),
    )(z_pad, z_pad, wd, wm, b)
    return jnp.sum(part, axis=1)                         # (B, 2, H)


# ----------------------------------------------------------------------------
# Kernel 2: conv1 pre-activation.  Streams att/hot (bf16), recomputes the F1
# branch per row tile, finishes F1's IN+ReLU in-flight, emits bf16 conv_pre
# and per-tile partial IN statistics.
# ----------------------------------------------------------------------------
def conv_pre_kernel(zi_ref, zall_ref, f1s_ref, att_ref, hot_ref,
                    wd_ref, wm_ref, bf1_ref, wf_ref, wa_ref, wh_ref,
                    cpre_ref, cstats_ref, y_sc, *, l, ss, tile):
    t = pl.program_id(1)
    nc = cpre_ref.shape[-1]
    l_eff = min(l, ss)

    # attention_map / hot contributions (1x1 conv == channel matmul).
    y = jnp.dot(att_ref[0], wa_ref[...], preferred_element_type=jnp.float32)
    y = y + jnp.dot(hot_ref[0], wh_ref[...], preferred_element_type=jnp.float32)

    # F1 InstanceNorm parameters (stats from kernel 1, over the l x l map).
    n1 = float(l * l)
    s1 = f1s_ref[0, 0:1, :]
    q1 = f1s_ref[0, 1:2, :]
    m1 = s1 * (1.0 / n1)
    v1 = jnp.maximum(q1 * (1.0 / n1) - m1 * m1, 0.0)
    inv1 = lax.rsqrt(v1 + _EPS)

    def f1_contrib():
        pre = _f1_pre(zi_ref[0], zall_ref[0], wd_ref[...], wm_ref[...],
                      bf1_ref[...])                      # (tile, Lp, H)
        act = jnp.maximum((pre - m1) * inv1, 0.0)
        if l < ss:  # ZeroPad2d: rows >= l contribute zero F1 features
            row = lax.broadcasted_iota(jnp.int32, act.shape, 0) + t * tile
            act = jnp.where(row < l_eff, act, 0.0)
        return jnp.dot(act[:, 0:l_eff, :].astype(jnp.bfloat16), wf_ref[...],
                       preferred_element_type=jnp.float32)   # (tile, l_eff, NC)

    if l >= ss:
        yf = y + f1_contrib()
    else:
        y_sc[...] = y

        @pl.when(t * tile < l_eff)
        def _():
            y_sc[:, 0:l_eff, :] = y_sc[:, 0:l_eff, :] + f1_contrib()

        yf = y_sc[...]

    cpre_ref[0] = yf.astype(cpre_ref.dtype)
    flat = yf.reshape(-1, nc)
    cstats_ref[0, 0, 0:1, :] = jnp.sum(flat, axis=0, keepdims=True)
    cstats_ref[0, 0, 1:2, :] = jnp.sum(flat * flat, axis=0, keepdims=True)


def conv_pre_forward(z_pad, f1_stats, att, hot, wd, wm, bf1, w_f, w_a, w_h,
                     *, l, ss, tile, vmem_limit):
    B, Lp, D = z_pad.shape
    H = wd.shape[1]
    Ca = att.shape[-1]
    Ch = hot.shape[-1]
    NC = w_f.shape[1]
    nblk = ss // tile
    nblkv = Lp // tile
    kernel = functools.partial(conv_pre_kernel, l=l, ss=ss, tile=tile)

    def zi_idx(bb, t):
        # Row tiles fully past l re-read the last valid z block; their F1
        # branch is skipped via pl.when inside the kernel.
        return (bb, jnp.minimum(t, nblkv - 1), 0)

    cpre, cstats_part = pl.pallas_call(
        kernel,
        out_shape=(jax.ShapeDtypeStruct((B, ss, ss, NC), jnp.bfloat16),
                   jax.ShapeDtypeStruct((B, nblk, 2, NC), jnp.float32)),
        grid=(B, nblk),
        in_specs=[
            pl.BlockSpec((1, tile, D), zi_idx),
            pl.BlockSpec((1, Lp, D), lambda bb, t: (bb, 0, 0)),
            pl.BlockSpec((1, 2, H), lambda bb, t: (bb, 0, 0)),
            pl.BlockSpec((1, tile, ss, Ca), lambda bb, t: (bb, t, 0, 0)),
            pl.BlockSpec((1, tile, ss, Ch), lambda bb, t: (bb, t, 0, 0)),
            pl.BlockSpec((D, H), lambda bb, t: (0, 0)),
            pl.BlockSpec((D, H), lambda bb, t: (0, 0)),
            pl.BlockSpec((1, H), lambda bb, t: (0, 0)),
            pl.BlockSpec((H, NC), lambda bb, t: (0, 0)),
            pl.BlockSpec((Ca, NC), lambda bb, t: (0, 0)),
            pl.BlockSpec((Ch, NC), lambda bb, t: (0, 0)),
        ],
        out_specs=(
            pl.BlockSpec((1, tile, ss, NC), lambda bb, t: (bb, t, 0, 0)),
            pl.BlockSpec((1, 1, 2, NC), lambda bb, t: (bb, t, 0, 0)),
        ),
        scratch_shapes=[pltpu.VMEM((tile, ss, NC), jnp.float32)],
        compiler_params=pltpu.CompilerParams(
            dimension_semantics=("parallel", "parallel"),
            vmem_limit_bytes=vmem_limit),
    )(z_pad, z_pad, f1_stats, att, hot, wd, wm, bf1, w_f, w_a, w_h)
    return cpre, jnp.sum(cstats_part, axis=1)            # (B, 2, NC)


# ----------------------------------------------------------------------------
# Kernel 3: conv1 IN normalize + ELU fused with last_layer (64 -> 1) + sigmoid.
# ----------------------------------------------------------------------------
def finalize_kernel(cpre_ref, cstats_ref, wl_ref, out_ref, *, ss):
    n = float(ss * ss)
    s = cstats_ref[0, 0:1, :]
    q = cstats_ref[0, 1:2, :]
    m = s * (1.0 / n)
    v = jnp.maximum(q * (1.0 / n) - m * m, 0.0)
    inv = lax.rsqrt(v + _EPS)
    x = (cpre_ref[0].astype(jnp.float32) - m) * inv      # (tile, ss, NC)
    x = jnp.where(x > 0, x, jnp.exp(jnp.minimum(x, 0.0)) - 1.0)   # ELU(alpha=1)
    logits = jnp.sum(x * wl_ref[...], axis=-1)           # (tile, ss)
    out_ref[0] = 1.0 / (1.0 + jnp.exp(-logits))


def finalize_forward(cpre, cstats, w_last, *, ss, tile, vmem_limit):
    B = cpre.shape[0]
    NC = cpre.shape[-1]
    kernel = functools.partial(finalize_kernel, ss=ss)
    return pl.pallas_call(
        kernel,
        out_shape=jax.ShapeDtypeStruct((B, ss, ss), jnp.float32),
        grid=(B, ss // tile),
        in_specs=[
            pl.BlockSpec((1, tile, ss, NC), lambda bb, t: (bb, t, 0, 0)),
            pl.BlockSpec((1, 2, NC), lambda bb, t: (bb, 0, 0)),
            pl.BlockSpec((1, NC), lambda bb, t: (0, 0)),
        ],
        out_specs=pl.BlockSpec((1, tile, ss), lambda bb, t: (bb, t, 0)),
        compiler_params=pltpu.CompilerParams(
            dimension_semantics=("parallel", "parallel"),
            vmem_limit_bytes=vmem_limit),
    )(cpre, cstats, w_last)


# ----------------------------------------------------------------------------
# model_model forward (glue in plain JAX, all heavy work in Pallas)
# ----------------------------------------------------------------------------
def model_forward(params, repre, attention_map, hot, G, *, ss):
    # TODO(synk): GAT.Net is not defined in the provided source; treated as identity.
    out_2 = repre                                        # (b, l, D)
    B, l, D = out_2.shape
    Ca = attention_map.shape[-1]
    Ch = hot.shape[-1]
    H = params["w_f1"].shape[1]
    NC = params["w_conv1"].shape[1]

    vmem_limit, k2_budget = _vmem_caps()

    # Per-kernel row tiles (decoupled; only K2 is bounded by the att+hot slab).
    tile1 = _k1_tile(l, D, H, budget=min(k2_budget, 24 << 20))
    lp_cols = max(8, _round_up(l, 8))
    k2_row_bytes = (ss * ((Ca + Ch) * 2 * 2 + NC * 2 * 2 + NC * 4)
                    + lp_cols * (2 * D * 2 + H * 4 + NC * 4))
    tile2 = _pick_tile(ss, k2_row_bytes, k2_budget)
    k3_row_bytes = ss * (NC * 2 * 2 + NC * 4 + 4 * 2)
    tile3 = _pick_tile(ss, k3_row_bytes, 16 << 20)

    # Weight layouts: bf16 MXU operands; biases / last layer stay f32.
    w_f1 = params["w_f1"]
    wd = w_f1[:D].astype(jnp.bfloat16)                   # |zi - zj| half
    wm = w_f1[D:].astype(jnp.bfloat16)                   # zi * zj half
    b_f1 = params["b_f1"]
    w_c = params["w_conv1"]
    w_cf = w_c[:H].astype(jnp.bfloat16)
    w_ca = w_c[H:H + Ca].astype(jnp.bfloat16)
    w_ch = w_c[H + Ca:].astype(jnp.bfloat16)
    w_last = params["w_last"]

    att_bf = attention_map.astype(jnp.bfloat16)
    hot_bf = hot.astype(jnp.bfloat16)

    def pad_rows(z, lp):
        return z if lp == l else jnp.pad(z, ((0, 0), (0, lp - l), (0, 0)))

    z1 = pad_rows(out_2, _round_up(l, tile1))
    z2 = pad_rows(out_2, _round_up(l, tile2))

    # K1: F1 InstanceNorm statistics only (no (l, l, H) HBM round trip).
    f1_stats = f1_stats_forward(z1, wd, wm, b_f1, l=l, tile=tile1,
                                vmem_limit=vmem_limit)

    # K2: conv1 pre-activation (F1 recomputed per row tile, bf16 streaming)
    #     + per-tile conv1 IN partial statistics.
    conv_pre, conv_stats = conv_pre_forward(
        z2, f1_stats, att_bf, hot_bf, wd, wm, b_f1, w_cf, w_ca, w_ch,
        l=l, ss=ss, tile=tile2, vmem_limit=vmem_limit)

    # TODO(synk): tri_model1..8 are not defined in the provided source; treated as identity.
    # TODO(synk): ResNet(block, [8], ...) trunk (self.M) is not defined; treated as identity.

    # K3: conv1 IN normalize + ELU + last_layer (64 -> 1) + sigmoid.
    out = finalize_forward(conv_pre, conv_stats, w_last, ss=ss, tile=tile3,
                           vmem_limit=vmem_limit)        # (b, ss, ss)
    return out[:, None, :, :]                            # NCHW: (b, 1, ss, ss)


def init_params(key, in_features, embed_dim=64, hidden_dim=64):
    k1, k2, k3, k4 = jax.random.split(key, 4)
    return {
        # F1.conv1 weight stored as (2*D, H) == transposed PyTorch (H, 2*D, 1, 1)
        "w_f1": 0.05 * jax.random.normal(k1, (2 * embed_dim, hidden_dim), jnp.float32),
        "b_f1": 0.05 * jax.random.normal(k2, (1, hidden_dim), jnp.float32),
        # conv1 weight stored as (Cin, 64) == transposed PyTorch (64, Cin, 1, 1)
        "w_conv1": 0.05 * jax.random.normal(k3, (in_features, 64), jnp.float32),
        # last_layer weight stored as (1, 64)
        "w_last": 0.05 * jax.random.normal(k4, (1, 64), jnp.float32),
    }


if __name__ == "__main__":
    # Small test shapes (the real module uses ss=400, in_features=764).
    B = 2          # batch
    L = 12         # sequence length of repre (< ss to exercise the pad path)
    D = 64         # embedding dim (F1 input)
    SS = 16        # small stand-in for ss=400
    A_CH = 8       # attention_map channels
    H_CH = 4       # hot channels
    IN_FEATURES = 64 + A_CH + H_CH   # stand-in for 764

    key = jax.random.PRNGKey(0)
    kp, k_r, k_a, k_h = jax.random.split(key, 4)

    params = init_params(kp, IN_FEATURES, embed_dim=D, hidden_dim=64)

    repre = jax.random.normal(k_r, (B, L, D), jnp.float32)
    attention_map = jax.random.normal(k_a, (B, SS, SS, A_CH), jnp.float32)
    hot = (jax.random.uniform(k_h, (B, SS, SS, H_CH)) > 0.5).astype(jnp.float32)
    G = None  # graph input consumed only by the (undefined) GAT module

    fwd = jax.jit(functools.partial(model_forward, ss=SS))
    out = fwd(params, repre, attention_map, hot, G)
    out = jax.block_until_ready(out)

    assert out.shape == (B, 1, SS, SS), out.shape
    assert bool(jnp.all(jnp.isfinite(out)))
    print("KERNEL_OK")
</pallas_src>

<mosaic_0001>
module attributes {stable_mosaic.version = 11 : i64} {
  func.func @f1_stats_kernel(%arg0: i32, %arg1: i32, %arg2: memref<1x16x64xf32, #tpu.memory_space<vmem>>, %arg3: memref<1x16x64xf32, #tpu.memory_space<vmem>>, %arg4: memref<64x64xbf16, #tpu.memory_space<vmem>>, %arg5: memref<64x64xbf16, #tpu.memory_space<vmem>>, %arg6: memref<1x64xf32, #tpu.memory_space<vmem>>, %arg7: memref<1x1x2x64xf32, #tpu.memory_space<vmem>>) attributes {dimension_semantics = [#tpu.dimension_semantics<parallel>, #tpu.dimension_semantics<parallel>], iteration_bounds = array<i64: 2, 1>, scalar_prefetch = 0 : i64, scratch_operands = 0 : i64, tpu.core_type = #tpu.core_type<tc>, window_params = [{transform_indices = @transform_0, window_bounds = array<i64: 1, 16, 64>}, {transform_indices = @transform_1, window_bounds = array<i64: 1, 16, 64>}, {pipeline_mode = #tpu.pipeline_mode<synchronous>, transform_indices = @transform_2, window_bounds = array<i64: 64, 64>}, {pipeline_mode = #tpu.pipeline_mode<synchronous>, transform_indices = @transform_3, window_bounds = array<i64: 64, 64>}, {pipeline_mode = #tpu.pipeline_mode<synchronous>, transform_indices = @transform_4, window_bounds = array<i64: 1, 64>}, {transform_indices = @transform_5, window_bounds = array<i64: 1, 1, 2, 64>}]} {
    %c0 = arith.constant 0 : index
    %c0_0 = arith.constant 0 : index
    %c0_1 = arith.constant 0 : index
    %0 = vector.load %arg2[%c0, %c0_0, %c0_1] : memref<1x16x64xf32, #tpu.memory_space<vmem>>, vector<1x16x64xf32>
    %1 = vector.shape_cast %0 : vector<1x16x64xf32> to vector<16x64xf32>
    %c0_2 = arith.constant 0 : index
    %c0_3 = arith.constant 0 : index
    %c0_4 = arith.constant 0 : index
    %2 = vector.load %arg3[%c0_2, %c0_3, %c0_4] : memref<1x16x64xf32, #tpu.memory_space<vmem>>, vector<1x16x64xf32>
    %3 = vector.shape_cast %2 : vector<1x16x64xf32> to vector<16x64xf32>
    %c0_5 = arith.constant 0 : index
    %c0_6 = arith.constant 0 : index
    %4 = vector.load %arg4[%c0_5, %c0_6] : memref<64x64xbf16, #tpu.memory_space<vmem>>, vector<64x64xbf16>
    %c0_7 = arith.constant 0 : index
    %c0_8 = arith.constant 0 : index
    %5 = vector.load %arg5[%c0_7, %c0_8] : memref<64x64xbf16, #tpu.memory_space<vmem>>, vector<64x64xbf16>
    %c0_9 = arith.constant 0 : index
    %c0_10 = arith.constant 0 : index
    %6 = vector.load %arg6[%c0_9, %c0_10] : memref<1x64xf32, #tpu.memory_space<vmem>>, vector<1x64xf32>
    %7 = vector.shape_cast %1 : vector<16x64xf32> to vector<16x1x64xf32>
    %8 = vector.shape_cast %3 : vector<16x64xf32> to vector<1x16x64xf32>
    %9 = vector.broadcast %7 : vector<16x1x64xf32> to vector<16x16x64xf32>
    %10 = vector.broadcast %8 : vector<1x16x64xf32> to vector<16x16x64xf32>
    %11 = arith.subf %9, %10 : vector<16x16x64xf32>
    %12 = math.absf %11 : vector<16x16x64xf32>
    %13 = arith.truncf %12 : vector<16x16x64xf32> to vector<16x16x64xbf16>
    %14 = vector.broadcast %7 : vector<16x1x64xf32> to vector<16x16x64xf32>
    %15 = vector.broadcast %8 : vector<1x16x64xf32> to vector<16x16x64xf32>
    %16 = arith.mulf %14, %15 : vector<16x16x64xf32>
    %17 = arith.truncf %16 : vector<16x16x64xf32> to vector<16x16x64xbf16>
    %cst = arith.constant dense<0.000000e+00> : vector<16x16x64xf32>
    %18 = tpu.matmul %13, %4, %cst {dimension_numbers = #tpu.dot_dimension_numbers<[2], [0], [0, 1], [1], [0, 0, 0, 1, 1, 1], [], []>} : vector<16x16x64xbf16>, vector<64x64xbf16>, vector<16x16x64xf32> -> vector<16x16x64xf32>
    %cst_11 = arith.constant dense<0.000000e+00> : vector<16x16x64xf32>
    %19 = tpu.matmul %17, %5, %cst_11 {dimension_numbers = #tpu.dot_dimension_numbers<[2], [0], [0, 1], [1], [0, 0, 0, 1, 1, 1], [], []>} : vector<16x16x64xbf16>, vector<64x64xbf16>, vector<16x16x64xf32> -> vector<16x16x64xf32>
    %20 = arith.addf %18, %19 : vector<16x16x64xf32>
    %21 = vector.shape_cast %6 : vector<1x64xf32> to vector<1x1x64xf32>
    %22 = vector.broadcast %21 : vector<1x1x64xf32> to vector<16x16x64xf32>
    %23 = arith.addf %20, %22 : vector<16x16x64xf32>
    %24 = tpu.iota {dimensions = array<i32: 0>} : vector<16x16x64xi32>
    %c16_i32 = arith.constant 16 : i32
    %25 = arith.muli %arg1, %c16_i32 : i32
    %26 = vector.broadcast %25 : i32 to vector<16x16x64xi32>
    %27 = arith.addi %24, %26 : vector<16x16x64xi32>
    %28 = tpu.iota {dimensions = array<i32: 1>} : vector<16x16x64xi32>
    %c12_i32 = arith.constant 12 : i32
    %29 = vector.broadcast %c12_i32 : i32 to vector<16x16x64xi32>
    %30 = arith.cmpi slt, %27, %29 : vector<16x16x64xi32>
    %c12_i32_12 = arith.constant 12 : i32
    %31 = vector.broadcast %c12_i32_12 : i32 to vector<16x16x64xi32>
    %32 = arith.cmpi slt, %28, %31 : vector<16x16x64xi32>
    %33 = arith.andi %30, %32 : vector<16x16x64xi1>
    %cst_13 = arith.constant 0.000000e+00 : f32
    %34 = vector.broadcast %cst_13 : f32 to vector<16x16x64xf32>
    %35 = arith.select %33, %23, %34 : vector<16x16x64xi1>, vector<16x16x64xf32>
    %36 = vector.shape_cast %35 : vector<16x16x64xf32> to vector<256x64xf32>
    %cst_14 = arith.constant dense<0.000000e+00> : vector<64xf32>
    %37 = vector.multi_reduction <add>, %36, %cst_14 [0] : vector<256x64xf32> to vector<64xf32>
    %38 = vector.shape_cast %37 : vector<64xf32> to vector<1x64xf32>
    %c0_15 = arith.constant 0 : index
    %c0_16 = arith.constant 0 : index
    %c0_17 = arith.constant 0 : index
    %c0_18 = arith.constant 0 : index
    %39 = vector.load %arg7[%c0_15, %c0_16, %c0_17, %c0_18] : memref<1x1x2x64xf32, #tpu.memory_space<vmem>>, vector<1x1x1x64xf32>
    %40 = vector.shape_cast %39 : vector<1x1x1x64xf32> to vector<1x64xf32>
    %41 = vector.shape_cast %38 : vector<1x64xf32> to vector<1x1x1x64xf32>
    tpu.vector_store %arg7[%c0_15, %c0_16, %c0_17, %c0_18], %41 {strides = array<i32>} : memref<1x1x2x64xf32, #tpu.memory_space<vmem>>, vector<1x1x1x64xf32>,
    %42 = arith.mulf %36, %36 : vector<256x64xf32>
    %cst_19 = arith.constant dense<0.000000e+00> : vector<64xf32>
    %43 = vector.multi_reduction <add>, %42, %cst_19 [0] : vector<256x64xf32> to vector<64xf32>
    %44 = vector.shape_cast %43 : vector<64xf32> to vector<1x64xf32>
    %c0_20 = arith.constant 0 : index
    %c0_21 = arith.constant 0 : index
    %c1 = arith.constant 1 : index
    %c0_22 = arith.constant 0 : index
    %45 = vector.load %arg7[%c0_20, %c0_21, %c1, %c0_22] : memref<1x1x2x64xf32, #tpu.memory_space<vmem>>, vector<1x1x1x64xf32>
    %46 = vector.shape_cast %45 : vector<1x1x1x64xf32> to vector<1x64xf32>
    %47 = vector.shape_cast %44 : vector<1x64xf32> to vector<1x1x1x64xf32>
    tpu.vector_store %arg7[%c0_20, %c0_21, %c1, %c0_22], %47 {strides = array<i32>} : memref<1x1x2x64xf32, #tpu.memory_space<vmem>>, vector<1x1x1x64xf32>,
    return
  }
  func.func @transform_0(%arg0: i32, %arg1: i32) -> (i32, i32, i32) {
    %c0_i32 = arith.constant 0 : i32
    %c0_i32_0 = arith.constant 0 : i32
    return %arg0, %arg1, %c0_i32 : i32, i32, i32
  }
  func.func @transform_1(%arg0: i32, %arg1: i32) -> (i32, i32, i32) {
    %c0_i32 = arith.constant 0 : i32
    %c0_i32_0 = arith.constant 0 : i32
    %c0_i32_1 = arith.constant 0 : i32
    return %arg0, %c0_i32, %c0_i32_0 : i32, i32, i32
  }
  func.func @transform_2(%arg0: i32, %arg1: i32) -> (i32, i32) {
    %c0_i32 = arith.constant 0 : i32
    %c0_i32_0 = arith.constant 0 : i32
    %c0_i32_1 = arith.constant 0 : i32
    return %c0_i32, %c0_i32_0 : i32, i32
  }
  func.func @transform_3(%arg0: i32, %arg1: i32) -> (i32, i32) {
    %c0_i32 = arith.constant 0 : i32
    %c0_i32_0 = arith.constant 0 : i32
    %c0_i32_1 = arith.constant 0 : i32
    return %c0_i32, %c0_i32_0 : i32, i32
  }
  func.func @transform_4(%arg0: i32, %arg1: i32) -> (i32, i32) {
    %c0_i32 = arith.constant 0 : i32
    %c0_i32_0 = arith.constant 0 : i32
    %c0_i32_1 = arith.constant 0 : i32
    return %c0_i32, %c0_i32_0 : i32, i32
  }
  func.func @transform_5(%arg0: i32, %arg1: i32) -> (i32, i32, i32, i32) {
    %c0_i32 = arith.constant 0 : i32
    %c0_i32_0 = arith.constant 0 : i32
    %c0_i32_1 = arith.constant 0 : i32
    return %arg0, %arg1, %c0_i32, %c0_i32_0 : i32, i32, i32, i32
  }
}

module attributes {stable_mosaic.version = 11 : i64} {
  func.func @conv_pre_kernel(%arg0: i32, %arg1: i32, %arg2: memref<1x16x64xf32, #tpu.memory_space<vmem>>, %arg3: memref<1x16x64xf32, #tpu.memory_space<vmem>>, %arg4: memref<1x2x64xf32, #tpu.memory_space<vmem>>, %arg5: memref<1x16x16x8xbf16, #tpu.memory_space<vmem>>, %arg6: memref<1x16x16x4xbf16, #tpu.memory_space<vmem>>, %arg7: memref<64x64xbf16, #tpu.memory_space<vmem>>, %arg8: memref<64x64xbf16, #tpu.memory_space<vmem>>, %arg9: memref<1x64xf32, #tpu.memory_space<vmem>>, %arg10: memref<64x64xbf16, #tpu.memory_space<vmem>>, %arg11: memref<8x64xbf16, #tpu.memory_space<vmem>>, %arg12: memref<4x64xbf16, #tpu.memory_space<vmem>>, %arg13: memref<1x16x16x64xbf16, #tpu.memory_space<vmem>>, %arg14: memref<1x1x2x64xf32, #tpu.memory_space<vmem>>, %arg15: memref<16x16x64xf32, #tpu.memory_space<vmem>>) attributes {dimension_semantics = [#tpu.dimension_semantics<parallel>, #tpu.dimension_semantics<parallel>], iteration_bounds = array<i64: 2, 1>, scalar_prefetch = 0 : i64, scratch_operands = 1 : i64, tpu.core_type = #tpu.core_type<tc>, window_params = [{transform_indices = @transform_0, window_bounds = array<i64: 1, 16, 64>}, {transform_indices = @transform_1, window_bounds = array<i64: 1, 16, 64>}, {transform_indices = @transform_2, window_bounds = array<i64: 1, 2, 64>}, {transform_indices = @transform_3, window_bounds = array<i64: 1, 16, 16, 8>}, {transform_indices = @transform_4, window_bounds = array<i64: 1, 16, 16, 4>}, {pipeline_mode = #tpu.pipeline_mode<synchronous>, transform_indices = @transform_5, window_bounds = array<i64: 64, 64>}, {pipeline_mode = #tpu.pipeline_mode<synchronous>, transform_indices = @transform_6, window_bounds = array<i64: 64, 64>}, {pipeline_mode = #tpu.pipeline_mode<synchronous>, transform_indices = @transform_7, window_bounds = array<i64: 1, 64>}, {pipeline_mode = #tpu.pipeline_mode<synchronous>, transform_indices = @transform_8, window_bounds = array<i64: 64, 64>}, {pipeline_mode = #tpu.pipeline_mode<synchronous>, transform_indices = @transform_9, window_bounds = array<i64: 8, 64>}, {pipeline_mode = #tpu.pipeline_mode<synchronous>, transform_indices = @transform_10, window_bounds = array<i64: 4, 64>}, {transform_indices = @transform_11, window_bounds = array<i64: 1, 16, 16, 64>}, {transform_indices = @transform_12, window_bounds = array<i64: 1, 1, 2, 64>}]} {
    %c0 = arith.constant 0 : index
    %c0_0 = arith.constant 0 : index
    %c0_1 = arith.constant 0 : index
    %c0_2 = arith.constant 0 : index
    %0 = vector.load %arg5[%c0, %c0_0, %c0_1, %c0_2] : memref<1x16x16x8xbf16, #tpu.memory_space<vmem>>, vector<1x16x16x8xbf16>
    %1 = vector.shape_cast %0 : vector<1x16x16x8xbf16> to vector<16x16x8xbf16>
    %c0_3 = arith.constant 0 : index
    %c0_4 = arith.constant 0 : index
    %2 = vector.load %arg11[%c0_3, %c0_4] : memref<8x64xbf16, #tpu.memory_space<vmem>>, vector<8x64xbf16>
    %cst = arith.constant dense<0.000000e+00> : vector<16x16x64xf32>
    %3 = tpu.matmul %1, %2, %cst {dimension_numbers = #tpu.dot_dimension_numbers<[2], [0], [0, 1], [1], [0, 0, 0, 1, 1, 1], [], []>} : vector<16x16x8xbf16>, vector<8x64xbf16>, vector<16x16x64xf32> -> vector<16x16x64xf32>
    %c0_5 = arith.constant 0 : index
    %c0_6 = arith.constant 0 : index
    %c0_7 = arith.constant 0 : index
    %c0_8 = arith.constant 0 : index
    %4 = vector.load %arg6[%c0_5, %c0_6, %c0_7, %c0_8] : memref<1x16x16x4xbf16, #tpu.memory_space<vmem>>, vector<1x16x16x4xbf16>
    %5 = vector.shape_cast %4 : vector<1x16x16x4xbf16> to vector<16x16x4xbf16>
    %c0_9 = arith.constant 0 : index
    %c0_10 = arith.constant 0 : index
    %6 = vector.load %arg12[%c0_9, %c0_10] : memref<4x64xbf16, #tpu.memory_space<vmem>>, vector<4x64xbf16>
    %cst_11 = arith.constant dense<0.000000e+00> : vector<16x16x64xf32>
    %7 = tpu.matmul %5, %6, %cst_11 {dimension_numbers = #tpu.dot_dimension_numbers<[2], [0], [0, 1], [1], [0, 0, 0, 1, 1, 1], [], []>} : vector<16x16x4xbf16>, vector<4x64xbf16>, vector<16x16x64xf32> -> vector<16x16x64xf32>
    %8 = arith.addf %3, %7 : vector<16x16x64xf32>
    %c0_12 = arith.constant 0 : index
    %c0_13 = arith.constant 0 : index
    %c0_14 = arith.constant 0 : index
    %9 = vector.load %arg4[%c0_12, %c0_13, %c0_14] : memref<1x2x64xf32, #tpu.memory_space<vmem>>, vector<1x1x64xf32>
    %10 = vector.shape_cast %9 : vector<1x1x64xf32> to vector<1x64xf32>
    %c0_15 = arith.constant 0 : index
    %c1 = arith.constant 1 : index
    %c0_16 = arith.constant 0 : index
    %11 = vector.load %arg4[%c0_15, %c1, %c0_16] : memref<1x2x64xf32, #tpu.memory_space<vmem>>, vector<1x1x64xf32>
    %12 = vector.shape_cast %11 : vector<1x1x64xf32> to vector<1x64xf32>
    %cst_17 = arith.constant 0.0069444445 : f32
    %13 = vector.broadcast %cst_17 : f32 to vector<1x64xf32>
    %14 = arith.mulf %10, %13 : vector<1x64xf32>
    %cst_18 = arith.constant 0.0069444445 : f32
    %15 = vector.broadcast %cst_18 : f32 to vector<1x64xf32>
    %16 = arith.mulf %12, %15 : vector<1x64xf32>
    %17 = arith.mulf %14, %14 : vector<1x64xf32>
    %18 = arith.subf %16, %17 : vector<1x64xf32>
    %cst_19 = arith.constant 0.000000e+00 : f32
    %19 = vector.broadcast %cst_19 : f32 to vector<1x64xf32>
    %20 = arith.maximumf %18, %19 : vector<1x64xf32>
    %cst_20 = arith.constant 9.99999974E-6 : f32
    %21 = vector.broadcast %cst_20 : f32 to vector<1x64xf32>
    %22 = arith.addf %20, %21 : vector<1x64xf32>
    %23 = math.rsqrt %22 : vector<1x64xf32>
    %c0_21 = arith.constant 0 : index
    %c0_22 = arith.constant 0 : index
    %c0_23 = arith.constant 0 : index
    %24 = vector.load %arg15[%c0_21, %c0_22, %c0_23] : memref<16x16x64xf32, #tpu.memory_space<vmem>>, vector<16x16x64xf32>
    tpu.vector_store %arg15[%c0_21, %c0_22, %c0_23], %8 {strides = array<i32>} : memref<16x16x64xf32, #tpu.memory_space<vmem>>, vector<16x16x64xf32>,
    %c16_i32 = arith.constant 16 : i32
    %25 = arith.muli %arg1, %c16_i32 : i32
    %c12_i32 = arith.constant 12 : i32
    %26 = arith.cmpi slt, %25, %c12_i32 : i32
    %27 = arith.extui %26 : i1 to i32
    %c0_i32 = arith.constant 0 : i32
    %28 = arith.cmpi ne, %27, %c0_i32 : i32
    scf.if %28 {
      %c0_41 = arith.constant 0 : index
      %c0_42 = arith.constant 0 : index
      %c0_43 = arith.constant 0 : index
      %46 = vector.load %arg15[%c0_41, %c0_42, %c0_43] : memref<16x16x64xf32, #tpu.memory_space<vmem>>, vector<16x12x64xf32>
      %c0_44 = arith.constant 0 : index
      %c0_45 = arith.constant 0 : index
      %c0_46 = arith.constant 0 : index
      %47 = vector.load %arg2[%c0_44, %c0_45, %c0_46] : memref<1x16x64xf32, #tpu.memory_space<vmem>>, vector<1x16x64xf32>
      %48 = vector.shape_cast %47 : vector<1x16x64xf32> to vector<16x64xf32>
      %c0_47 = arith.constant 0 : index
      %c0_48 = arith.constant 0 : index
      %c0_49 = arith.constant 0 : index
      %49 = vector.load %arg3[%c0_47, %c0_48, %c0_49] : memref<1x16x64xf32, #tpu.memory_space<vmem>>, vector<1x16x64xf32>
      %50 = vector.shape_cast %49 : vector<1x16x64xf32> to vector<16x64xf32>
      %c0_50 = arith.constant 0 : index
      %c0_51 = arith.constant 0 : index
      %51 = vector.load %arg7[%c0_50, %c0_51] : memref<64x64xbf16, #tpu.memory_space<vmem>>, vector<64x64xbf16>
      %c0_52 = arith.constant 0 : index
      %c0_53 = arith.constant 0 : index
      %52 = vector.load %arg8[%c0_52, %c0_53] : memref<64x64xbf16, #tpu.memory_space<vmem>>, vector<64x64xbf16>
      %c0_54 = arith.constant 0 : index
      %c0_55 = arith.constant 0 : index
      %53 = vector.load %arg9[%c0_54, %c0_55] : memref<1x64xf32, #tpu.memory_space<vmem>>, vector<1x64xf32>
      %54 = vector.shape_cast %48 : vector<16x64xf32> to vector<16x1x64xf32>
      %55 = vector.shape_cast %50 : vector<16x64xf32> to vector<1x16x64xf32>
      %56 = vector.broadcast %54 : vector<16x1x64xf32> to vector<16x16x64xf32>
      %57 = vector.broadcast %55 : vector<1x16x64xf32> to vector<16x16x64xf32>
      %58 = arith.subf %56, %57 : vector<16x16x64xf32>
      %59 = math.absf %58 : vector<16x16x64xf32>
      %60 = arith.truncf %59 : vector<16x16x64xf32> to vector<16x16x64xbf16>
      %61 = vector.broadcast %54 : vector<16x1x64xf32> to vector<16x16x64xf32>
      %62 = vector.broadcast %55 : vector<1x16x64xf32> to vector<16x16x64xf32>
      %63 = arith.mulf %61, %62 : vector<16x16x64xf32>
      %64 = arith.truncf %63 : vector<16x16x64xf32> to vector<16x16x64xbf16>
      %cst_56 = arith.constant dense<0.000000e+00> : vector<16x16x64xf32>
      %65 = tpu.matmul %60, %51, %cst_56 {dimension_numbers = #tpu.dot_dimension_numbers<[2], [0], [0, 1], [1], [0, 0, 0, 1, 1, 1], [], []>} : vector<16x16x64xbf16>, vector<64x64xbf16>, vector<16x16x64xf32> -> vector<16x16x64xf32>
      %cst_57 = arith.constant dense<0.000000e+00> : vector<16x16x64xf32>
      %66 = tpu.matmul %64, %52, %cst_57 {dimension_numbers = #tpu.dot_dimension_numbers<[2], [0], [0, 1], [1], [0, 0, 0, 1, 1, 1], [], []>} : vector<16x16x64xbf16>, vector<64x64xbf16>, vector<16x16x64xf32> -> vector<16x16x64xf32>
      %67 = arith.addf %65, %66 : vector<16x16x64xf32>
      %68 = vector.shape_cast %53 : vector<1x64xf32> to vector<1x1x64xf32>
      %69 = vector.broadcast %68 : vector<1x1x64xf32> to vector<16x16x64xf32>
      %70 = arith.addf %67, %69 : vector<16x16x64xf32>
      %71 = vector.shape_cast %14 : vector<1x64xf32> to vector<1x1x64xf32>
      %72 = vector.broadcast %71 : vector<1x1x64xf32> to vector<16x16x64xf32>
      %73 = arith.subf %70, %72 : vector<16x16x64xf32>
      %74 = vector.shape_cast %23 : vector<1x64xf32> to vector<1x1x64xf32>
      %75 = vector.broadcast %74 : vector<1x1x64xf32> to vector<16x16x64xf32>
      %76 = arith.mulf %73, %75 : vector<16x16x64xf32>
      %cst_58 = arith.constant 0.000000e+00 : f32
      %77 = vector.broadcast %cst_58 : f32 to vector<16x16x64xf32>
      %78 = arith.maximumf %76, %77 : vector<16x16x64xf32>
      %79 = tpu.iota {dimensions = array<i32: 0>} : vector<16x16x64xi32>
      %c16_i32_59 = arith.constant 16 : i32
      %80 = arith.muli %arg1, %c16_i32_59 : i32
      %81 = vector.broadcast %80 : i32 to vector<16x16x64xi32>
      %82 = arith.addi %79, %81 : vector<16x16x64xi32>
      %c12_i32_60 = arith.constant 12 : i32
      %83 = vector.broadcast %c12_i32_60 : i32 to vector<16x16x64xi32>
      %84 = arith.cmpi slt, %82, %83 : vector<16x16x64xi32>
      %cst_61 = arith.constant 0.000000e+00 : f32
      %85 = vector.broadcast %cst_61 : f32 to vector<16x16x64xf32>
      %86 = arith.select %84, %78, %85 : vector<16x16x64xi1>, vector<16x16x64xf32>
      %87 = vector.extract_strided_slice %86 {offsets = [0, 0, 0], sizes = [16, 12, 64], strides = [1, 1, 1]} : vector<16x16x64xf32> to vector<16x12x64xf32>
      %88 = arith.truncf %87 : vector<16x12x64xf32> to vector<16x12x64xbf16>
      %c0_62 = arith.constant 0 : index
      %c0_63 = arith.constant 0 : index
      %89 = vector.load %arg10[%c0_62, %c0_63] : memref<64x64xbf16, #tpu.memory_space<vmem>>, vector<64x64xbf16>
      %cst_64 = arith.constant dense<0.000000e+00> : vector<16x12x64xf32>
      %90 = tpu.matmul %88, %89, %cst_64 {dimension_numbers = #tpu.dot_dimension_numbers<[2], [0], [0, 1], [1], [0, 0, 0, 1, 1, 1], [], []>} : vector<16x12x64xbf16>, vector<64x64xbf16>, vector<16x12x64xf32> -> vector<16x12x64xf32>
      %91 = arith.addf %46, %90 : vector<16x12x64xf32>
      %c0_65 = arith.constant 0 : index
      %c0_66 = arith.constant 0 : index
      %c0_67 = arith.constant 0 : index
      %92 = vector.load %arg15[%c0_65, %c0_66, %c0_67] : memref<16x16x64xf32, #tpu.memory_space<vmem>>, vector<16x12x64xf32>
      tpu.vector_store %arg15[%c0_65, %c0_66, %c0_67], %91 {strides = array<i32>} : memref<16x16x64xf32, #tpu.memory_space<vmem>>, vector<16x12x64xf32>,
    } else {
    }
    %c0_24 = arith.constant 0 : index
    %c0_25 = arith.constant 0 : index
    %c0_26 = arith.constant 0 : index
    %29 = vector.load %arg15[%c0_24, %c0_25, %c0_26] : memref<16x16x64xf32, #tpu.memory_space<vmem>>, vector<16x16x64xf32>
    %30 = arith.truncf %29 : vector<16x16x64xf32> to vector<16x16x64xbf16>
    %c0_27 = arith.constant 0 : index
    %c0_28 = arith.constant 0 : index
    %c0_29 = arith.constant 0 : index
    %c0_30 = arith.constant 0 : index
    %31 = vector.load %arg13[%c0_27, %c0_28, %c0_29, %c0_30] : memref<1x16x16x64xbf16, #tpu.memory_space<vmem>>, vector<1x16x16x64xbf16>
    %32 = vector.shape_cast %31 : vector<1x16x16x64xbf16> to vector<16x16x64xbf16>
    %33 = vector.shape_cast %30 : vector<16x16x64xbf16> to vector<1x16x16x64xbf16>
    tpu.vector_store %arg13[%c0_27, %c0_28, %c0_29, %c0_30], %33 {strides = array<i32>} : memref<1x16x16x64xbf16, #tpu.memory_space<vmem>>, vector<1x16x16x64xbf16>,
    %34 = vector.shape_cast %29 : vector<16x16x64xf32> to vector<256x64xf32>
    %cst_31 = arith.constant dense<0.000000e+00> : vector<64xf32>
    %35 = vector.multi_reduction <add>, %34, %cst_31 [0] : vector<256x64xf32> to vector<64xf32>
    %36 = vector.shape_cast %35 : vector<64xf32> to vector<1x64xf32>
    %c0_32 = arith.constant 0 : index
    %c0_33 = arith.constant 0 : index
    %c0_34 = arith.constant 0 : index
    %c0_35 = arith.constant 0 : index
    %37 = vector.load %arg14[%c0_32, %c0_33, %c0_34, %c0_35] : memref<1x1x2x64xf32, #tpu.memory_space<vmem>>, vector<1x1x1x64xf32>
    %38 = vector.shape_cast %37 : vector<1x1x1x64xf32> to vector<1x64xf32>
    %39 = vector.shape_cast %36 : vector<1x64xf32> to vector<1x1x1x64xf32>
    tpu.vector_store %arg14[%c0_32, %c0_33, %c0_34, %c0_35], %39 {strides = array<i32>} : memref<1x1x2x64xf32, #tpu.memory_space<vmem>>, vector<1x1x1x64xf32>,
    %40 = arith.mulf %34, %34 : vector<256x64xf32>
    %cst_36 = arith.constant dense<0.000000e+00> : vector<64xf32>
    %41 = vector.multi_reduction <add>, %40, %cst_36 [0] : vector<256x64xf32> to vector<64xf32>
    %42 = vector.shape_cast %41 : vector<64xf32> to vector<1x64xf32>
    %c0_37 = arith.constant 0 : index
    %c0_38 = arith.constant 0 : index
    %c1_39 = arith.constant 1 : index
    %c0_40 = arith.constant 0 : index
    %43 = vector.load %arg14[%c0_37, %c0_38, %c1_39, %c0_40] : memref<1x1x2x64xf32, #tpu.memory_space<vmem>>, vector<1x1x1x64xf32>
    %44 = vector.shape_cast %43 : vector<1x1x1x64xf32> to vector<1x64xf32>
    %45 = vector.shape_cast %42 : vector<1x64xf32> to vector<1x1x1x64xf32>
    tpu.vector_store %arg14[%c0_37, %c0_38, %c1_39, %c0_40], %45 {strides = array<i32>} : memref<1x1x2x64xf32, #tpu.memory_space<vmem>>, vector<1x1x1x64xf32>,
    return
  }
  func.func @transform_0(%arg0: i32, %arg1: i32) -> (i32, i32, i32) {
    %c0_i32 = arith.constant 0 : i32
    %0 = arith.minsi %arg1, %c0_i32 : i32
    %c0_i32_0 = arith.constant 0 : i32
    %c0_i32_1 = arith.constant 0 : i32
    return %arg0, %0, %c0_i32_0 : i32, i32, i32
  }
  func.func @transform_1(%arg0: i32, %arg1: i32) -> (i32, i32, i32) {
    %c0_i32 = arith.constant 0 : i32
    %c0_i32_0 = arith.constant 0 : i32
    %c0_i32_1 = arith.constant 0 : i32
    return %arg0, %c0_i32, %c0_i32_0 : i32, i32, i32
  }
  func.func @transform_2(%arg0: i32, %arg1: i32) -> (i32, i32, i32) {
    %c0_i32 = arith.constant 0 : i32
    %c0_i32_0 = arith.constant 0 : i32
    %c0_i32_1 = arith.constant 0 : i32
    return %arg0, %c0_i32, %c0_i32_0 : i32, i32, i32
  }
  func.func @transform_3(%arg0: i32, %arg1: i32) -> (i32, i32, i32, i32) {
    %c0_i32 = arith.constant 0 : i32
    %c0_i32_0 = arith.constant 0 : i32
    %c0_i32_1 = arith.constant 0 : i32
    return %arg0, %arg1, %c0_i32, %c0_i32_0 : i32, i32, i32, i32
  }
  func.func @transform_4(%arg0: i32, %arg1: i32) -> (i32, i32, i32, i32) {
    %c0_i32 = arith.constant 0 : i32
    %c0_i32_0 = arith.constant 0 : i32
    %c0_i32_1 = arith.constant 0 : i32
    return %arg0, %arg1, %c0_i32, %c0_i32_0 : i32, i32, i32, i32
  }
  func.func @transform_5(%arg0: i32, %arg1: i32) -> (i32, i32) {
    %c0_i32 = arith.constant 0 : i32
    %c0_i32_0 = arith.constant 0 : i32
    %c0_i32_1 = arith.constant 0 : i32
    return %c0_i32, %c0_i32_0 : i32, i32
  }
  func.func @transform_6(%arg0: i32, %arg1: i32) -> (i32, i32) {
    %c0_i32 = arith.constant 0 : i32
    %c0_i32_0 = arith.constant 0 : i32
    %c0_i32_1 = arith.constant 0 : i32
    return %c0_i32, %c0_i32_0 : i32, i32
  }
  func.func @transform_7(%arg0: i32, %arg1: i32) -> (i32, i32) {
    %c0_i32 = arith.constant 0 : i32
    %c0_i32_0 = arith.constant 0 : i32
    %c0_i32_1 = arith.constant 0 : i32
    return %c0_i32, %c0_i32_0 : i32, i32
  }
  func.func @transform_8(%arg0: i32, %arg1: i32) -> (i32, i32) {
    %c0_i32 = arith.constant 0 : i32
    %c0_i32_0 = arith.constant 0 : i32
    %c0_i32_1 = arith.constant 0 : i32
    return %c0_i32, %c0_i32_0 : i32, i32
  }
  func.func @transform_9(%arg0: i32, %arg1: i32) -> (i32, i32) {
    %c0_i32 = arith.constant 0 : i32
    %c0_i32_0 = arith.constant 0 : i32
    %c0_i32_1 = arith.constant 0 : i32
    return %c0_i32, %c0_i32_0 : i32, i32
  }
  func.func @transform_10(%arg0: i32, %arg1: i32) -> (i32, i32) {
    %c0_i32 = arith.constant 0 : i32
    %c0_i32_0 = arith.constant 0 : i32
    %c0_i32_1 = arith.constant 0 : i32
    return %c0_i32, %c0_i32_0 : i32, i32
  }
  func.func @transform_11(%arg0: i32, %arg1: i32) -> (i32, i32, i32, i32) {
    %c0_i32 = arith.constant 0 : i32
    %c0_i32_0 = arith.constant 0 : i32
    %c0_i32_1 = arith.constant 0 : i32
    return %arg0, %arg1, %c0_i32, %c0_i32_0 : i32, i32, i32, i32
  }
  func.func @transform_12(%arg0: i32, %arg1: i32) -> (i32, i32, i32, i32) {
    %c0_i32 = arith.constant 0 : i32
    %c0_i32_0 = arith.constant 0 : i32
    %c0_i32_1 = arith.constant 0 : i32
    return %arg0, %arg1, %c0_i32, %c0_i32_0 : i32, i32, i32, i32
  }
}

module attributes {stable_mosaic.version = 11 : i64} {
  func.func @finalize_kernel(%arg0: i32, %arg1: i32, %arg2: memref<1x16x16x64xbf16, #tpu.memory_space<vmem>>, %arg3: memref<1x2x64xf32, #tpu.memory_space<vmem>>, %arg4: memref<1x64xf32, #tpu.memory_space<vmem>>, %arg5: memref<1x16x16xf32, #tpu.memory_space<vmem>>) attributes {dimension_semantics = [#tpu.dimension_semantics<parallel>, #tpu.dimension_semantics<parallel>], iteration_bounds = array<i64: 2, 1>, scalar_prefetch = 0 : i64, scratch_operands = 0 : i64, tpu.core_type = #tpu.core_type<tc>, window_params = [{transform_indices = @transform_0, window_bounds = array<i64: 1, 16, 16, 64>}, {transform_indices = @transform_1, window_bounds = array<i64: 1, 2, 64>}, {pipeline_mode = #tpu.pipeline_mode<synchronous>, transform_indices = @transform_2, window_bounds = array<i64: 1, 64>}, {transform_indices = @transform_3, window_bounds = array<i64: 1, 16, 16>}]} {
    %c0 = arith.constant 0 : index
    %c0_0 = arith.constant 0 : index
    %c0_1 = arith.constant 0 : index
    %0 = vector.load %arg3[%c0, %c0_0, %c0_1] : memref<1x2x64xf32, #tpu.memory_space<vmem>>, vector<1x1x64xf32>
    %1 = vector.shape_cast %0 : vector<1x1x64xf32> to vector<1x64xf32>
    %c0_2 = arith.constant 0 : index
    %c1 = arith.constant 1 : index
    %c0_3 = arith.constant 0 : index
    %2 = vector.load %arg3[%c0_2, %c1, %c0_3] : memref<1x2x64xf32, #tpu.memory_space<vmem>>, vector<1x1x64xf32>
    %3 = vector.shape_cast %2 : vector<1x1x64xf32> to vector<1x64xf32>
    %cst = arith.constant 3.906250e-03 : f32
    %4 = vector.broadcast %cst : f32 to vector<1x64xf32>
    %5 = arith.mulf %1, %4 : vector<1x64xf32>
    %cst_4 = arith.constant 3.906250e-03 : f32
    %6 = vector.broadcast %cst_4 : f32 to vector<1x64xf32>
    %7 = arith.mulf %3, %6 : vector<1x64xf32>
    %8 = arith.mulf %5, %5 : vector<1x64xf32>
    %9 = arith.subf %7, %8 : vector<1x64xf32>
    %cst_5 = arith.constant 0.000000e+00 : f32
    %10 = vector.broadcast %cst_5 : f32 to vector<1x64xf32>
    %11 = arith.maximumf %9, %10 : vector<1x64xf32>
    %cst_6 = arith.constant 9.99999974E-6 : f32
    %12 = vector.broadcast %cst_6 : f32 to vector<1x64xf32>
    %13 = arith.addf %11, %12 : vector<1x64xf32>
    %14 = math.rsqrt %13 : vector<1x64xf32>
    %c0_7 = arith.constant 0 : index
    %c0_8 = arith.constant 0 : index
    %c0_9 = arith.constant 0 : index
    %c0_10 = arith.constant 0 : index
    %15 = vector.load %arg2[%c0_7, %c0_8, %c0_9, %c0_10] : memref<1x16x16x64xbf16, #tpu.memory_space<vmem>>, vector<1x16x16x64xbf16>
    %16 = vector.shape_cast %15 : vector<1x16x16x64xbf16> to vector<16x16x64xbf16>
    %17 = arith.extf %16 : vector<16x16x64xbf16> to vector<16x16x64xf32>
    %18 = vector.shape_cast %5 : vector<1x64xf32> to vector<1x1x64xf32>
    %19 = vector.broadcast %18 : vector<1x1x64xf32> to vector<16x16x64xf32>
    %20 = arith.subf %17, %19 : vector<16x16x64xf32>
    %21 = vector.shape_cast %14 : vector<1x64xf32> to vector<1x1x64xf32>
    %22 = vector.broadcast %21 : vector<1x1x64xf32> to vector<16x16x64xf32>
    %23 = arith.mulf %20, %22 : vector<16x16x64xf32>
    %cst_11 = arith.constant 0.000000e+00 : f32
    %24 = vector.broadcast %cst_11 : f32 to vector<16x16x64xf32>
    %25 = arith.cmpf ogt, %23, %24 : vector<16x16x64xf32>
    %cst_12 = arith.constant 0.000000e+00 : f32
    %26 = vector.broadcast %cst_12 : f32 to vector<16x16x64xf32>
    %27 = arith.minimumf %23, %26 : vector<16x16x64xf32>
    %28 = math.exp %27 : vector<16x16x64xf32>
    %cst_13 = arith.constant 1.000000e+00 : f32
    %29 = vector.broadcast %cst_13 : f32 to vector<16x16x64xf32>
    %30 = arith.subf %28, %29 : vector<16x16x64xf32>
    %31 = arith.select %25, %23, %30 : vector<16x16x64xi1>, vector<16x16x64xf32>
    %c0_14 = arith.constant 0 : index
    %c0_15 = arith.constant 0 : index
    %32 = vector.load %arg4[%c0_14, %c0_15] : memref<1x64xf32, #tpu.memory_space<vmem>>, vector<1x64xf32>
    %33 = vector.shape_cast %32 : vector<1x64xf32> to vector<1x1x64xf32>
    %34 = vector.broadcast %33 : vector<1x1x64xf32> to vector<16x16x64xf32>
    %35 = arith.mulf %31, %34 : vector<16x16x64xf32>
    %cst_16 = arith.constant dense<0.000000e+00> : vector<16x16xf32>
    %36 = vector.multi_reduction <add>, %35, %cst_16 [2] : vector<16x16x64xf32> to vector<16x16xf32>
    %cst_17 = arith.constant 0.000000e+00 : f32
    %37 = vector.broadcast %cst_17 : f32 to vector<16x16xf32>
    %38 = arith.subf %37, %36 : vector<16x16xf32>
    %39 = math.exp %38 : vector<16x16xf32>
    %cst_18 = arith.constant 1.000000e+00 : f32
    %40 = vector.broadcast %cst_18 : f32 to vector<16x16xf32>
    %41 = arith.addf %40, %39 : vector<16x16xf32>
    %cst_19 = arith.constant 1.000000e+00 : f32
    %42 = vector.broadcast %cst_19 : f32 to vector<16x16xf32>
    %43 = arith.divf %42, %41 : vector<16x16xf32>
    %c0_20 = arith.constant 0 : index
    %c0_21 = arith.constant 0 : index
    %c0_22 = arith.constant 0 : index
    %44 = vector.load %arg5[%c0_20, %c0_21, %c0_22] : memref<1x16x16xf32, #tpu.memory_space<vmem>>, vector<1x16x16xf32>
    %45 = vector.shape_cast %44 : vector<1x16x16xf32> to vector<16x16xf32>
    %46 = vector.shape_cast %43 : vector<16x16xf32> to vector<1x16x16xf32>
    tpu.vector_store %arg5[%c0_20, %c0_21, %c0_22], %46 {strides = array<i32>} : memref<1x16x16xf32, #tpu.memory_space<vmem>>, vector<1x16x16xf32>,
    return
  }
  func.func @transform_0(%arg0: i32, %arg1: i32) -> (i32, i32, i32, i32) {
    %c0_i32 = arith.constant 0 : i32
    %c0_i32_0 = arith.constant 0 : i32
    %c0_i32_1 = arith.constant 0 : i32
    return %arg0, %arg1, %c0_i32, %c0_i32_0 : i32, i32, i32, i32
  }
  func.func @transform_1(%arg0: i32, %arg1: i32) -> (i32, i32, i32) {
    %c0_i32 = arith.constant 0 : i32
    %c0_i32_0 = arith.constant 0 : i32
    %c0_i32_1 = arith.constant 0 : i32
    return %arg0, %c0_i32, %c0_i32_0 : i32, i32, i32
  }
  func.func @transform_2(%arg0: i32, %arg1: i32) -> (i32, i32) {
    %c0_i32 = arith.constant 0 : i32
    %c0_i32_0 = arith.constant 0 : i32
    %c0_i32_1 = arith.constant 0 : i32
    return %c0_i32, %c0_i32_0 : i32, i32
  }
  func.func @transform_3(%arg0: i32, %arg1: i32) -> (i32, i32, i32) {
    %c0_i32 = arith.constant 0 : i32
    %c0_i32_0 = arith.constant 0 : i32
    return %arg0, %arg1, %c0_i32 : i32, i32, i32
  }
}

</mosaic_0001>

<llo_original>
// kernel: model_forward.3
$region0: #{model_forward.3}
  #allocation0 [shape = 'u32[]', space=smem, size = 0x4, offset = 0x4, fixed_abs, tag = 'smem constant byte address 0x4 - core index']
  #allocation1 [shape = 'u32[144,128]{1,0:T(1,128)}', space=vmem, size = 0x12000, scoped, tag = 'internal scratch']
  %s0 = inlined_call_operand.vmem [shape: f32[2,16,64], index: 0, kind: input, shape index: {}, may-alias: {0,1}]
  %s1 = inlined_call_operand.vmem [shape: f32[2,16,64], index: 1, kind: input, shape index: {}, may-alias: {0,1}]
  %s2 = inlined_call_operand.vmem [shape: bf16[64,64], index: 2, kind: input, shape index: {}]
  %s3 = inlined_call_operand.vmem [shape: bf16[64,64], index: 3, kind: input, shape index: {}]
  %s4 = inlined_call_operand.vmem [shape: f32[1,64], index: 4, kind: input, shape index: {}]
  %s5 = inlined_call_operand.vmem [shape: f32[2,1,2,64], index: 5, kind: output, shape index: {}]
  %s6 = sld [smem:[#allocation0]]
  $region53: #{model_forward.3} parent=0
    _
  %s8 = ssub.s32 1, %s6
  %s9 = scalar_select 0, %s8, %s6
  loop: start=0, step=1, limit=4
  $region2: #{model_forward.3} parent=0 // loop_pre_header
    _
  $region3: #{model_forward.3} parent=0 // loop_header
    %s11 = sphi 0, %s15
    %p12 = scmp.ge.s32.totalorder %s11, 4
    %s18 = sphi 0, %s30
    %s19 = sphi 0, %s26
    %s20 = sphi 0, %s18
    %s21 = sphi 0, %s19
    %s22 = sphi 0, %s20
    %s23 = sphi 0, %s21
    %s35 = sphi 0, %s37
    %s38 = sphi 0, %s35
    %s39 = sphi 0, %s38
    %s55 = sphi 0, %s39
    %s61 = sphi 0, %s63
    %s64 = sphi 0, %s61
    %s65 = sphi 0, %s64
    %s81 = sphi 0, %s65
    %s85 = sphi 0, %s85
    %s87 = sphi 0, %s85
    %s88 = sphi 0, %s87
    %s102 = sphi 0, %s88
    %s106 = sphi 0, %s106
    %s108 = sphi 0, %s106
    %s109 = sphi 0, %s108
    %s123 = sphi 0, %s109
    %s127 = sphi 0, %s127
    %s129 = sphi 0, %s127
    %s130 = sphi 0, %s129
    %s144 = sphi 0, %s130
    %s152 = sphi 0, %s154
    %s155 = sphi 0, %s152
    %s156 = sphi 0, %s155
    %s172 = sphi 0, %s156
  $region4: #{model_forward.3} parent=0 // loop_header_branch
    %14 = sbr.rel (%p12) target = $region8
  $region5: #{model_forward.3} parent=0 // loop_body
    %s16 = ssub.s32 %s11, 1
    %s17 = ssub.s32 %s11, 2
    %s24 = sadd.s32 1, %s19
    %p25 = scmp.ge.s32.totalorder %s24, 1
    %s26 = scalar_select %p25, 0, %s24
    %s27 = sadd.s32 1, %s18
    %s28 = scalar_select %p25, %s27, %s18
    %p29 = scmp.ge.s32.totalorder %s28, 2
    %s30 = scalar_select %p29, 0, %s28
    %s31 = ssub.s32 %s18, %s30
    %s32 = ssub.s32 %s19, %s26
    %s33 = sor.u32 %s31, %s32
    %p34 = scmp.eq.s32.totalorder %s33, 0
    %s36 = sadd.s32 %s35, 1
    %s37 = scalar_select %p34, %s35, %s36
    %p40 = pneg %p34
    %p41 = scmp.eq.s32.totalorder %s11, 1
    %p42 = por %p40, %p41
    %p43 = scmp.ne.s32.totalorder %s35, %s38
    %p44 = scmp.eq.s32.totalorder %s11, 0
    %p45 = por %p43, %p44
    %p46 = scmp.ne.s32.totalorder %s35, %s38
    %p47 = scmp.eq.s32.totalorder %s16, 1
    %p48 = por %p46, %p47
    %p49 = scmp.ne.s32.totalorder %s38, %s39
    %p50 = scmp.eq.s32.totalorder %s16, 0
    %p51 = por %p49, %p50
    %p52 = scmp.ne.s32.totalorder %s38, %s39
    %p53 = scmp.eq.s32.totalorder %s17, 1
    %p54 = por %p52, %p53
    %p56 = scmp.ne.s32.totalorder %s39, %s55
    %p57 = scmp.eq.s32.totalorder %s17, 0
    %p58 = por %p56, %p57
    %s59 = ssub.s32 %s18, %s30
    %p60 = scmp.eq.s32.totalorder %s59, 0
    %s62 = sadd.s32 %s61, 1
    %s63 = scalar_select %p60, %s61, %s62
    %p66 = pneg %p60
    %p67 = scmp.eq.s32.totalorder %s11, 1
    %p68 = por %p66, %p67
    %p69 = scmp.ne.s32.totalorder %s61, %s64
    %p70 = scmp.eq.s32.totalorder %s11, 0
    %p71 = por %p69, %p70
    %p72 = scmp.ne.s32.totalorder %s61, %s64
    %p73 = scmp.eq.s32.totalorder %s16, 1
    %p74 = por %p72, %p73
    %p75 = scmp.ne.s32.totalorder %s64, %s65
    %p76 = scmp.eq.s32.totalorder %s16, 0
    %p77 = por %p75, %p76
    %p78 = scmp.ne.s32.totalorder %s64, %s65
    %p79 = scmp.eq.s32.totalorder %s17, 1
    %p80 = por %p78, %p79
    %p82 = scmp.ne.s32.totalorder %s65, %s81
    %p83 = scmp.eq.s32.totalorder %s17, 0
    %p84 = por %p82, %p83
    %s86 = sadd.s32 %s85, 1
    %p89 = scmp.eq.s32.totalorder %s11, 1
    %p90 = scmp.ne.s32.totalorder %s85, %s87
    %p91 = scmp.eq.s32.totalorder %s11, 0
    %p92 = por %p90, %p91
    %p93 = scmp.ne.s32.totalorder %s85, %s87
    %p94 = scmp.eq.s32.totalorder %s16, 1
    %p95 = por %p93, %p94
    %p96 = scmp.ne.s32.totalorder %s87, %s88
    %p97 = scmp.eq.s32.totalorder %s16, 0
    %p98 = por %p96, %p97
    %p99 = scmp.ne.s32.totalorder %s87, %s88
    %p100 = scmp.eq.s32.totalorder %s17, 1
    %p101 = por %p99, %p100
    %p103 = scmp.ne.s32.totalorder %s88, %s102
    %p104 = scmp.eq.s32.totalorder %s17, 0
    %p105 = por %p103, %p104
    %s107 = sadd.s32 %s106, 1
    %p110 = scmp.eq.s32.totalorder %s11, 1
    %p111 = scmp.ne.s32.totalorder %s106, %s108
    %p112 = scmp.eq.s32.totalorder %s11, 0
    %p113 = por %p111, %p112
    %p114 = scmp.ne.s32.totalorder %s106, %s108
    %p115 = scmp.eq.s32.totalorder %s16, 1
    %p116 = por %p114, %p115
    %p117 = scmp.ne.s32.totalorder %s108, %s109
    %p118 = scmp.eq.s32.totalorder %s16, 0
    %p119 = por %p117, %p118
    %p120 = scmp.ne.s32.totalorder %s108, %s109
    %p121 = scmp.eq.s32.totalorder %s17, 1
    %p122 = por %p120, %p121
    %p124 = scmp.ne.s32.totalorder %s109, %s123
    %p125 = scmp.eq.s32.totalorder %s17, 0
    %p126 = por %p124, %p125
    %s128 = sadd.s32 %s127, 1
    %p131 = scmp.eq.s32.totalorder %s11, 1
    %p132 = scmp.ne.s32.totalorder %s127, %s129
    %p133 = scmp.eq.s32.totalorder %s11, 0
    %p134 = por %p132, %p133
    %p135 = scmp.ne.s32.totalorder %s127, %s129
    %p136 = scmp.eq.s32.totalorder %s16, 1
    %p137 = por %p135, %p136
    %p138 = scmp.ne.s32.totalorder %s129, %s130
    %p139 = scmp.eq.s32.totalorder %s16, 0
    %p140 = por %p138, %p139
    %p141 = scmp.ne.s32.totalorder %s129, %s130
    %p142 = scmp.eq.s32.totalorder %s17, 1
    %p143 = por %p141, %p142
    %p145 = scmp.ne.s32.totalorder %s130, %s144
    %p146 = scmp.eq.s32.totalorder %s17, 0
    %p147 = por %p145, %p146
    %s148 = ssub.s32 %s18, %s30
    %s149 = ssub.s32 %s19, %s26
    %s150 = sor.u32 %s148, %s149
    %p151 = scmp.eq.s32.totalorder %s150, 0
    %s153 = sadd.s32 %s152, 1
    %s154 = scalar_select %p151, %s152, %s153
    %p157 = pneg %p151
    %p158 = scmp.eq.s32.totalorder %s11, 1
    %p159 = por %p157, %p158
    %p160 = scmp.ne.s32.totalorder %s152, %s155
    %p161 = scmp.eq.s32.totalorder %s11, 0
    %p162 = por %p160, %p161
    %p163 = scmp.ne.s32.totalorder %s152, %s155
    %p164 = scmp.eq.s32.totalorder %s16, 1
    %p165 = por %p163, %p164
    %p166 = scmp.ne.s32.totalorder %s155, %s156
    %p167 = scmp.eq.s32.totalorder %s16, 0
    %p168 = por %p166, %p167
    %p169 = scmp.ne.s32.totalorder %s155, %s156
    %p170 = scmp.eq.s32.totalorder %s17, 1
    %p171 = por %p169, %p170
    %p173 = scmp.ne.s32.totalorder %s156, %s172
    %p174 = scmp.eq.s32.totalorder %s17, 0
    %p175 = por %p173, %p174
    %p176 = scmp.le.s32.totalorder 1, %s11
    %p177 = scmp.lt.s32.totalorder %s11, 3
    %p178 = pnand %p176, %p177
    %p179 = pneg %p178
    // Predicated region
    $region9: #{model_forward.3} parent=5 // pred_check
      _
    $region10: #{model_forward.3} parent=5 // pred_check_branch
      %181 = sbr.rel (%p178) target = $region12
    $region11: #{model_forward.3} parent=5 // pred_region
      %s182 = ssub.s32 %s11, 1
      // Predicated region
      $region13: #{model_forward.3} parent=11 // pred_check
        %p183 = pneg %p98
      $region14: #{model_forward.3} parent=11 // pred_check_branch
        %185 = sbr.rel (%p183) target = $region16
      $region15: #{model_forward.3} parent=11 // pred_region
        _
      $region16: #{model_forward.3} parent=11 // pred_fallthru
        _
      // Predicated region
      $region17: #{model_forward.3} parent=11 // pred_check
        %p186 = pneg %p119
      $region18: #{model_forward.3} parent=11 // pred_check_branch
        %188 = sbr.rel (%p186) target = $region20
      $region19: #{model_forward.3} parent=11 // pred_region
        _
      $region20: #{model_forward.3} parent=11 // pred_fallthru
        _
      // Predicated region
      $region21: #{model_forward.3} parent=11 // pred_check
        %p189 = pneg %p140
      $region22: #{model_forward.3} parent=11 // pred_check_branch
        %191 = sbr.rel (%p189) target = $region24
      $region23: #{model_forward.3} parent=11 // pred_region
        _
      $region24: #{model_forward.3} parent=11 // pred_fallthru
        _
    $region12: #{model_forward.3} parent=5 // pred_fallthru
      _
    %p192 = scmp.lt.s32.totalorder %s11, 2
    // Predicated region
    $region25: #{model_forward.3} parent=5 // pred_check
      %p193 = pneg %p192
    $region26: #{model_forward.3} parent=5 // pred_check_branch
      %195 = sbr.rel (%p193) target = $region28
    $region27: #{model_forward.3} parent=5 // pred_region
      // Predicated region
      $region29: #{model_forward.3} parent=27 // pred_check
        %p196 = pneg %p45
      $region30: #{model_forward.3} parent=27 // pred_check_branch
        %198 = sbr.rel (%p196) target = $region32
      $region31: #{model_forward.3} parent=27 // pred_region
        %s199 = smul.u32 2, %s19
        %p200 = scmp.lt.s32.totalorder %s18, 1
        %s201 = scalar_select %p200, %s18, 1
        %p202 = scmp.lt.s32.totalorder %s199, 1
        %s203 = scalar_select %p202, %s199, 1
        %s204 = smul.addr %s201, 2
        %s205 = sadd.s32 %s203, %s204
        %s206 = smul.addr %s205, 8
        %s207 = scalar_lea.vmem %s0, %s206
        %s208 = smul.u32 2, %s19
      $region32: #{model_forward.3} parent=27 // pred_fallthru
        _
      // Predicated region
      $region33: #{model_forward.3} parent=27 // pred_check
        %p209 = pneg %p71
      $region34: #{model_forward.3} parent=27 // pred_check_branch
        %211 = sbr.rel (%p209) target = $region36
      $region35: #{model_forward.3} parent=27 // pred_region
        %p212 = scmp.lt.s32.totalorder %s18, 1
        %s213 = scalar_select %p212, %s18, 1
        %s214 = smul.addr %s213, 2
        %s215 = smul.addr %s214, 8
        %s216 = scalar_lea.vmem %s1, %s215
      $region36: #{model_forward.3} parent=27 // pred_fallthru
        _
    $region28: #{model_forward.3} parent=5 // pred_fallthru
      _
    %p217 = scmp.le.s32.totalorder 1, %s11
    %p218 = scmp.lt.s32.totalorder %s11, 3
    %p219 = pnand %p217, %p218
    %p220 = pneg %p219
    // Predicated region
    $region37: #{model_forward.3} parent=5 // pred_check
      _
    $region38: #{model_forward.3} parent=5 // pred_check_branch
      %222 = sbr.rel (%p219) target = $region40
    $region39: #{model_forward.3} parent=5 // pred_region
      %s223 = ssub.s32 %s11, 1
      %s224 = smul.u32 2, %s21
      %p225 = scmp.lt.s32.totalorder %s20, 1
      %s226 = scalar_select %p225, %s20, 1
      %p227 = scmp.lt.s32.totalorder %s224, 1
      %s228 = scalar_select %p227, %s224, 1
      %s229 = smul.addr %s226, 2
      %s230 = sadd.s32 %s228, %s229
      %s231 = smul.addr %s230, 8
      %s232 = scalar_lea.vmem %s0, %s231
      %p233 = pneg %p51
      %p234 = pneg %p48
      %p235 = scmp.lt.s32.totalorder %s20, 1
      %s236 = scalar_select %p235, %s20, 1
      %s237 = smul.addr %s236, 2
      %s238 = smul.addr %s237, 8
      %s239 = scalar_lea.vmem %s1, %s238
      %p240 = pneg %p77
      %p241 = pneg %p74
      %p242 = pneg %p98
      %p243 = pneg %p95
      %p244 = pneg %p119
      %p245 = pneg %p116
      %p246 = pneg %p140
      %p247 = pneg %p137
      %p248 = pneg %p168
      %p249 = pneg %p165
      %p250 = scmp.lt.s32.totalorder %s20, 1
      %s251 = scalar_select %p250, %s20, 1
      %p252 = scmp.lt.s32.totalorder %s21, 0
      %s253 = scalar_select %p252, %s21, 0
      %s254 = sadd.s32 %s253, %s251
      %s255 = smul.addr %s254, 2
      %s256 = scalar_lea.vmem %s5, %s255
      %s257 = smul.u32 2, %s21
      %p258 = scmp.lt.s32.totalorder %s20, 1
      %s259 = scalar_select %p258, %s20, 1
      %p260 = scmp.lt.s32.totalorder %s257, 1
      %s261 = scalar_select %p260, %s257, 1
      %s262 = smul.addr %s259, 2
      %s263 = sadd.s32 %s261, %s262
      %s264 = smul.addr %s263, 8
      %s265 = scalar_lea.vmem %s0, %s264
      %s266 = smul.u32 2, %s21
      %p267 = scmp.lt.s32.totalorder %s20, 1
      %s268 = scalar_select %p267, %s20, 1
      %s269 = smul.addr %s268, 2
      %s270 = smul.addr %s269, 8
      %s271 = scalar_lea.vmem %s1, %s270
      %p272 = scmp.lt.s32.totalorder %s20, 1
      %s273 = scalar_select %p272, %s20, 1
      %p274 = scmp.lt.s32.totalorder %s21, 0
      %s275 = scalar_select %p274, %s21, 0
      %s276 = sadd.s32 %s275, %s273
      %s277 = smul.addr %s276, 2
      %s278 = scalar_lea.vmem %s5, %s277
      %v280 = vld [vmem:[%s265] sm:$0xff]
      %v281 = vld [vmem:[%s265 + $0x8] sm:$0xff]
      %v282 = vld [vmem:[%s271] sm:$0xff]
      %v283 = vld [vmem:[%s271 + $0x8] sm:$0xff]
      %v284 = vld [vmem:[%s2] sm:$0xf]
      %v285 = vld [vmem:[%s2 + $0x4] sm:$0xf]
      %v286 = vld [vmem:[%s2 + $0x8] sm:$0xf]
      %v287 = vld [vmem:[%s2 + $0xc] sm:$0xf]
      %v288 = vld [vmem:[%s2 + $0x10] sm:$0xf]
      %v289 = vld [vmem:[%s2 + $0x14] sm:$0xf]
      %v290 = vld [vmem:[%s2 + $0x18] sm:$0xf]
      %v291 = vld [vmem:[%s2 + $0x1c] sm:$0xf]
      %v292 = vld [vmem:[%s3] sm:$0xf]
      %v293 = vld [vmem:[%s3 + $0x4] sm:$0xf]
      %v294 = vld [vmem:[%s3 + $0x8] sm:$0xf]
      %v295 = vld [vmem:[%s3 + $0xc] sm:$0xf]
      %v296 = vld [vmem:[%s3 + $0x10] sm:$0xf]
      %v297 = vld [vmem:[%s3 + $0x14] sm:$0xf]
      %v298 = vld [vmem:[%s3 + $0x18] sm:$0xf]
      %v299 = vld [vmem:[%s3 + $0x1c] sm:$0xf]
      %v300 = vld [vmem:[%s4] sm:$0x1]
      %v303 = vcombine.high %v280, %v280
      %v305 = vunpack.c.l.s4 1966171168
      %v306 = vunpack.c.0.s8 %v305
      %v307 = vlaneseq
      %v308 = vshrl.u32 %v307, 7
      %v309 = vsub.s32 %v306, %v308
      %v310 = vrot.slane %v280, %v309
      %v312 = vunpack.c.l.s4 1966171168
      %v313 = vunpack.c.0.s8 %v312
      %v314 = vlaneseq
      %v315 = vshrl.u32 %v314, 7
      %v316 = vsub.s32 %v313, %v315
      %v317 = vrot.slane %v303, %v316
      %v318 = vcombine.high %v310, %v310
      %v319 = vcombine.high %v317, %v317
      %v321 = vunpack.c.l.s4 1966171168
      %v322 = vunpack.c.0.s8 %v321
      %v323 = vlaneseq
      %v324 = vshrl.u32 %v323, 7
      %v325 = vsub.s32 %v322, %v324
      %v326 = vrot.slane %v310, %v325
      %v328 = vunpack.c.l.s4 1966171168
      %v329 = vunpack.c.0.s8 %v328
      %v330 = vlaneseq
      %v331 = vshrl.u32 %v330, 7
      %v332 = vsub.s32 %v329, %v331
      %v333 = vrot.slane %v317, %v332
      %v335 = vunpack.c.l.s4 1966171168
      %v336 = vunpack.c.0.s8 %v335
      %v337 = vlaneseq
      %v338 = vshrl.u32 %v337, 7
      %v339 = vsub.s32 %v336, %v338
      %v340 = vrot.slane %v318, %v339
      %v342 = vunpack.c.l.s4 1966171168
      %v343 = vunpack.c.0.s8 %v342
      %v344 = vlaneseq
      %v345 = vshrl.u32 %v344, 7
      %v346 = vsub.s32 %v343, %v345
      %v347 = vrot.slane %v319, %v346
      %v348 = vcombine.high %v326, %v326
      %v349 = vcombine.high %v333, %v333
      %v350 = vcombine.high %v340, %v340
      %v351 = vcombine.high %v347, %v347
      %v352 = vcombine.high %v281, %v281
      %v354 = vunpack.c.l.s4 1966171168
      %v355 = vunpack.c.0.s8 %v354
      %v356 = vlaneseq
      %v357 = vshrl.u32 %v356, 7
      %v358 = vsub.s32 %v355, %v357
      %v359 = vrot.slane %v281, %v358
      %v361 = vunpack.c.l.s4 1966171168
      %v362 = vunpack.c.0.s8 %v361
      %v363 = vlaneseq
      %v364 = vshrl.u32 %v363, 7
      %v365 = vsub.s32 %v362, %v364
      %v366 = vrot.slane %v352, %v365
      %v367 = vcombine.high %v359, %v359
      %v368 = vcombine.high %v366, %v366
      %v370 = vunpack.c.l.s4 1966171168
      %v371 = vunpack.c.0.s8 %v370
      %v372 = vlaneseq
      %v373 = vshrl.u32 %v372, 7
      %v374 = vsub.s32 %v371, %v373
      %v375 = vrot.slane %v359, %v374
      %v377 = vunpack.c.l.s4 1966171168
      %v378 = vunpack.c.0.s8 %v377
      %v379 = vlaneseq
      %v380 = vshrl.u32 %v379, 7
      %v381 = vsub.s32 %v378, %v380
      %v382 = vrot.slane %v366, %v381
      %v384 = vunpack.c.l.s4 1966171168
      %v385 = vunpack.c.0.s8 %v384
      %v386 = vlaneseq
      %v387 = vshrl.u32 %v386, 7
      %v388 = vsub.s32 %v385, %v387
      %v389 = vrot.slane %v367, %v388
      %v391 = vunpack.c.l.s4 1966171168
      %v392 = vunpack.c.0.s8 %v391
      %v393 = vlaneseq
      %v394 = vshrl.u32 %v393, 7
      %v395 = vsub.s32 %v392, %v394
      %v396 = vrot.slane %v368, %v395
      %v397 = vcombine.high %v375, %v375
      %v398 = vcombine.high %v382, %v382
      %v399 = vcombine.high %v389, %v389
      %v400 = vcombine.high %v396, %v396
      %v401 = vlaneseq
      %v402 = vshrl.u32 %v401, 7
      %v403 = vsub.s32 0, %v402
      %v404 = vrot.slane %v326, %v403
      %v405 = vlaneseq
      %v406 = vshrl.u32 %v405, 7
      %v407 = vsub.s32 0, %v406
      %v408 = vrot.slane %v340, %v407
      %v409 = vlaneseq
      %v410 = vshrl.u32 %v409, 7
      %v411 = vsub.s32 0, %v410
      %v412 = vrot.slane %v348, %v411
      %v413 = vlaneseq
      %v414 = vshrl.u32 %v413, 7
      %v415 = vsub.s32 0, %v414
      %v416 = vrot.slane %v350, %v415
      %v417 = vlaneseq
      %v418 = vshrl.u32 %v417, 7
      %v419 = vsub.s32 0, %v418
      %v420 = vrot.slane %v333, %v419
      %v421 = vlaneseq
      %v422 = vshrl.u32 %v421, 7
      %v423 = vsub.s32 0, %v422
      %v424 = vrot.slane %v347, %v423
      %v425 = vlaneseq
      %v426 = vshrl.u32 %v425, 7
      %v427 = vsub.s32 0, %v426
      %v428 = vrot.slane %v349, %v427
      %v429 = vlaneseq
      %v430 = vshrl.u32 %v429, 7
      %v431 = vsub.s32 0, %v430
      %v432 = vrot.slane %v351, %v431
      %v433 = vlaneseq
      %v434 = vshrl.u32 %v433, 7
      %v435 = vsub.s32 0, %v434
      %v436 = vrot.slane %v375, %v435
      %v437 = vlaneseq
      %v438 = vshrl.u32 %v437, 7
      %v439 = vsub.s32 0, %v438
      %v440 = vrot.slane %v389, %v439
      %v441 = vlaneseq
      %v442 = vshrl.u32 %v441, 7
      %v443 = vsub.s32 0, %v442
      %v444 = vrot.slane %v397, %v443
      %v445 = vlaneseq
      %v446 = vshrl.u32 %v445, 7
      %v447 = vsub.s32 0, %v446
      %v448 = vrot.slane %v399, %v447
      %v449 = vlaneseq
      %v450 = vshrl.u32 %v449, 7
      %v451 = vsub.s32 0, %v450
      %v452 = vrot.slane %v382, %v451
      %v453 = vlaneseq
      %v454 = vshrl.u32 %v453, 7
      %v455 = vsub.s32 0, %v454
      %v456 = vrot.slane %v396, %v455
      %v457 = vlaneseq
      %v458 = vshrl.u32 %v457, 7
      %v459 = vsub.s32 0, %v458
      %v460 = vrot.slane %v398, %v459
      %v461 = vlaneseq
      %v462 = vshrl.u32 %v461, 7
      %v463 = vsub.s32 0, %v462
      %v464 = vrot.slane %v400, %v463
      %v481 = vsub.f32 %v404, %v282
      %v482 = vsub.f32 %v404, %v283
      %v483 = vsub.f32 %v408, %v282
      %v484 = vsub.f32 %v408, %v283
      %v485 = vsub.f32 %v412, %v282
      %v486 = vsub.f32 %v412, %v283
      %v487 = vsub.f32 %v416, %v282
      %v488 = vsub.f32 %v416, %v283
      %v489 = vsub.f32 %v420, %v282
      %v490 = vsub.f32 %v420, %v283
      %v491 = vsub.f32 %v424, %v282
      %v492 = vsub.f32 %v424, %v283
      %v493 = vsub.f32 %v428, %v282
      %v494 = vsub.f32 %v428, %v283
      %v495 = vsub.f32 %v432, %v282
      %v496 = vsub.f32 %v432, %v283
      %v497 = vsub.f32 %v436, %v282
      %v498 = vsub.f32 %v436, %v283
      %v499 = vsub.f32 %v440, %v282
      %v500 = vsub.f32 %v440, %v283
      %v501 = vsub.f32 %v444, %v282
      %v502 = vsub.f32 %v444, %v283
      %v503 = vsub.f32 %v448, %v282
      %v504 = vsub.f32 %v448, %v283
      %v505 = vsub.f32 %v452, %v282
      %v506 = vsub.f32 %v452, %v283
      %v507 = vsub.f32 %v456, %v282
      %v508 = vsub.f32 %v456, %v283
      %v509 = vsub.f32 %v460, %v282
      %v510 = vsub.f32 %v460, %v283
      %v511 = vsub.f32 %v464, %v282
      %v512 = vsub.f32 %v464, %v283
      %v513 = vand.u32 2147483647, %v481
      %v514 = vand.u32 2147483647, %v482
      %v515 = vand.u32 2147483647, %v483
      %v516 = vand.u32 2147483647, %v484
      %v517 = vand.u32 2147483647, %v485
      %v518 = vand.u32 2147483647, %v486
      %v519 = vand.u32 2147483647, %v487
      %v520 = vand.u32 2147483647, %v488
      %v521 = vand.u32 2147483647, %v489
      %v522 = vand.u32 2147483647, %v490
      %v523 = vand.u32 2147483647, %v491
      %v524 = vand.u32 2147483647, %v492
      %v525 = vand.u32 2147483647, %v493
      %v526 = vand.u32 2147483647, %v494
      %v527 = vand.u32 2147483647, %v495
      %v528 = vand.u32 2147483647, %v496
      %v529 = vand.u32 2147483647, %v497
      %v530 = vand.u32 2147483647, %v498
      %v531 = vand.u32 2147483647, %v499
      %v532 = vand.u32 2147483647, %v500
      %v533 = vand.u32 2147483647, %v501
      %v534 = vand.u32 2147483647, %v502
      %v535 = vand.u32 2147483647, %v503
      %v536 = vand.u32 2147483647, %v504
      %v537 = vand.u32 2147483647, %v505
      %v538 = vand.u32 2147483647, %v506
      %v539 = vand.u32 2147483647, %v507
      %v540 = vand.u32 2147483647, %v508
      %v541 = vand.u32 2147483647, %v509
      %v542 = vand.u32 2147483647, %v510
      %v543 = vand.u32 2147483647, %v511
      %v544 = vand.u32 2147483647, %v512
      %v545 = vpack.c.bf16 %v514, %v513
      %v546 = vpack.c.bf16 %v516, %v515
      %v547 = vpack.c.bf16 %v518, %v517
      %v548 = vpack.c.bf16 %v520, %v519
      %v549 = vpack.c.bf16 %v522, %v521
      %v550 = vpack.c.bf16 %v524, %v523
      %v551 = vpack.c.bf16 %v526, %v525
      %v552 = vpack.c.bf16 %v528, %v527
      %v553 = vpack.c.bf16 %v530, %v529
      %v554 = vpack.c.bf16 %v532, %v531
      %v555 = vpack.c.bf16 %v534, %v533
      %v556 = vpack.c.bf16 %v536, %v535
      %v557 = vpack.c.bf16 %v538, %v537
      %v558 = vpack.c.bf16 %v540, %v539
      %v559 = vpack.c.bf16 %v542, %v541
      %v560 = vpack.c.bf16 %v544, %v543
      %v561 = vmul.f32 %v404, %v282
      %v562 = vmul.f32 %v404, %v283
      %v563 = vmul.f32 %v408, %v282
      %v564 = vmul.f32 %v408, %v283
      %v565 = vmul.f32 %v412, %v282
      %v566 = vmul.f32 %v412, %v283
      %v567 = vmul.f32 %v416, %v282
      %v568 = vmul.f32 %v416, %v283
      %v569 = vmul.f32 %v420, %v282
      %v570 = vmul.f32 %v420, %v283
      %v571 = vmul.f32 %v424, %v282
      %v572 = vmul.f32 %v424, %v283
      %v573 = vmul.f32 %v428, %v282
      %v574 = vmul.f32 %v428, %v283
      %v575 = vmul.f32 %v432, %v282
      %v576 = vmul.f32 %v432, %v283
      %v577 = vmul.f32 %v436, %v282
      %v578 = vmul.f32 %v436, %v283
      %v579 = vmul.f32 %v440, %v282
      %v580 = vmul.f32 %v440, %v283
      %v581 = vmul.f32 %v444, %v282
      %v582 = vmul.f32 %v444, %v283
      %v583 = vmul.f32 %v448, %v282
      %v584 = vmul.f32 %v448, %v283
      %v585 = vmul.f32 %v452, %v282
      %v586 = vmul.f32 %v452, %v283
      %v587 = vmul.f32 %v456, %v282
      %v588 = vmul.f32 %v456, %v283
      %v589 = vmul.f32 %v460, %v282
      %v590 = vmul.f32 %v460, %v283
      %v591 = vmul.f32 %v464, %v282
      %v592 = vmul.f32 %v464, %v283
      %v593 = vpack.c.bf16 %v562, %v561
      %v594 = vpack.c.bf16 %v564, %v563
      %v595 = vpack.c.bf16 %v566, %v565
      %v596 = vpack.c.bf16 %v568, %v567
      %v597 = vpack.c.bf16 %v570, %v569
      %v598 = vpack.c.bf16 %v572, %v571
      %v599 = vpack.c.bf16 %v574, %v573
      %v600 = vpack.c.bf16 %v576, %v575
      %v601 = vpack.c.bf16 %v578, %v577
      %v602 = vpack.c.bf16 %v580, %v579
      %v603 = vpack.c.bf16 %v582, %v581
      %v604 = vpack.c.bf16 %v584, %v583
      %v605 = vpack.c.bf16 %v586, %v585
      %v606 = vpack.c.bf16 %v588, %v587
      %v607 = vpack.c.bf16 %v590, %v589
      %v608 = vpack.c.bf16 %v592, %v591
      %v617 = vunpack.c.l.b16 %v292
      %v618 = vunpack.c.l.b16 %v293
      %v619 = vunpack.c.l.b16 %v294
      %v620 = vunpack.c.l.b16 %v295
      %v621 = vunpack.c.l.b16 %v296
      %v622 = vunpack.c.l.b16 %v297
      %v623 = vunpack.c.l.b16 %v298
      %v624 = vunpack.c.l.b16 %v299
      %v625 = vpack.c.b16 %v618, %v617
      %v626 = vpack.c.b16 %v620, %v619
      %v627 = vpack.c.b16 %v622, %v621
      %v628 = vpack.c.b16 %v624, %v623
      %vm633 = vcmask 523264
      %v635 = vsel %vm633, %v593, 0
      %v638 = vsel %vm633, %v594, 0
      %v641 = vsel %vm633, %v595, 0
      %v644 = vsel %vm633, %v596, 0
      %v647 = vsel %vm633, %v597, 0
      %v650 = vsel %vm633, %v598, 0
      %v653 = vsel %vm633, %v599, 0
      %v656 = vsel %vm633, %v600, 0
      %v659 = vsel %vm633, %v601, 0
      %v662 = vsel %vm633, %v602, 0
      %v665 = vsel %vm633, %v603, 0
      %v668 = vsel %vm633, %v604, 0
      %v671 = vsel %vm633, %v605, 0
      %v674 = vsel %vm633, %v606, 0
      %v677 = vsel %vm633, %v607, 0
      %v680 = vsel %vm633, %v608, 0
      %682 = vmatprep.subr.bf16.mxu0 0
      %683 = vmatpush1.bf16.msra.mxu0 %v625
      %684 = vmatprep.subr.bf16.mxu0 0
      %685 = vmatpush1.bf16.msra.mxu0 %v626
      %686 = vmatprep.subr.bf16.mxu0 0
      %687 = vmatpush1.bf16.msra.mxu0 %v627
      %688 = vmatprep.subr.bf16.mxu0 0
      %689 = vmatpush1.bf16.msra.mxu0 %v628
      %690 = vmatprep.subr.bf16.mxu0 0
      %691 = vmatpush1.bf16.msra.mxu0 0
      %692 = vmatprep.subr.bf16.mxu0 0
      %693 = vmatpush1.bf16.msra.mxu0 0
      %694 = vmatprep.subr.bf16.mxu0 0
      %695 = vmatpush1.bf16.msra.mxu0 0
      %696 = vmatprep.subr.bf16.mxu0 0
      %697 = vmatpush1.bf16.msra.mxu0 0
      %698 = vmatprep.subr.bf16.mxu0 0
      %699 = vmatpush1.bf16.msra.mxu0 0
      %700 = vmatprep.subr.bf16.mxu0 0
      %701 = vmatpush1.bf16.msra.mxu0 0
      %702 = vmatprep.subr.bf16.mxu0 0
      %703 = vmatpush1.bf16.msra.mxu0 0
      %704 = vmatprep.subr.bf16.mxu0 0
      %705 = vmatpush1.bf16.msra.mxu0 0
      %706 = vmatprep.subr.bf16.mxu0 0
      %707 = vmatpush1.bf16.msra.mxu0 0
      %708 = vmatprep.subr.bf16.mxu0 0
      %709 = vmatpush1.bf16.msra.mxu0 0
      %710 = vmatprep.subr.bf16.mxu0 0
      %711 = vmatpush1.bf16.msra.mxu0 0
      %712 = vmatprep.subr.bf16.mxu0 0
      %713 = vmatpush1.bf16.msra.mxu0 0
      %714 = vmatprep.mubr.bf16.mxu0 0
      %715 = vmatmul.mubr.bf16.gmra.mrb[0].mxu0 %v635
      %v716 = vpop.f32.mrb[0].mxu0
      %v717 = vadd.f32 0.0, %v716
      %v718 = vpop.f32.mrb[0].mxu0
      %v719 = vpop.f32.mrb[0].mxu0
      %v720 = vadd.f32 0.0, %v719
      %v721 = vpop.f32.mrb[0].mxu0
      %722 = vmatprep.mubr.bf16.mxu0 0
      %723 = vmatmul.mubr.bf16.gmra.mrb[0].mxu0 %v638
      %v724 = vpop.f32.mrb[0].mxu0
      %v725 = vadd.f32 0.0, %v724
      %v726 = vpop.f32.mrb[0].mxu0
      %v727 = vpop.f32.mrb[0].mxu0
      %v728 = vadd.f32 0.0, %v727
      %v729 = vpop.f32.mrb[0].mxu0
      %730 = vmatprep.mubr.bf16.mxu0 0
      %731 = vmatmul.mubr.bf16.gmra.mrb[0].mxu0 %v641
      %v732 = vpop.f32.mrb[0].mxu0
      %v733 = vadd.f32 0.0, %v732
      %v734 = vpop.f32.mrb[0].mxu0
      %v735 = vpop.f32.mrb[0].mxu0
      %v736 = vadd.f32 0.0, %v735
      %v737 = vpop.f32.mrb[0].mxu0
      %738 = vmatprep.mubr.bf16.mxu0 0
      %739 = vmatmul.mubr.bf16.gmra.mrb[0].mxu0 %v644
      %v740 = vpop.f32.mrb[0].mxu0
      %v741 = vadd.f32 0.0, %v740
      %v742 = vpop.f32.mrb[0].mxu0
      %v743 = vpop.f32.mrb[0].mxu0
      %v744 = vadd.f32 0.0, %v743
      %v745 = vpop.f32.mrb[0].mxu0
      %746 = vmatprep.mubr.bf16.mxu0 0
      %747 = vmatmul.mubr.bf16.gmra.mrb[0].mxu0 %v647
      %v748 = vpop.f32.mrb[0].mxu0
      %v749 = vadd.f32 0.0, %v748
      %v750 = vpop.f32.mrb[0].mxu0
      %v751 = vpop.f32.mrb[0].mxu0
      %v752 = vadd.f32 0.0, %v751
      %v753 = vpop.f32.mrb[0].mxu0
      %754 = vmatprep.mubr.bf16.mxu0 0
      %755 = vmatmul.mubr.bf16.gmra.mrb[0].mxu0 %v650
      %v756 = vpop.f32.mrb[0].mxu0
      %v757 = vadd.f32 0.0, %v756
      %v758 = vpop.f32.mrb[0].mxu0
      %v759 = vpop.f32.mrb[0].mxu0
      %v760 = vadd.f32 0.0, %v759
      %v761 = vpop.f32.mrb[0].mxu0
      %762 = vmatprep.mubr.bf16.mxu0 0
      %763 = vmatmul.mubr.bf16.gmra.mrb[0].mxu0 %v653
      %v764 = vpop.f32.mrb[0].mxu0
      %v765 = vadd.f32 0.0, %v764
      %v766 = vpop.f32.mrb[0].mxu0
      %v767 = vpop.f32.mrb[0].mxu0
      %v768 = vadd.f32 0.0, %v767
      %v769 = vpop.f32.mrb[0].mxu0
      %770 = vmatprep.mubr.bf16.mxu0 0
      %771 = vmatmul.mubr.bf16.gmra.mrb[0].mxu0 %v656
      %v772 = vpop.f32.mrb[0].mxu0
      %v773 = vadd.f32 0.0, %v772
      %v774 = vpop.f32.mrb[0].mxu0
      %v775 = vpop.f32.mrb[0].mxu0
      %v776 = vadd.f32 0.0, %v775
      %v777 = vpop.f32.mrb[0].mxu0
      %778 = vmatprep.mubr.bf16.mxu0 0
      %779 = vmatmul.mubr.bf16.gmra.mrb[0].mxu0 %v659
      %v780 = vpop.f32.mrb[0].mxu0
      %v781 = vadd.f32 0.0, %v780
      %v782 = vpop.f32.mrb[0].mxu0
      %v783 = vpop.f32.mrb[0].mxu0
      %v784 = vadd.f32 0.0, %v783
      %v785 = vpop.f32.mrb[0].mxu0
      %786 = vmatprep.mubr.bf16.mxu0 0
      %787 = vmatmul.mubr.bf16.gmra.mrb[0].mxu0 %v662
      %v788 = vpop.f32.mrb[0].mxu0
      %v789 = vadd.f32 0.0, %v788
      %v790 = vpop.f32.mrb[0].mxu0
      %v791 = vpop.f32.mrb[0].mxu0
      %v792 = vadd.f32 0.0, %v791
      %v793 = vpop.f32.mrb[0].mxu0
      %794 = vmatprep.mubr.bf16.mxu0 0
      %795 = vmatmul.mubr.bf16.gmra.mrb[0].mxu0 %v665
      %v796 = vpop.f32.mrb[0].mxu0
      %v797 = vadd.f32 0.0, %v796
      %v798 = vpop.f32.mrb[0].mxu0
      %v799 = vpop.f32.mrb[0].mxu0
      %v800 = vadd.f32 0.0, %v799
      %v801 = vpop.f32.mrb[0].mxu0
      %802 = vmatprep.mubr.bf16.mxu0 0
      %803 = vmatmul.mubr.bf16.gmra.mrb[0].mxu0 %v668
      %v804 = vpop.f32.mrb[0].mxu0
      %v805 = vadd.f32 0.0, %v804
      %v806 = vpop.f32.mrb[0].mxu0
      %v807 = vpop.f32.mrb[0].mxu0
      %v808 = vadd.f32 0.0, %v807
      %v809 = vpop.f32.mrb[0].mxu0
      %810 = vmatprep.mubr.bf16.mxu0 0
      %811 = vmatmul.mubr.bf16.gmra.mrb[0].mxu0 %v671
      %v812 = vpop.f32.mrb[0].mxu0
      %v813 = vadd.f32 0.0, %v812
      %v814 = vpop.f32.mrb[0].mxu0
      %v815 = vpop.f32.mrb[0].mxu0
      %v816 = vadd.f32 0.0, %v815
      %v817 = vpop.f32.mrb[0].mxu0
      %818 = vmatprep.mubr.bf16.mxu0 0
      %819 = vmatmul.mubr.bf16.gmra.mrb[0].mxu0 %v674
      %v820 = vpop.f32.mrb[0].mxu0
      %v821 = vadd.f32 0.0, %v820
      %v822 = vpop.f32.mrb[0].mxu0
      %v823 = vpop.f32.mrb[0].mxu0
      %v824 = vadd.f32 0.0, %v823
      %v825 = vpop.f32.mrb[0].mxu0
      %826 = vmatprep.mubr.bf16.mxu0 0
      %827 = vmatmul.mubr.bf16.gmra.mrb[0].mxu0 %v677
      %v828 = vpop.f32.mrb[0].mxu0
      %v829 = vadd.f32 0.0, %v828
      %v830 = vpop.f32.mrb[0].mxu0
      %v831 = vpop.f32.mrb[0].mxu0
      %v832 = vadd.f32 0.0, %v831
      %v833 = vpop.f32.mrb[0].mxu0
      %834 = vmatprep.mubr.bf16.mxu0 0
      %835 = vmatmul.mubr.bf16.gmra.mrb[0].mxu0 %v680
      %v836 = vpop.f32.mrb[0].mxu0
      %v837 = vadd.f32 0.0, %v836
      %v838 = vpop.f32.mrb[0].mxu0
      %v839 = vpop.f32.mrb[0].mxu0
      %v840 = vadd.f32 0.0, %v839
      %v841 = vpop.f32.mrb[0].mxu0
      %842 = vdwg.mxu0
      %v851 = vunpack.c.l.b16 %v284
      %v852 = vunpack.c.l.b16 %v285
      %v853 = vunpack.c.l.b16 %v286
      %v854 = vunpack.c.l.b16 %v287
      %v855 = vunpack.c.l.b16 %v288
      %v856 = vunpack.c.l.b16 %v289
      %v857 = vunpack.c.l.b16 %v290
      %v858 = vunpack.c.l.b16 %v291
      %v859 = vpack.c.b16 %v852, %v851
      %v860 = vpack.c.b16 %v854, %v853
      %v861 = vpack.c.b16 %v856, %v855
      %v862 = vpack.c.b16 %v858, %v857
      %v868 = vsel %vm633, %v545, 0
      %v871 = vsel %vm633, %v546, 0
      %v874 = vsel %vm633, %v547, 0
      %v877 = vsel %vm633, %v548, 0
      %v880 = vsel %vm633, %v549, 0
      %v883 = vsel %vm633, %v550, 0
      %v886 = vsel %vm633, %v551, 0
      %v889 = vsel %vm633, %v552, 0
      %v892 = vsel %vm633, %v553, 0
      %v895 = vsel %vm633, %v554, 0
      %v898 = vsel %vm633, %v555, 0
      %v901 = vsel %vm633, %v556, 0
      %v904 = vsel %vm633, %v557, 0
      %v907 = vsel %vm633, %v558, 0
      %v910 = vsel %vm633, %v559, 0
      %v913 = vsel %vm633, %v560, 0
      %915 = vmatprep.subr.bf16.mxu0 0
      %916 = vmatpush1.bf16.msra.mxu0 %v859
      %917 = vmatprep.subr.bf16.mxu0 0
      %918 = vmatpush1.bf16.msra.mxu0 %v860
      %919 = vmatprep.subr.bf16.mxu0 0
      %920 = vmatpush1.bf16.msra.mxu0 %v861
      %921 = vmatprep.subr.bf16.mxu0 0
      %922 = vmatpush1.bf16.msra.mxu0 %v862
      %923 = vmatprep.subr.bf16.mxu0 0
      %924 = vmatpush1.bf16.msra.mxu0 0
      %925 = vmatprep.subr.bf16.mxu0 0
      %926 = vmatpush1.bf16.msra.mxu0 0
      %927 = vmatprep.subr.bf16.mxu0 0
      %928 = vmatpush1.bf16.msra.mxu0 0
      %929 = vmatprep.subr.bf16.mxu0 0
      %930 = vmatpush1.bf16.msra.mxu0 0
      %931 = vmatprep.subr.bf16.mxu0 0
      %932 = vmatpush1.bf16.msra.mxu0 0
      %933 = vmatprep.subr.bf16.mxu0 0
      %934 = vmatpush1.bf16.msra.mxu0 0
      %935 = vmatprep.subr.bf16.mxu0 0
      %936 = vmatpush1.bf16.msra.mxu0 0
      %937 = vmatprep.subr.bf16.mxu0 0
      %938 = vmatpush1.bf16.msra.mxu0 0
      %939 = vmatprep.subr.bf16.mxu0 0
      %940 = vmatpush1.bf16.msra.mxu0 0
      %941 = vmatprep.subr.bf16.mxu0 0
      %942 = vmatpush1.bf16.msra.mxu0 0
      %943 = vmatprep.subr.bf16.mxu0 0
      %944 = vmatpush1.bf16.msra.mxu0 0
      %945 = vmatprep.subr.bf16.mxu0 0
      %946 = vmatpush1.bf16.msra.mxu0 0
      %947 = vmatprep.mubr.bf16.mxu0 0
      %948 = vmatmul.mubr.bf16.gmra.mrb[0].mxu0 %v868
      %v949 = vpop.f32.mrb[0].mxu0
      %v950 = vadd.f32 %v717, %v949
      %v951 = vpop.f32.mrb[0].mxu0
      %v952 = vpop.f32.mrb[0].mxu0
      %v953 = vadd.f32 %v720, %v952
      %v954 = vpop.f32.mrb[0].mxu0
      %955 = vmatprep.mubr.bf16.mxu0 0
      %956 = vmatmul.mubr.bf16.gmra.mrb[0].mxu0 %v871
      %v957 = vpop.f32.mrb[0].mxu0
      %v958 = vadd.f32 %v725, %v957
      %v959 = vpop.f32.mrb[0].mxu0
      %v960 = vpop.f32.mrb[0].mxu0
      %v961 = vadd.f32 %v728, %v960
      %v962 = vpop.f32.mrb[0].mxu0
      %963 = vmatprep.mubr.bf16.mxu0 0
      %964 = vmatmul.mubr.bf16.gmra.mrb[0].mxu0 %v874
      %v965 = vpop.f32.mrb[0].mxu0
      %v966 = vadd.f32 %v733, %v965
      %v967 = vpop.f32.mrb[0].mxu0
      %v968 = vpop.f32.mrb[0].mxu0
      %v969 = vadd.f32 %v736, %v968
      %v970 = vpop.f32.mrb[0].mxu0
      %971 = vmatprep.mubr.bf16.mxu0 0
      %972 = vmatmul.mubr.bf16.gmra.mrb[0].mxu0 %v877
      %v973 = vpop.f32.mrb[0].mxu0
      %v974 = vadd.f32 %v741, %v973
      %v975 = vpop.f32.mrb[0].mxu0
      %v976 = vpop.f32.mrb[0].mxu0
      %v977 = vadd.f32 %v744, %v976
      %v978 = vpop.f32.mrb[0].mxu0
      %979 = vmatprep.mubr.bf16.mxu0 0
      %980 = vmatmul.mubr.bf16.gmra.mrb[0].mxu0 %v880
      %v981 = vpop.f32.mrb[0].mxu0
      %v982 = vadd.f32 %v749, %v981
      %v983 = vpop.f32.mrb[0].mxu0
      %v984 = vpop.f32.mrb[0].mxu0
      %v985 = vadd.f32 %v752, %v984
      %v986 = vpop.f32.mrb[0].mxu0
      %987 = vmatprep.mubr.bf16.mxu0 0
      %988 = vmatmul.mubr.bf16.gmra.mrb[0].mxu0 %v883
      %v989 = vpop.f32.mrb[0].mxu0
      %v990 = vadd.f32 %v757, %v989
      %v991 = vpop.f32.mrb[0].mxu0
      %v992 = vpop.f32.mrb[0].mxu0
      %v993 = vadd.f32 %v760, %v992
      %v994 = vpop.f32.mrb[0].mxu0
      %995 = vmatprep.mubr.bf16.mxu0 0
      %996 = vmatmul.mubr.bf16.gmra.mrb[0].mxu0 %v886
      %v997 = vpop.f32.mrb[0].mxu0
      %v998 = vadd.f32 %v765, %v997
      %v999 = vpop.f32.mrb[0].mxu0
      %v1000 = vpop.f32.mrb[0].mxu0
      %v1001 = vadd.f32 %v768, %v1000
      %v1002 = vpop.f32.mrb[0].mxu0
      %1003 = vmatprep.mubr.bf16.mxu0 0
      %1004 = vmatmul.mubr.bf16.gmra.mrb[0].mxu0 %v889
      %v1005 = vpop.f32.mrb[0].mxu0
      %v1006 = vadd.f32 %v773, %v1005
      %v1007 = vpop.f32.mrb[0].mxu0
      %v1008 = vpop.f32.mrb[0].mxu0
      %v1009 = vadd.f32 %v776, %v1008
      %v1010 = vpop.f32.mrb[0].mxu0
      %1011 = vmatprep.mubr.bf16.mxu0 0
      %1012 = vmatmul.mubr.bf16.gmra.mrb[0].mxu0 %v892
      %v1013 = vpop.f32.mrb[0].mxu0
      %v1014 = vadd.f32 %v781, %v1013
      %v1015 = vpop.f32.mrb[0].mxu0
      %v1016 = vpop.f32.mrb[0].mxu0
      %v1017 = vadd.f32 %v784, %v1016
      %v1018 = vpop.f32.mrb[0].mxu0
      %1019 = vmatprep.mubr.bf16.mxu0 0
      %1020 = vmatmul.mubr.bf16.gmra.mrb[0].mxu0 %v895
      %v1021 = vpop.f32.mrb[0].mxu0
      %v1022 = vadd.f32 %v789, %v1021
      %v1023 = vpop.f32.mrb[0].mxu0
      %v1024 = vpop.f32.mrb[0].mxu0
      %v1025 = vadd.f32 %v792, %v1024
      %v1026 = vpop.f32.mrb[0].mxu0
      %1027 = vmatprep.mubr.bf16.mxu0 0
      %1028 = vmatmul.mubr.bf16.gmra.mrb[0].mxu0 %v898
      %v1029 = vpop.f32.mrb[0].mxu0
      %v1030 = vadd.f32 %v797, %v1029
      %v1031 = vpop.f32.mrb[0].mxu0
      %v1032 = vpop.f32.mrb[0].mxu0
      %v1033 = vadd.f32 %v800, %v1032
      %v1034 = vpop.f32.mrb[0].mxu0
      %1035 = vmatprep.mubr.bf16.mxu0 0
      %1036 = vmatmul.mubr.bf16.gmra.mrb[0].mxu0 %v901
      %v1037 = vpop.f32.mrb[0].mxu0
      %v1038 = vadd.f32 %v805, %v1037
      %v1039 = vpop.f32.mrb[0].mxu0
      %v1040 = vpop.f32.mrb[0].mxu0
      %v1041 = vadd.f32 %v808, %v1040
      %v1042 = vpop.f32.mrb[0].mxu0
      %1043 = vmatprep.mubr.bf16.mxu0 0
      %1044 = vmatmul.mubr.bf16.gmra.mrb[0].mxu0 %v904
      %v1045 = vpop.f32.mrb[0].mxu0
      %v1046 = vadd.f32 %v813, %v1045
      %v1047 = vpop.f32.mrb[0].mxu0
      %v1048 = vpop.f32.mrb[0].mxu0
      %v1049 = vadd.f32 %v816, %v1048
      %v1050 = vpop.f32.mrb[0].mxu0
      %1051 = vmatprep.mubr.bf16.mxu0 0
      %1052 = vmatmul.mubr.bf16.gmra.mrb[0].mxu0 %v907
      %v1053 = vpop.f32.mrb[0].mxu0
      %v1054 = vadd.f32 %v821, %v1053
      %v1055 = vpop.f32.mrb[0].mxu0
      %v1056 = vpop.f32.mrb[0].mxu0
      %v1057 = vadd.f32 %v824, %v1056
      %v1058 = vpop.f32.mrb[0].mxu0
      %1059 = vmatprep.mubr.bf16.mxu0 0
      %1060 = vmatmul.mubr.bf16.gmra.mrb[0].mxu0 %v910
      %v1061 = vpop.f32.mrb[0].mxu0
      %v1062 = vadd.f32 %v829, %v1061
      %v1063 = vpop.f32.mrb[0].mxu0
      %v1064 = vpop.f32.mrb[0].mxu0
      %v1065 = vadd.f32 %v832, %v1064
      %v1066 = vpop.f32.mrb[0].mxu0
      %1067 = vmatprep.mubr.bf16.mxu0 0
      %1068 = vmatmul.mubr.bf16.gmra.mrb[0].mxu0 %v913
      %v1069 = vpop.f32.mrb[0].mxu0
      %v1070 = vadd.f32 %v837, %v1069
      %v1071 = vpop.f32.mrb[0].mxu0
      %v1072 = vpop.f32.mrb[0].mxu0
      %v1073 = vadd.f32 %v840, %v1072
      %v1074 = vpop.f32.mrb[0].mxu0
      %1075 = vdwg.mxu0
      %v1077 = vlaneseq
      %v1078 = vshrl.u32 %v1077, 7
      %v1079 = vsub.s32 0, %v1078
      %v1080 = vrot.slane %v300, %v1079
      %v1082 = vadd.f32 %v950, %v1080
      %v1083 = vadd.f32 %v953, %v1080
      %v1084 = vadd.f32 %v958, %v1080
      %v1085 = vadd.f32 %v961, %v1080
      %v1086 = vadd.f32 %v966, %v1080
      %v1087 = vadd.f32 %v969, %v1080
      %v1088 = vadd.f32 %v974, %v1080
      %v1089 = vadd.f32 %v977, %v1080
      %v1090 = vadd.f32 %v982, %v1080
      %v1091 = vadd.f32 %v985, %v1080
      %v1092 = vadd.f32 %v990, %v1080
      %v1093 = vadd.f32 %v993, %v1080
      %v1094 = vadd.f32 %v998, %v1080
      %v1095 = vadd.f32 %v1001, %v1080
      %v1096 = vadd.f32 %v1006, %v1080
      %v1097 = vadd.f32 %v1009, %v1080
      %v1098 = vadd.f32 %v1014, %v1080
      %v1099 = vadd.f32 %v1017, %v1080
      %v1100 = vadd.f32 %v1022, %v1080
      %v1101 = vadd.f32 %v1025, %v1080
      %v1102 = vadd.f32 %v1030, %v1080
      %v1103 = vadd.f32 %v1033, %v1080
      %v1104 = vadd.f32 %v1038, %v1080
      %v1105 = vadd.f32 %v1041, %v1080
      %v1106 = vadd.f32 %v1046, %v1080
      %v1107 = vadd.f32 %v1049, %v1080
      %v1108 = vadd.f32 %v1054, %v1080
      %v1109 = vadd.f32 %v1057, %v1080
      %v1110 = vadd.f32 %v1062, %v1080
      %v1111 = vadd.f32 %v1065, %v1080
      %v1112 = vadd.f32 %v1070, %v1080
      %v1113 = vadd.f32 %v1073, %v1080
      %s1114 = smul.u32 %s21, 16
      %v1115 = vstv %s1114
      %v1116 = vadd.s32 %v1115, 1
      %v1117 = vadd.s32 %v1115, 2
      %v1118 = vadd.s32 %v1115, 3
      %v1119 = vadd.s32 %v1115, 4
      %v1120 = vadd.s32 %v1115, 5
      %v1121 = vadd.s32 %v1115, 6
      %v1122 = vadd.s32 %v1115, 7
      %v1123 = vadd.s32 %v1115, 8
      %v1124 = vadd.s32 %v1115, 9
      %v1125 = vadd.s32 %v1115, 10
      %v1126 = vadd.s32 %v1115, 11
      %v1127 = vadd.s32 %v1115, 12
      %v1128 = vadd.s32 %v1115, 13
      %v1129 = vadd.s32 %v1115, 14
      %v1130 = vadd.s32 %v1115, 15
      %v1131 = vlaneseq
      %v1132 = vshrl.u32 %v1131, 7
      %v1133 = vadd.s32 %v1132, 8
      %vm1134 = vcmp.lt.s32.totalorder %v1115, 12
      %vm1135 = vcmp.lt.s32.totalorder %v1116, 12
      %vm1136 = vcmp.lt.s32.totalorder %v1117, 12
      %vm1137 = vcmp.lt.s32.totalorder %v1118, 12
      %vm1138 = vcmp.lt.s32.totalorder %v1119, 12
      %vm1139 = vcmp.lt.s32.totalorder %v1120, 12
      %vm1140 = vcmp.lt.s32.totalorder %v1121, 12
      %vm1141 = vcmp.lt.s32.totalorder %v1122, 12
      %vm1142 = vcmp.lt.s32.totalorder %v1123, 12
      %vm1143 = vcmp.lt.s32.totalorder %v1124, 12
      %vm1144 = vcmp.lt.s32.totalorder %v1125, 12
      %vm1145 = vcmp.lt.s32.totalorder %v1126, 12
      %vm1146 = vcmp.lt.s32.totalorder %v1127, 12
      %vm1147 = vcmp.lt.s32.totalorder %v1128, 12
      %vm1148 = vcmp.lt.s32.totalorder %v1129, 12
      %vm1149 = vcmp.lt.s32.totalorder %v1130, 12
      %vm1150 = vcmp.lt.s32.totalorder %v1132, 12
      %vm1151 = vcmp.lt.s32.totalorder %v1133, 12
      %vm1152 = vmand %vm1134, %vm1150
      %vm1153 = vmand %vm1134, %vm1151
      %vm1154 = vmand %vm1135, %vm1150
      %vm1155 = vmand %vm1135, %vm1151
      %vm1156 = vmand %vm1136, %vm1150
      %vm1157 = vmand %vm1136, %vm1151
      %vm1158 = vmand %vm1137, %vm1150
      %vm1159 = vmand %vm1137, %vm1151
      %vm1160 = vmand %vm1138, %vm1150
      %vm1161 = vmand %vm1138, %vm1151
      %vm1162 = vmand %vm1139, %vm1150
      %vm1163 = vmand %vm1139, %vm1151
      %vm1164 = vmand %vm1140, %vm1150
      %vm1165 = vmand %vm1140, %vm1151
      %vm1166 = vmand %vm1141, %vm1150
      %vm1167 = vmand %vm1141, %vm1151
      %vm1168 = vmand %vm1142, %vm1150
      %vm1169 = vmand %vm1142, %vm1151
      %vm1170 = vmand %vm1143, %vm1150
      %vm1171 = vmand %vm1143, %vm1151
      %vm1172 = vmand %vm1144, %vm1150
      %vm1173 = vmand %vm1144, %vm1151
      %vm1174 = vmand %vm1145, %vm1150
      %vm1175 = vmand %vm1145, %vm1151
      %vm1176 = vmand %vm1146, %vm1150
      %vm1177 = vmand %vm1146, %vm1151
      %vm1178 = vmand %vm1147, %vm1150
      %vm1179 = vmand %vm1147, %vm1151
      %vm1180 = vmand %vm1148, %vm1150
      %vm1181 = vmand %vm1148, %vm1151
      %vm1182 = vmand %vm1149, %vm1150
      %vm1183 = vmand %vm1149, %vm1151
      %v1184 = vsel %vm1152, %v1082, 0.0
      %v1185 = vsel %vm1153, %v1083, 0.0
      %v1186 = vsel %vm1154, %v1084, 0.0
      %v1187 = vsel %vm1155, %v1085, 0.0
      %v1188 = vsel %vm1156, %v1086, 0.0
      %v1189 = vsel %vm1157, %v1087, 0.0
      %v1190 = vsel %vm1158, %v1088, 0.0
      %v1191 = vsel %vm1159, %v1089, 0.0
      %v1192 = vsel %vm1160, %v1090, 0.0
      %v1193 = vsel %vm1161, %v1091, 0.0
      %v1194 = vsel %vm1162, %v1092, 0.0
      %v1195 = vsel %vm1163, %v1093, 0.0
      %v1196 = vsel %vm1164, %v1094, 0.0
      %v1197 = vsel %vm1165, %v1095, 0.0
      %v1198 = vsel %vm1166, %v1096, 0.0
      %v1199 = vsel %vm1167, %v1097, 0.0
      %v1200 = vsel %vm1168, %v1098, 0.0
      %v1201 = vsel %vm1169, %v1099, 0.0
      %v1202 = vsel %vm1170, %v1100, 0.0
      %v1203 = vsel %vm1171, %v1101, 0.0
      %v1204 = vsel %vm1172, %v1102, 0.0
      %v1205 = vsel %vm1173, %v1103, 0.0
      %v1206 = vsel %vm1174, %v1104, 0.0
      %v1207 = vsel %vm1175, %v1105, 0.0
      %v1208 = vsel %vm1176, %v1106, 0.0
      %v1209 = vsel %vm1177, %v1107, 0.0
      %v1210 = vsel %vm1178, %v1108, 0.0
      %v1211 = vsel %vm1179, %v1109, 0.0
      %v1212 = vsel %vm1180, %v1110, 0.0
      %v1213 = vsel %vm1181, %v1111, 0.0
      %v1214 = vsel %vm1182, %v1112, 0.0
      %v1215 = vsel %vm1183, %v1113, 0.0
      %v1216 = vsel %vm633, %v1184, 0.0
      %v1217 = vsel %vm633, %v1185, 0.0
      %v1218 = vadd.f32 %v1216, %v1217
      %v1219 = vsel %vm633, %v1186, 0.0
      %v1220 = vadd.f32 %v1218, %v1219
      %v1221 = vsel %vm633, %v1187, 0.0
      %v1222 = vadd.f32 %v1220, %v1221
      %v1223 = vsel %vm633, %v1188, 0.0
      %v1224 = vadd.f32 %v1222, %v1223
      %v1225 = vsel %vm633, %v1189, 0.0
      %v1226 = vadd.f32 %v1224, %v1225
      %v1227 = vsel %vm633, %v1190, 0.0
      %v1228 = vadd.f32 %v1226, %v1227
      %v1229 = vsel %vm633, %v1191, 0.0
      %v1230 = vadd.f32 %v1228, %v1229
      %v1231 = vsel %vm633, %v1192, 0.0
      %v1232 = vadd.f32 %v1230, %v1231
      %v1233 = vsel %vm633, %v1193, 0.0
      %v1234 = vadd.f32 %v1232, %v1233
      %v1235 = vsel %vm633, %v1194, 0.0
      %v1236 = vadd.f32 %v1234, %v1235
      %v1237 = vsel %vm633, %v1195, 0.0
      %v1238 = vadd.f32 %v1236, %v1237
      %v1239 = vsel %vm633, %v1196, 0.0
      %v1240 = vadd.f32 %v1238, %v1239
      %v1241 = vsel %vm633, %v1197, 0.0
      %v1242 = vadd.f32 %v1240, %v1241
      %v1243 = vsel %vm633, %v1198, 0.0
      %v1244 = vadd.f32 %v1242, %v1243
      %v1245 = vsel %vm633, %v1199, 0.0
      %v1246 = vadd.f32 %v1244, %v1245
      %v1247 = vsel %vm633, %v1200, 0.0
      %v1248 = vadd.f32 %v1246, %v1247
      %v1249 = vsel %vm633, %v1201, 0.0
      %v1250 = vadd.f32 %v1248, %v1249
      %v1251 = vsel %vm633, %v1202, 0.0
      %v1252 = vadd.f32 %v1250, %v1251
      %v1253 = vsel %vm633, %v1203, 0.0
      %v1254 = vadd.f32 %v1252, %v1253
      %v1255 = vsel %vm633, %v1204, 0.0
      %v1256 = vadd.f32 %v1254, %v1255
      %v1257 = vsel %vm633, %v1205, 0.0
      %v1258 = vadd.f32 %v1256, %v1257
      %v1259 = vsel %vm633, %v1206, 0.0
      %v1260 = vadd.f32 %v1258, %v1259
      %v1261 = vsel %vm633, %v1207, 0.0
      %v1262 = vadd.f32 %v1260, %v1261
      %v1263 = vsel %vm633, %v1208, 0.0
      %v1264 = vadd.f32 %v1262, %v1263
      %v1265 = vsel %vm633, %v1209, 0.0
      %v1266 = vadd.f32 %v1264, %v1265
      %v1267 = vsel %vm633, %v1210, 0.0
      %v1268 = vadd.f32 %v1266, %v1267
      %v1269 = vsel %vm633, %v1211, 0.0
      %v1270 = vadd.f32 %v1268, %v1269
      %v1271 = vsel %vm633, %v1212, 0.0
      %v1272 = vadd.f32 %v1270, %v1271
      %v1273 = vsel %vm633, %v1213, 0.0
      %v1274 = vadd.f32 %v1272, %v1273
      %v1275 = vsel %vm633, %v1214, 0.0
      %v1276 = vadd.f32 %v1274, %v1275
      %v1277 = vsel %vm633, %v1215, 0.0
      %v1278 = vadd.f32 %v1276, %v1277
      %v1279 = vrot.slane %v1278, 4
      %v1280 = vadd.f32 %v1278, %v1279
      %v1281 = vrot.slane %v1280, 2
      %v1282 = vadd.f32 %v1280, %v1281
      %v1283 = vrot.slane %v1282, 1
      %v1284 = vadd.f32 %v1282, %v1283
      %vm1285 = vcmask 516096
      %1286 = vst.msk [vmem:[%s278] sm:$0x1] %vm1285, %v1284
      %v1287 = vmul.f32 %v1184, %v1184
      %v1288 = vmul.f32 %v1185, %v1185
      %v1289 = vmul.f32 %v1186, %v1186
      %v1290 = vmul.f32 %v1187, %v1187
      %v1291 = vmul.f32 %v1188, %v1188
      %v1292 = vmul.f32 %v1189, %v1189
      %v1293 = vmul.f32 %v1190, %v1190
      %v1294 = vmul.f32 %v1191, %v1191
      %v1295 = vmul.f32 %v1192, %v1192
      %v1296 = vmul.f32 %v1193, %v1193
      %v1297 = vmul.f32 %v1194, %v1194
      %v1298 = vmul.f32 %v1195, %v1195
      %v1299 = vmul.f32 %v1196, %v1196
      %v1300 = vmul.f32 %v1197, %v1197
      %v1301 = vmul.f32 %v1198, %v1198
      %v1302 = vmul.f32 %v1199, %v1199
      %v1303 = vmul.f32 %v1200, %v1200
      %v1304 = vmul.f32 %v1201, %v1201
      %v1305 = vmul.f32 %v1202, %v1202
      %v1306 = vmul.f32 %v1203, %v1203
      %v1307 = vmul.f32 %v1204, %v1204
      %v1308 = vmul.f32 %v1205, %v1205
      %v1309 = vmul.f32 %v1206, %v1206
      %v1310 = vmul.f32 %v1207, %v1207
      %v1311 = vmul.f32 %v1208, %v1208
      %v1312 = vmul.f32 %v1209, %v1209
      %v1313 = vmul.f32 %v1210, %v1210
      %v1314 = vmul.f32 %v1211, %v1211
      %v1315 = vmul.f32 %v1212, %v1212
      %v1316 = vmul.f32 %v1213, %v1213
      %v1317 = vmul.f32 %v1214, %v1214
      %v1318 = vmul.f32 %v1215, %v1215
      %v1319 = vsel %vm633, %v1287, 0.0
      %v1320 = vsel %vm633, %v1288, 0.0
      %v1321 = vadd.f32 %v1319, %v1320
      %v1322 = vsel %vm633, %v1289, 0.0
      %v1323 = vadd.f32 %v1321, %v1322
      %v1324 = vsel %vm633, %v1290, 0.0
      %v1325 = vadd.f32 %v1323, %v1324
      %v1326 = vsel %vm633, %v1291, 0.0
      %v1327 = vadd.f32 %v1325, %v1326
      %v1328 = vsel %vm633, %v1292, 0.0
      %v1329 = vadd.f32 %v1327, %v1328
      %v1330 = vsel %vm633, %v1293, 0.0
      %v1331 = vadd.f32 %v1329, %v1330
      %v1332 = vsel %vm633, %v1294, 0.0
      %v1333 = vadd.f32 %v1331, %v1332
      %v1334 = vsel %vm633, %v1295, 0.0
      %v1335 = vadd.f32 %v1333, %v1334
      %v1336 = vsel %vm633, %v1296, 0.0
      %v1337 = vadd.f32 %v1335, %v1336
      %v1338 = vsel %vm633, %v1297, 0.0
      %v1339 = vadd.f32 %v1337, %v1338
      %v1340 = vsel %vm633, %v1298, 0.0
      %v1341 = vadd.f32 %v1339, %v1340
      %v1342 = vsel %vm633, %v1299, 0.0
      %v1343 = vadd.f32 %v1341, %v1342
      %v1344 = vsel %vm633, %v1300, 0.0
      %v1345 = vadd.f32 %v1343, %v1344
      %v1346 = vsel %vm633, %v1301, 0.0
      %v1347 = vadd.f32 %v1345, %v1346
      %v1348 = vsel %vm633, %v1302, 0.0
      %v1349 = vadd.f32 %v1347, %v1348
      %v1350 = vsel %vm633, %v1303, 0.0
      %v1351 = vadd.f32 %v1349, %v1350
      %v1352 = vsel %vm633, %v1304, 0.0
      %v1353 = vadd.f32 %v1351, %v1352
      %v1354 = vsel %vm633, %v1305, 0.0
      %v1355 = vadd.f32 %v1353, %v1354
      %v1356 = vsel %vm633, %v1306, 0.0
      %v1357 = vadd.f32 %v1355, %v1356
      %v1358 = vsel %vm633, %v1307, 0.0
      %v1359 = vadd.f32 %v1357, %v1358
      %v1360 = vsel %vm633, %v1308, 0.0
      %v1361 = vadd.f32 %v1359, %v1360
      %v1362 = vsel %vm633, %v1309, 0.0
      %v1363 = vadd.f32 %v1361, %v1362
      %v1364 = vsel %vm633, %v1310, 0.0
      %v1365 = vadd.f32 %v1363, %v1364
      %v1366 = vsel %vm633, %v1311, 0.0
      %v1367 = vadd.f32 %v1365, %v1366
      %v1368 = vsel %vm633, %v1312, 0.0
      %v1369 = vadd.f32 %v1367, %v1368
      %v1370 = vsel %vm633, %v1313, 0.0
      %v1371 = vadd.f32 %v1369, %v1370
      %v1372 = vsel %vm633, %v1314, 0.0
      %v1373 = vadd.f32 %v1371, %v1372
      %v1374 = vsel %vm633, %v1315, 0.0
      %v1375 = vadd.f32 %v1373, %v1374
      %v1376 = vsel %vm633, %v1316, 0.0
      %v1377 = vadd.f32 %v1375, %v1376
      %v1378 = vsel %vm633, %v1317, 0.0
      %v1379 = vadd.f32 %v1377, %v1378
      %v1380 = vsel %vm633, %v1318, 0.0
      %v1381 = vadd.f32 %v1379, %v1380
      %v1382 = vrot.slane %v1381, 4
      %v1383 = vadd.f32 %v1381, %v1382
      %v1384 = vrot.slane %v1383, 2
      %v1385 = vadd.f32 %v1383, %v1384
      %v1386 = vrot.slane %v1385, 1
      %v1387 = vadd.f32 %v1385, %v1386
      %1388 = vst.msk [vmem:[%s278 + $0x1] sm:$0x1] %vm1285, %v1387
      %p1389 = scmp.lt.s32.totalorder %s20, 1
      %s1390 = scalar_select %p1389, %s20, 1
      %p1391 = scmp.lt.s32.totalorder %s21, 0
      %s1392 = scalar_select %p1391, %s21, 0
      %s1393 = sadd.s32 %s1392, %s1390
      %s1394 = smul.addr %s1393, 2
      %s1395 = scalar_lea.vmem %s5, %s1394
      // Predicated region
      $region41: #{model_forward.3} parent=39 // pred_check
        %p1396 = pneg %p165
      $region42: #{model_forward.3} parent=39 // pred_check_branch
        %1398 = sbr.rel (%p1396) target = $region44
      $region43: #{model_forward.3} parent=39 // pred_region
        _
      $region44: #{model_forward.3} parent=39 // pred_fallthru
        _
    $region40: #{model_forward.3} parent=5 // pred_fallthru
      _
    %p1399 = scmp.le.s32.totalorder 2, %s11
    // Predicated region
    $region45: #{model_forward.3} parent=5 // pred_check
      %p1400 = pneg %p1399
    $region46: #{model_forward.3} parent=5 // pred_check_branch
      %1402 = sbr.rel (%p1400) target = $region48
    $region47: #{model_forward.3} parent=5 // pred_region
      %s1403 = ssub.s32 %s11, 2
      // Predicated region
      $region49: #{model_forward.3} parent=47 // pred_check
        %p1404 = pneg %p171
      $region50: #{model_forward.3} parent=47 // pred_check_branch
        %1406 = sbr.rel (%p1404) target = $region52
      $region51: #{model_forward.3} parent=47 // pred_region
        %p1407 = scmp.lt.s32.totalorder %s22, 1
        %s1408 = scalar_select %p1407, %s22, 1
        %p1409 = scmp.lt.s32.totalorder %s23, 0
        %s1410 = scalar_select %p1409, %s23, 0
        %s1411 = sadd.s32 %s1410, %s1408
        %s1412 = smul.addr %s1411, 2
        %s1413 = scalar_lea.vmem %s5, %s1412
      $region52: #{model_forward.3} parent=47 // pred_fallthru
        _
    $region48: #{model_forward.3} parent=5 // pred_fallthru
      _
  $region6: #{model_forward.3} parent=0 // loop_footer
    %s15 = sadd.s32 1, %s11
  $region7: #{model_forward.3} parent=0 // loop_footer_branch
    %10 = sbr.rel target = $region3
  $region8: #{model_forward.3} parent=0 // loop_exit
    _

// kernel: model_forward.5
$region0: #{model_forward.5}
  #allocation0 [shape = 'u32[]', space=smem, size = 0x4, offset = 0x4, fixed_abs, tag = 'smem constant byte address 0x4 - core index']
  #allocation1 [shape = 'u32[144,128]{1,0:T(1,128)}', space=vmem, size = 0x12000, scoped, tag = 'internal scratch']
  %s0 = inlined_call_operand.vmem [shape: bf16[2,16,16,64], index: 0, kind: input, shape index: {}]
  %s1 = inlined_call_operand.vmem [shape: f32[2,2,64], index: 1, kind: input, shape index: {}]
  %s2 = inlined_call_operand.vmem [shape: f32[1,64], index: 2, kind: input, shape index: {}]
  %s3 = inlined_call_operand.hbm [shape: f32[2,16,16], index: 3, kind: output, shape index: {}]
  %s4 = sld [smem:[#allocation0]]
  $region45: #{model_forward.5} parent=0
    _
  %s6 = ssub.s32 1, %s4
  %s7 = scalar_select 0, %s6, %s4
  $region1: #{model_forward.5} parent=0
    #allocation2 [shape = 'u8[16384]{0}', space=vmem, size = 0x4000, scoped, tag = 'output window, operand 0']
    #allocation3 [shape = 's32[2]{0}', space=sflag, size = 0x8, scoped, tag = 'scoped memory for model_forward.5']
    %8 = vsyncpa [#allocation3], 0
    %s9 = scalar_lea.sflag [#allocation3], 1
    %10 = vsyncpa %s9, 0
    loop: start=0, step=1, limit=4
    $region2: #{model_forward.5} parent=1 // loop_pre_header
      _
    $region3: #{model_forward.5} parent=1 // loop_header
      %s12 = sphi 0, %s16
      %p13 = scmp.ge.s32.totalorder %s12, 4
      %s19 = sphi 0, %s31
      %s20 = sphi 0, %s27
      %s21 = sphi 0, %s19
      %s22 = sphi 0, %s20
      %s23 = sphi 0, %s21
      %s24 = sphi 0, %s22
      %s36 = sphi 0, %s38
      %s39 = sphi 0, %s36
      %s40 = sphi 0, %s39
      %s56 = sphi 0, %s40
      %s62 = sphi 0, %s64
      %s65 = sphi 0, %s62
      %s66 = sphi 0, %s65
      %s82 = sphi 0, %s66
      %s86 = sphi 0, %s86
      %s88 = sphi 0, %s86
      %s89 = sphi 0, %s88
      %s103 = sphi 0, %s89
      %s111 = sphi 0, %s113
      %s114 = sphi 0, %s111
      %s115 = sphi 0, %s114
      %s131 = sphi 0, %s115
    $region4: #{model_forward.5} parent=1 // loop_header_branch
      %15 = sbr.rel (%p13) target = $region8
    $region5: #{model_forward.5} parent=1 // loop_body
      %s17 = ssub.s32 %s12, 1
      %s18 = ssub.s32 %s12, 2
      %s25 = sadd.s32 1, %s20
      %p26 = scmp.ge.s32.totalorder %s25, 1
      %s27 = scalar_select %p26, 0, %s25
      %s28 = sadd.s32 1, %s19
      %s29 = scalar_select %p26, %s28, %s19
      %p30 = scmp.ge.s32.totalorder %s29, 2
      %s31 = scalar_select %p30, 0, %s29
      %s32 = ssub.s32 %s19, %s31
      %s33 = ssub.s32 %s20, %s27
      %s34 = sor.u32 %s32, %s33
      %p35 = scmp.eq.s32.totalorder %s34, 0
      %s37 = sadd.s32 %s36, 1
      %s38 = scalar_select %p35, %s36, %s37
      %p41 = pneg %p35
      %p42 = scmp.eq.s32.totalorder %s12, 1
      %p43 = por %p41, %p42
      %p44 = scmp.ne.s32.totalorder %s36, %s39
      %p45 = scmp.eq.s32.totalorder %s12, 0
      %p46 = por %p44, %p45
      %p47 = scmp.ne.s32.totalorder %s36, %s39
      %p48 = scmp.eq.s32.totalorder %s17, 1
      %p49 = por %p47, %p48
      %p50 = scmp.ne.s32.totalorder %s39, %s40
      %p51 = scmp.eq.s32.totalorder %s17, 0
      %p52 = por %p50, %p51
      %p53 = scmp.ne.s32.totalorder %s39, %s40
      %p54 = scmp.eq.s32.totalorder %s18, 1
      %p55 = por %p53, %p54
      %p57 = scmp.ne.s32.totalorder %s40, %s56
      %p58 = scmp.eq.s32.totalorder %s18, 0
      %p59 = por %p57, %p58
      %s60 = ssub.s32 %s19, %s31
      %p61 = scmp.eq.s32.totalorder %s60, 0
      %s63 = sadd.s32 %s62, 1
      %s64 = scalar_select %p61, %s62, %s63
      %p67 = pneg %p61
      %p68 = scmp.eq.s32.totalorder %s12, 1
      %p69 = por %p67, %p68
      %p70 = scmp.ne.s32.totalorder %s62, %s65
      %p71 = scmp.eq.s32.totalorder %s12, 0
      %p72 = por %p70, %p71
      %p73 = scmp.ne.s32.totalorder %s62, %s65
      %p74 = scmp.eq.s32.totalorder %s17, 1
      %p75 = por %p73, %p74
      %p76 = scmp.ne.s32.totalorder %s65, %s66
      %p77 = scmp.eq.s32.totalorder %s17, 0
      %p78 = por %p76, %p77
      %p79 = scmp.ne.s32.totalorder %s65, %s66
      %p80 = scmp.eq.s32.totalorder %s18, 1
      %p81 = por %p79, %p80
      %p83 = scmp.ne.s32.totalorder %s66, %s82
      %p84 = scmp.eq.s32.totalorder %s18, 0
      %p85 = por %p83, %p84
      %s87 = sadd.s32 %s86, 1
      %p90 = scmp.eq.s32.totalorder %s12, 1
      %p91 = scmp.ne.s32.totalorder %s86, %s88
      %p92 = scmp.eq.s32.totalorder %s12, 0
      %p93 = por %p91, %p92
      %p94 = scmp.ne.s32.totalorder %s86, %s88
      %p95 = scmp.eq.s32.totalorder %s17, 1
      %p96 = por %p94, %p95
      %p97 = scmp.ne.s32.totalorder %s88, %s89
      %p98 = scmp.eq.s32.totalorder %s17, 0
      %p99 = por %p97, %p98
      %p100 = scmp.ne.s32.totalorder %s88, %s89
      %p101 = scmp.eq.s32.totalorder %s18, 1
      %p102 = por %p100, %p101
      %p104 = scmp.ne.s32.totalorder %s89, %s103
      %p105 = scmp.eq.s32.totalorder %s18, 0
      %p106 = por %p104, %p105
      %s107 = ssub.s32 %s19, %s31
      %s108 = ssub.s32 %s20, %s27
      %s109 = sor.u32 %s107, %s108
      %p110 = scmp.eq.s32.totalorder %s109, 0
      %s112 = sadd.s32 %s111, 1
      %s113 = scalar_select %p110, %s111, %s112
      %p116 = pneg %p110
      %p117 = scmp.eq.s32.totalorder %s12, 1
      %p118 = por %p116, %p117
      %p119 = scmp.ne.s32.totalorder %s111, %s114
      %p120 = scmp.eq.s32.totalorder %s12, 0
      %p121 = por %p119, %p120
      %p122 = scmp.ne.s32.totalorder %s111, %s114
      %p123 = scmp.eq.s32.totalorder %s17, 1
      %p124 = por %p122, %p123
      %p125 = scmp.ne.s32.totalorder %s114, %s115
      %p126 = scmp.eq.s32.totalorder %s17, 0
      %p127 = por %p125, %p126
      %p128 = scmp.ne.s32.totalorder %s114, %s115
      %p129 = scmp.eq.s32.totalorder %s18, 1
      %p130 = por %p128, %p129
      %p132 = scmp.ne.s32.totalorder %s115, %s131
      %p133 = scmp.eq.s32.totalorder %s18, 0
      %p134 = por %p132, %p133
      %p135 = scmp.le.s32.totalorder 1, %s12
      %p136 = scmp.lt.s32.totalorder %s12, 3
      %p137 = pnand %p135, %p136
      %p138 = pneg %p137
      // Predicated region
      $region9: #{model_forward.5} parent=5 // pred_check
        _
      $region10: #{model_forward.5} parent=5 // pred_check_branch
        %140 = sbr.rel (%p137) target = $region12
      $region11: #{model_forward.5} parent=5 // pred_region
        %s141 = ssub.s32 %s12, 1
        // Predicated region
        $region13: #{model_forward.5} parent=11 // pred_check
          %p142 = pneg %p99
        $region14: #{model_forward.5} parent=11 // pred_check_branch
          %144 = sbr.rel (%p142) target = $region16
        $region15: #{model_forward.5} parent=11 // pred_region
          _
        $region16: #{model_forward.5} parent=11 // pred_fallthru
          _
      $region12: #{model_forward.5} parent=5 // pred_fallthru
        _
      %p145 = scmp.lt.s32.totalorder %s12, 2
      // Predicated region
      $region17: #{model_forward.5} parent=5 // pred_check
        %p146 = pneg %p145
      $region18: #{model_forward.5} parent=5 // pred_check_branch
        %148 = sbr.rel (%p146) target = $region20
      $region19: #{model_forward.5} parent=5 // pred_region
        // Predicated region
        $region21: #{model_forward.5} parent=19 // pred_check
          %p149 = pneg %p46
        $region22: #{model_forward.5} parent=19 // pred_check_branch
          %151 = sbr.rel (%p149) target = $region24
        $region23: #{model_forward.5} parent=19 // pred_region
          %s152 = smul.u32 16, %s20
          %p153 = scmp.lt.s32.totalorder %s19, 1
          %s154 = scalar_select %p153, %s19, 1
          %p155 = scmp.lt.s32.totalorder %s152, 15
          %s156 = scalar_select %p155, %s152, 15
          %s157 = smul.addr %s156, 2
          %s158 = smul.addr %s154, 32
          %s159 = sadd.s32 %s157, %s158
          %s160 = smul.addr %s159, 4
          %s161 = scalar_lea.vmem %s0, %s160
          %s162 = smul.u32 16, %s20
        $region24: #{model_forward.5} parent=19 // pred_fallthru
          _
        // Predicated region
        $region25: #{model_forward.5} parent=19 // pred_check
          %p163 = pneg %p72
        $region26: #{model_forward.5} parent=19 // pred_check_branch
          %165 = sbr.rel (%p163) target = $region28
        $region27: #{model_forward.5} parent=19 // pred_region
          %p166 = scmp.lt.s32.totalorder %s19, 1
          %s167 = scalar_select %p166, %s19, 1
          %s168 = smul.addr %s167, 2
          %s169 = scalar_lea.vmem %s1, %s168
        $region28: #{model_forward.5} parent=19 // pred_fallthru
          _
      $region20: #{model_forward.5} parent=5 // pred_fallthru
        _
      %p170 = scmp.le.s32.totalorder 1, %s12
      %p171 = scmp.lt.s32.totalorder %s12, 3
      %p172 = pnand %p170, %p171
      %p173 = pneg %p172
      // Predicated region
      $region29: #{model_forward.5} parent=5 // pred_check
        _
      $region30: #{model_forward.5} parent=5 // pred_check_branch
        %175 = sbr.rel (%p172) target = $region32
      $region31: #{model_forward.5} parent=5 // pred_region
        %s176 = ssub.s32 %s12, 1
        %s177 = smul.u32 16, %s22
        %p178 = scmp.lt.s32.totalorder %s21, 1
        %s179 = scalar_select %p178, %s21, 1
        %p180 = scmp.lt.s32.totalorder %s177, 15
        %s181 = scalar_select %p180, %s177, 15
        %s182 = smul.addr %s181, 2
        %s183 = smul.addr %s179, 32
        %s184 = sadd.s32 %s182, %s183
        %s185 = smul.addr %s184, 4
        %s186 = scalar_lea.vmem %s0, %s185
        %p187 = pneg %p52
        %p188 = pneg %p49
        %p189 = scmp.lt.s32.totalorder %s21, 1
        %s190 = scalar_select %p189, %s21, 1
        %s191 = smul.addr %s190, 2
        %s192 = scalar_lea.vmem %s1, %s191
        %p193 = pneg %p78
        %p194 = pneg %p75
        %p195 = pneg %p99
        %p196 = pneg %p96
        %p197 = pneg %p127
        %p198 = pneg %p124
        %s199 = sand.u32 %s114, 1
        %s200 = scalar_lea.sflag [#allocation3], %s199
        %s201 = sand.u32 %s114, 1
        %s202 = smul.addr %s201, 16
        %s203 = scalar_lea.vmem [#allocation2], %s202
        %s204 = smul.u32 16, %s22
        %p205 = scmp.lt.s32.totalorder %s21, 1
        %s206 = scalar_select %p205, %s21, 1
        %p207 = scmp.lt.s32.totalorder %s204, 15
        %s208 = scalar_select %p207, %s204, 15
        %s209 = smul.addr %s208, 2
        %s210 = smul.addr %s206, 32
        %s211 = sadd.s32 %s209, %s210
        %s212 = smul.addr %s211, 4
        %s213 = scalar_lea.vmem %s0, %s212
        %s214 = smul.u32 16, %s22
        %p215 = scmp.lt.s32.totalorder %s21, 1
        %s216 = scalar_select %p215, %s21, 1
        %s217 = smul.addr %s216, 2
        %s218 = scalar_lea.vmem %s1, %s217
        %s219 = smul.u32 2, %s22
        %v220 = vld [vmem:[%s218] sm:$0x1]
        %v221 = vld [vmem:[%s218 + $0x1] sm:$0x1]
        %v222 = vmul.f32 %v220, 0.00390625
        %v223 = vmul.f32 %v221, 0.00390625
        %v224 = vmul.f32 %v222, %v222
        %v225 = vsub.f32 %v223, %v224
        %v226 = vmax.f32 %v225, 0.0
        %v227 = vadd.f32 %v226, 1e-05
        %v228 = vrsqrt.pop %v227
        %v229 = vld [vmem:[%s213] sm:$0xf]
        %v230 = vld [vmem:[%s213 + $0x4] sm:$0xf]
        %v231 = vld [vmem:[%s213 + $0x8] sm:$0xf]
        %v232 = vld [vmem:[%s213 + $0xc] sm:$0xf]
        %v233 = vld [vmem:[%s213 + $0x10] sm:$0xf]
        %v234 = vld [vmem:[%s213 + $0x14] sm:$0xf]
        %v235 = vld [vmem:[%s213 + $0x18] sm:$0xf]
        %v236 = vld [vmem:[%s213 + $0x1c] sm:$0xf]
        %v237 = vld [vmem:[%s213 + $0x20] sm:$0xf]
        %v238 = vld [vmem:[%s213 + $0x24] sm:$0xf]
        %v239 = vld [vmem:[%s213 + $0x28] sm:$0xf]
        %v240 = vld [vmem:[%s213 + $0x2c] sm:$0xf]
        %v241 = vld [vmem:[%s213 + $0x30] sm:$0xf]
        %v242 = vld [vmem:[%s213 + $0x34] sm:$0xf]
        %v243 = vld [vmem:[%s213 + $0x38] sm:$0xf]
        %v244 = vld [vmem:[%s213 + $0x3c] sm:$0xf]
        %v245 = vld [vmem:[%s213 + $0x40] sm:$0xf]
        %v246 = vld [vmem:[%s213 + $0x44] sm:$0xf]
        %v247 = vld [vmem:[%s213 + $0x48] sm:$0xf]
        %v248 = vld [vmem:[%s213 + $0x4c] sm:$0xf]
        %v249 = vld [vmem:[%s213 + $0x50] sm:$0xf]
        %v250 = vld [vmem:[%s213 + $0x54] sm:$0xf]
        %v251 = vld [vmem:[%s213 + $0x58] sm:$0xf]
        %v252 = vld [vmem:[%s213 + $0x5c] sm:$0xf]
        %v253 = vld [vmem:[%s213 + $0x60] sm:$0xf]
        %v254 = vld [vmem:[%s213 + $0x64] sm:$0xf]
        %v255 = vld [vmem:[%s213 + $0x68] sm:$0xf]
        %v256 = vld [vmem:[%s213 + $0x6c] sm:$0xf]
        %v257 = vld [vmem:[%s213 + $0x70] sm:$0xf]
        %v258 = vld [vmem:[%s213 + $0x74] sm:$0xf]
        %v259 = vld [vmem:[%s213 + $0x78] sm:$0xf]
        %v260 = vld [vmem:[%s213 + $0x7c] sm:$0xf]
        %v261 = vunpack.c.l.bf16 %v229
        %v262 = vunpack.c.l.bf16 %v230
        %v263 = vunpack.c.l.bf16 %v231
        %v264 = vunpack.c.l.bf16 %v232
        %v265 = vunpack.c.l.bf16 %v233
        %v266 = vunpack.c.l.bf16 %v234
        %v267 = vunpack.c.l.bf16 %v235
        %v268 = vunpack.c.l.bf16 %v236
        %v269 = vunpack.c.l.bf16 %v237
        %v270 = vunpack.c.l.bf16 %v238
        %v271 = vunpack.c.l.bf16 %v239
        %v272 = vunpack.c.l.bf16 %v240
        %v273 = vunpack.c.l.bf16 %v241
        %v274 = vunpack.c.l.bf16 %v242
        %v275 = vunpack.c.l.bf16 %v243
        %v276 = vunpack.c.l.bf16 %v244
        %v277 = vunpack.c.l.bf16 %v245
        %v278 = vunpack.c.l.bf16 %v246
        %v279 = vunpack.c.l.bf16 %v247
        %v280 = vunpack.c.l.bf16 %v248
        %v281 = vunpack.c.l.bf16 %v249
        %v282 = vunpack.c.l.bf16 %v250
        %v283 = vunpack.c.l.bf16 %v251
        %v284 = vunpack.c.l.bf16 %v252
        %v285 = vunpack.c.l.bf16 %v253
        %v286 = vunpack.c.l.bf16 %v254
        %v287 = vunpack.c.l.bf16 %v255
        %v288 = vunpack.c.l.bf16 %v256
        %v289 = vunpack.c.l.bf16 %v257
        %v290 = vunpack.c.l.bf16 %v258
        %v291 = vunpack.c.l.bf16 %v259
        %v292 = vunpack.c.l.bf16 %v260
        %v293 = vlaneseq
        %v294 = vshrl.u32 %v293, 7
        %v295 = vsub.s32 0, %v294
        %v296 = vrot.slane %v222, %v295
        %v297 = vsub.f32 %v261, %v296
        %v298 = vsub.f32 %v262, %v296
        %v299 = vsub.f32 %v263, %v296
        %v300 = vsub.f32 %v264, %v296
        %v301 = vsub.f32 %v265, %v296
        %v302 = vsub.f32 %v266, %v296
        %v303 = vsub.f32 %v267, %v296
        %v304 = vsub.f32 %v268, %v296
        %v305 = vsub.f32 %v269, %v296
        %v306 = vsub.f32 %v270, %v296
        %v307 = vsub.f32 %v271, %v296
        %v308 = vsub.f32 %v272, %v296
        %v309 = vsub.f32 %v273, %v296
        %v310 = vsub.f32 %v274, %v296
        %v311 = vsub.f32 %v275, %v296
        %v312 = vsub.f32 %v276, %v296
        %v313 = vsub.f32 %v277, %v296
        %v314 = vsub.f32 %v278, %v296
        %v315 = vsub.f32 %v279, %v296
        %v316 = vsub.f32 %v280, %v296
        %v317 = vsub.f32 %v281, %v296
        %v318 = vsub.f32 %v282, %v296
        %v319 = vsub.f32 %v283, %v296
        %v320 = vsub.f32 %v284, %v296
        %v321 = vsub.f32 %v285, %v296
        %v322 = vsub.f32 %v286, %v296
        %v323 = vsub.f32 %v287, %v296
        %v324 = vsub.f32 %v288, %v296
        %v325 = vsub.f32 %v289, %v296
        %v326 = vsub.f32 %v290, %v296
        %v327 = vsub.f32 %v291, %v296
        %v328 = vsub.f32 %v292, %v296
        %v329 = vlaneseq
        %v330 = vshrl.u32 %v329, 7
        %v331 = vsub.s32 0, %v330
        %v332 = vrot.slane %v228, %v331
        %v333 = vmul.f32 %v297, %v332
        %v334 = vmul.f32 %v298, %v332
        %v335 = vmul.f32 %v299, %v332
        %v336 = vmul.f32 %v300, %v332
        %v337 = vmul.f32 %v301, %v332
        %v338 = vmul.f32 %v302, %v332
        %v339 = vmul.f32 %v303, %v332
        %v340 = vmul.f32 %v304, %v332
        %v341 = vmul.f32 %v305, %v332
        %v342 = vmul.f32 %v306, %v332
        %v343 = vmul.f32 %v307, %v332
        %v344 = vmul.f32 %v308, %v332
        %v345 = vmul.f32 %v309, %v332
        %v346 = vmul.f32 %v310, %v332
        %v347 = vmul.f32 %v311, %v332
        %v348 = vmul.f32 %v312, %v332
        %v349 = vmul.f32 %v313, %v332
        %v350 = vmul.f32 %v314, %v332
        %v351 = vmul.f32 %v315, %v332
        %v352 = vmul.f32 %v316, %v332
        %v353 = vmul.f32 %v317, %v332
        %v354 = vmul.f32 %v318, %v332
        %v355 = vmul.f32 %v319, %v332
        %v356 = vmul.f32 %v320, %v332
        %v357 = vmul.f32 %v321, %v332
        %v358 = vmul.f32 %v322, %v332
        %v359 = vmul.f32 %v323, %v332
        %v360 = vmul.f32 %v324, %v332
        %v361 = vmul.f32 %v325, %v332
        %v362 = vmul.f32 %v326, %v332
        %v363 = vmul.f32 %v327, %v332
        %v364 = vmul.f32 %v328, %v332
        %vm365 = vcmp.gt.f32.partialorder %v333, 0.0
        %vm366 = vcmp.gt.f32.partialorder %v334, 0.0
        %vm367 = vcmp.gt.f32.partialorder %v335, 0.0
        %vm368 = vcmp.gt.f32.partialorder %v336, 0.0
        %vm369 = vcmp.gt.f32.partialorder %v337, 0.0
        %vm370 = vcmp.gt.f32.partialorder %v338, 0.0
        %vm371 = vcmp.gt.f32.partialorder %v339, 0.0
        %vm372 = vcmp.gt.f32.partialorder %v340, 0.0
        %vm373 = vcmp.gt.f32.partialorder %v341, 0.0
        %vm374 = vcmp.gt.f32.partialorder %v342, 0.0
        %vm375 = vcmp.gt.f32.partialorder %v343, 0.0
        %vm376 = vcmp.gt.f32.partialorder %v344, 0.0
        %vm377 = vcmp.gt.f32.partialorder %v345, 0.0
        %vm378 = vcmp.gt.f32.partialorder %v346, 0.0
        %vm379 = vcmp.gt.f32.partialorder %v347, 0.0
        %vm380 = vcmp.gt.f32.partialorder %v348, 0.0
        %vm381 = vcmp.gt.f32.partialorder %v349, 0.0
        %vm382 = vcmp.gt.f32.partialorder %v350, 0.0
        %vm383 = vcmp.gt.f32.partialorder %v351, 0.0
        %vm384 = vcmp.gt.f32.partialorder %v352, 0.0
        %vm385 = vcmp.gt.f32.partialorder %v353, 0.0
        %vm386 = vcmp.gt.f32.partialorder %v354, 0.0
        %vm387 = vcmp.gt.f32.partialorder %v355, 0.0
        %vm388 = vcmp.gt.f32.partialorder %v356, 0.0
        %vm389 = vcmp.gt.f32.partialorder %v357, 0.0
        %vm390 = vcmp.gt.f32.partialorder %v358, 0.0
        %vm391 = vcmp.gt.f32.partialorder %v359, 0.0
        %vm392 = vcmp.gt.f32.partialorder %v360, 0.0
        %vm393 = vcmp.gt.f32.partialorder %v361, 0.0
        %vm394 = vcmp.gt.f32.partialorder %v362, 0.0
        %vm395 = vcmp.gt.f32.partialorder %v363, 0.0
        %vm396 = vcmp.gt.f32.partialorder %v364, 0.0
        %v397 = vmin.f32 %v333, 0.0
        %v398 = vmin.f32 %v334, 0.0
        %v399 = vmin.f32 %v335, 0.0
        %v400 = vmin.f32 %v336, 0.0
        %v401 = vmin.f32 %v337, 0.0
        %v402 = vmin.f32 %v338, 0.0
        %v403 = vmin.f32 %v339, 0.0
        %v404 = vmin.f32 %v340, 0.0
        %v405 = vmin.f32 %v341, 0.0
        %v406 = vmin.f32 %v342, 0.0
        %v407 = vmin.f32 %v343, 0.0
        %v408 = vmin.f32 %v344, 0.0
        %v409 = vmin.f32 %v345, 0.0
        %v410 = vmin.f32 %v346, 0.0
        %v411 = vmin.f32 %v347, 0.0
        %v412 = vmin.f32 %v348, 0.0
        %v413 = vmin.f32 %v349, 0.0
        %v414 = vmin.f32 %v350, 0.0
        %v415 = vmin.f32 %v351, 0.0
        %v416 = vmin.f32 %v352, 0.0
        %v417 = vmin.f32 %v353, 0.0
        %v418 = vmin.f32 %v354, 0.0
        %v419 = vmin.f32 %v355, 0.0
        %v420 = vmin.f32 %v356, 0.0
        %v421 = vmin.f32 %v357, 0.0
        %v422 = vmin.f32 %v358, 0.0
        %v423 = vmin.f32 %v359, 0.0
        %v424 = vmin.f32 %v360, 0.0
        %v425 = vmin.f32 %v361, 0.0
        %v426 = vmin.f32 %v362, 0.0
        %v427 = vmin.f32 %v363, 0.0
        %v428 = vmin.f32 %v364, 0.0
        %v429 = vmul.f32 %v397, 1.442695
        %v430 = vpow.pop %v429
        %v431 = vmul.f32 %v398, 1.442695
        %v432 = vpow.pop %v431
        %v433 = vmul.f32 %v399, 1.442695
        %v434 = vpow.pop %v433
        %v435 = vmul.f32 %v400, 1.442695
        %v436 = vpow.pop %v435
        %v437 = vmul.f32 %v401, 1.442695
        %v438 = vpow.pop %v437
        %v439 = vmul.f32 %v402, 1.442695
        %v440 = vpow.pop %v439
        %v441 = vmul.f32 %v403, 1.442695
        %v442 = vpow.pop %v441
        %v443 = vmul.f32 %v404, 1.442695
        %v444 = vpow.pop %v443
        %v445 = vmul.f32 %v405, 1.442695
        %v446 = vpow.pop %v445
        %v447 = vmul.f32 %v406, 1.442695
        %v448 = vpow.pop %v447
        %v449 = vmul.f32 %v407, 1.442695
        %v450 = vpow.pop %v449
        %v451 = vmul.f32 %v408, 1.442695
        %v452 = vpow.pop %v451
        %v453 = vmul.f32 %v409, 1.442695
        %v454 = vpow.pop %v453
        %v455 = vmul.f32 %v410, 1.442695
        %v456 = vpow.pop %v455
        %v457 = vmul.f32 %v411, 1.442695
        %v458 = vpow.pop %v457
        %v459 = vmul.f32 %v412, 1.442695
        %v460 = vpow.pop %v459
        %v461 = vmul.f32 %v413, 1.442695
        %v462 = vpow.pop %v461
        %v463 = vmul.f32 %v414, 1.442695
        %v464 = vpow.pop %v463
        %v465 = vmul.f32 %v415, 1.442695
        %v466 = vpow.pop %v465
        %v467 = vmul.f32 %v416, 1.442695
        %v468 = vpow.pop %v467
        %v469 = vmul.f32 %v417, 1.442695
        %v470 = vpow.pop %v469
        %v471 = vmul.f32 %v418, 1.442695
        %v472 = vpow.pop %v471
        %v473 = vmul.f32 %v419, 1.442695
        %v474 = vpow.pop %v473
        %v475 = vmul.f32 %v420, 1.442695
        %v476 = vpow.pop %v475
        %v477 = vmul.f32 %v421, 1.442695
        %v478 = vpow.pop %v477
        %v479 = vmul.f32 %v422, 1.442695
        %v480 = vpow.pop %v479
        %v481 = vmul.f32 %v423, 1.442695
        %v482 = vpow.pop %v481
        %v483 = vmul.f32 %v424, 1.442695
        %v484 = vpow.pop %v483
        %v485 = vmul.f32 %v425, 1.442695
        %v486 = vpow.pop %v485
        %v487 = vmul.f32 %v426, 1.442695
        %v488 = vpow.pop %v487
        %v489 = vmul.f32 %v427, 1.442695
        %v490 = vpow.pop %v489
        %v491 = vmul.f32 %v428, 1.442695
        %v492 = vpow.pop %v491
        %v493 = vsub.f32 %v430, 1.0
        %v494 = vsub.f32 %v432, 1.0
        %v495 = vsub.f32 %v434, 1.0
        %v496 = vsub.f32 %v436, 1.0
        %v497 = vsub.f32 %v438, 1.0
        %v498 = vsub.f32 %v440, 1.0
        %v499 = vsub.f32 %v442, 1.0
        %v500 = vsub.f32 %v444, 1.0
        %v501 = vsub.f32 %v446, 1.0
        %v502 = vsub.f32 %v448, 1.0
        %v503 = vsub.f32 %v450, 1.0
        %v504 = vsub.f32 %v452, 1.0
        %v505 = vsub.f32 %v454, 1.0
        %v506 = vsub.f32 %v456, 1.0
        %v507 = vsub.f32 %v458, 1.0
        %v508 = vsub.f32 %v460, 1.0
        %v509 = vsub.f32 %v462, 1.0
        %v510 = vsub.f32 %v464, 1.0
        %v511 = vsub.f32 %v466, 1.0
        %v512 = vsub.f32 %v468, 1.0
        %v513 = vsub.f32 %v470, 1.0
        %v514 = vsub.f32 %v472, 1.0
        %v515 = vsub.f32 %v474, 1.0
        %v516 = vsub.f32 %v476, 1.0
        %v517 = vsub.f32 %v478, 1.0
        %v518 = vsub.f32 %v480, 1.0
        %v519 = vsub.f32 %v482, 1.0
        %v520 = vsub.f32 %v484, 1.0
        %v521 = vsub.f32 %v486, 1.0
        %v522 = vsub.f32 %v488, 1.0
        %v523 = vsub.f32 %v490, 1.0
        %v524 = vsub.f32 %v492, 1.0
        %v525 = vsel %vm365, %v333, %v493
        %v526 = vsel %vm366, %v334, %v494
        %v527 = vsel %vm367, %v335, %v495
        %v528 = vsel %vm368, %v336, %v496
        %v529 = vsel %vm369, %v337, %v497
        %v530 = vsel %vm370, %v338, %v498
        %v531 = vsel %vm371, %v339, %v499
        %v532 = vsel %vm372, %v340, %v500
        %v533 = vsel %vm373, %v341, %v501
        %v534 = vsel %vm374, %v342, %v502
        %v535 = vsel %vm375, %v343, %v503
        %v536 = vsel %vm376, %v344, %v504
        %v537 = vsel %vm377, %v345, %v505
        %v538 = vsel %vm378, %v346, %v506
        %v539 = vsel %vm379, %v347, %v507
        %v540 = vsel %vm380, %v348, %v508
        %v541 = vsel %vm381, %v349, %v509
        %v542 = vsel %vm382, %v350, %v510
        %v543 = vsel %vm383, %v351, %v511
        %v544 = vsel %vm384, %v352, %v512
        %v545 = vsel %vm385, %v353, %v513
        %v546 = vsel %vm386, %v354, %v514
        %v547 = vsel %vm387, %v355, %v515
        %v548 = vsel %vm388, %v356, %v516
        %v549 = vsel %vm389, %v357, %v517
        %v550 = vsel %vm390, %v358, %v518
        %v551 = vsel %vm391, %v359, %v519
        %v552 = vsel %vm392, %v360, %v520
        %v553 = vsel %vm393, %v361, %v521
        %v554 = vsel %vm394, %v362, %v522
        %v555 = vsel %vm395, %v363, %v523
        %v556 = vsel %vm396, %v364, %v524
        %v557 = vld [vmem:[%s2] sm:$0x1]
        %v559 = vlaneseq
        %v560 = vshrl.u32 %v559, 7
        %v561 = vsub.s32 0, %v560
        %v562 = vrot.slane %v557, %v561
        %v564 = vmul.f32 %v525, %v562
        %v565 = vmul.f32 %v526, %v562
        %v566 = vmul.f32 %v527, %v562
        %v567 = vmul.f32 %v528, %v562
        %v568 = vmul.f32 %v529, %v562
        %v569 = vmul.f32 %v530, %v562
        %v570 = vmul.f32 %v531, %v562
        %v571 = vmul.f32 %v532, %v562
        %v572 = vmul.f32 %v533, %v562
        %v573 = vmul.f32 %v534, %v562
        %v574 = vmul.f32 %v535, %v562
        %v575 = vmul.f32 %v536, %v562
        %v576 = vmul.f32 %v537, %v562
        %v577 = vmul.f32 %v538, %v562
        %v578 = vmul.f32 %v539, %v562
        %v579 = vmul.f32 %v540, %v562
        %v580 = vmul.f32 %v541, %v562
        %v581 = vmul.f32 %v542, %v562
        %v582 = vmul.f32 %v543, %v562
        %v583 = vmul.f32 %v544, %v562
        %v584 = vmul.f32 %v545, %v562
        %v585 = vmul.f32 %v546, %v562
        %v586 = vmul.f32 %v547, %v562
        %v587 = vmul.f32 %v548, %v562
        %v588 = vmul.f32 %v549, %v562
        %v589 = vmul.f32 %v550, %v562
        %v590 = vmul.f32 %v551, %v562
        %v591 = vmul.f32 %v552, %v562
        %v592 = vmul.f32 %v553, %v562
        %v593 = vmul.f32 %v554, %v562
        %v594 = vmul.f32 %v555, %v562
        %v595 = vmul.f32 %v556, %v562
        %vm596 = vcmask 523264
        %v597 = vsel %vm596, %v564, 0.0
        %598 = vadd.xlane.f32.xlu0 %v597
        %v599 = vpop.xlane.xlu0 %598
        %v600 = vsel %vm596, %v565, 0.0
        %601 = vadd.xlane.f32.xlu0 %v600
        %v602 = vpop.xlane.xlu0 %601
        %v603 = vsel %vm596, %v566, 0.0
        %604 = vadd.xlane.f32.xlu0 %v603
        %v605 = vpop.xlane.xlu0 %604
        %v606 = vsel %vm596, %v567, 0.0
        %607 = vadd.xlane.f32.xlu0 %v606
        %v608 = vpop.xlane.xlu0 %607
        %v609 = vsel %vm596, %v568, 0.0
        %610 = vadd.xlane.f32.xlu0 %v609
        %v611 = vpop.xlane.xlu0 %610
        %v612 = vsel %vm596, %v569, 0.0
        %613 = vadd.xlane.f32.xlu0 %v612
        %v614 = vpop.xlane.xlu0 %613
        %v615 = vsel %vm596, %v570, 0.0
        %616 = vadd.xlane.f32.xlu0 %v615
        %v617 = vpop.xlane.xlu0 %616
        %v618 = vsel %vm596, %v571, 0.0
        %619 = vadd.xlane.f32.xlu0 %v618
        %v620 = vpop.xlane.xlu0 %619
        %v621 = vsel %vm596, %v572, 0.0
        %622 = vadd.xlane.f32.xlu0 %v621
        %v623 = vpop.xlane.xlu0 %622
        %v624 = vsel %vm596, %v573, 0.0
        %625 = vadd.xlane.f32.xlu0 %v624
        %v626 = vpop.xlane.xlu0 %625
        %v627 = vsel %vm596, %v574, 0.0
        %628 = vadd.xlane.f32.xlu0 %v627
        %v629 = vpop.xlane.xlu0 %628
        %v630 = vsel %vm596, %v575, 0.0
        %631 = vadd.xlane.f32.xlu0 %v630
        %v632 = vpop.xlane.xlu0 %631
        %v633 = vsel %vm596, %v576, 0.0
        %634 = vadd.xlane.f32.xlu0 %v633
        %v635 = vpop.xlane.xlu0 %634
        %v636 = vsel %vm596, %v577, 0.0
        %637 = vadd.xlane.f32.xlu0 %v636
        %v638 = vpop.xlane.xlu0 %637
        %v639 = vsel %vm596, %v578, 0.0
        %640 = vadd.xlane.f32.xlu0 %v639
        %v641 = vpop.xlane.xlu0 %640
        %v642 = vsel %vm596, %v579, 0.0
        %643 = vadd.xlane.f32.xlu0 %v642
        %v644 = vpop.xlane.xlu0 %643
        %v645 = vsel %vm596, %v580, 0.0
        %646 = vadd.xlane.f32.xlu0 %v645
        %v647 = vpop.xlane.xlu0 %646
        %v648 = vsel %vm596, %v581, 0.0
        %649 = vadd.xlane.f32.xlu0 %v648
        %v650 = vpop.xlane.xlu0 %649
        %v651 = vsel %vm596, %v582, 0.0
        %652 = vadd.xlane.f32.xlu0 %v651
        %v653 = vpop.xlane.xlu0 %652
        %v654 = vsel %vm596, %v583, 0.0
        %655 = vadd.xlane.f32.xlu0 %v654
        %v656 = vpop.xlane.xlu0 %655
        %v657 = vsel %vm596, %v584, 0.0
        %658 = vadd.xlane.f32.xlu0 %v657
        %v659 = vpop.xlane.xlu0 %658
        %v660 = vsel %vm596, %v585, 0.0
        %661 = vadd.xlane.f32.xlu0 %v660
        %v662 = vpop.xlane.xlu0 %661
        %v663 = vsel %vm596, %v586, 0.0
        %664 = vadd.xlane.f32.xlu0 %v663
        %v665 = vpop.xlane.xlu0 %664
        %v666 = vsel %vm596, %v587, 0.0
        %667 = vadd.xlane.f32.xlu0 %v666
        %v668 = vpop.xlane.xlu0 %667
        %v669 = vsel %vm596, %v588, 0.0
        %670 = vadd.xlane.f32.xlu0 %v669
        %v671 = vpop.xlane.xlu0 %670
        %v672 = vsel %vm596, %v589, 0.0
        %673 = vadd.xlane.f32.xlu0 %v672
        %v674 = vpop.xlane.xlu0 %673
        %v675 = vsel %vm596, %v590, 0.0
        %676 = vadd.xlane.f32.xlu0 %v675
        %v677 = vpop.xlane.xlu0 %676
        %v678 = vsel %vm596, %v591, 0.0
        %679 = vadd.xlane.f32.xlu0 %v678
        %v680 = vpop.xlane.xlu0 %679
        %v681 = vsel %vm596, %v592, 0.0
        %682 = vadd.xlane.f32.xlu0 %v681
        %v683 = vpop.xlane.xlu0 %682
        %v684 = vsel %vm596, %v593, 0.0
        %685 = vadd.xlane.f32.xlu0 %v684
        %v686 = vpop.xlane.xlu0 %685
        %v687 = vsel %vm596, %v594, 0.0
        %688 = vadd.xlane.f32.xlu0 %v687
        %v689 = vpop.xlane.xlu0 %688
        %v690 = vsel %vm596, %v595, 0.0
        %691 = vadd.xlane.f32.xlu0 %v690
        %v692 = vpop.xlane.xlu0 %691
        %v693 = vsub.f32 0.0, %v599
        %v694 = vsub.f32 0.0, %v602
        %v695 = vsub.f32 0.0, %v605
        %v696 = vsub.f32 0.0, %v608
        %v697 = vsub.f32 0.0, %v611
        %v698 = vsub.f32 0.0, %v614
        %v699 = vsub.f32 0.0, %v617
        %v700 = vsub.f32 0.0, %v620
        %v701 = vsub.f32 0.0, %v623
        %v702 = vsub.f32 0.0, %v626
        %v703 = vsub.f32 0.0, %v629
        %v704 = vsub.f32 0.0, %v632
        %v705 = vsub.f32 0.0, %v635
        %v706 = vsub.f32 0.0, %v638
        %v707 = vsub.f32 0.0, %v641
        %v708 = vsub.f32 0.0, %v644
        %v709 = vsub.f32 0.0, %v647
        %v710 = vsub.f32 0.0, %v650
        %v711 = vsub.f32 0.0, %v653
        %v712 = vsub.f32 0.0, %v656
        %v713 = vsub.f32 0.0, %v659
        %v714 = vsub.f32 0.0, %v662
        %v715 = vsub.f32 0.0, %v665
        %v716 = vsub.f32 0.0, %v668
        %v717 = vsub.f32 0.0, %v671
        %v718 = vsub.f32 0.0, %v674
        %v719 = vsub.f32 0.0, %v677
        %v720 = vsub.f32 0.0, %v680
        %v721 = vsub.f32 0.0, %v683
        %v722 = vsub.f32 0.0, %v686
        %v723 = vsub.f32 0.0, %v689
        %v724 = vsub.f32 0.0, %v692
        %v725 = vmul.f32 %v693, 1.442695
        %v726 = vpow.pop %v725
        %v727 = vmul.f32 %v694, 1.442695
        %v728 = vpow.pop %v727
        %v729 = vmul.f32 %v695, 1.442695
        %v730 = vpow.pop %v729
        %v731 = vmul.f32 %v696, 1.442695
        %v732 = vpow.pop %v731
        %v733 = vmul.f32 %v697, 1.442695
        %v734 = vpow.pop %v733
        %v735 = vmul.f32 %v698, 1.442695
        %v736 = vpow.pop %v735
        %v737 = vmul.f32 %v699, 1.442695
        %v738 = vpow.pop %v737
        %v739 = vmul.f32 %v700, 1.442695
        %v740 = vpow.pop %v739
        %v741 = vmul.f32 %v701, 1.442695
        %v742 = vpow.pop %v741
        %v743 = vmul.f32 %v702, 1.442695
        %v744 = vpow.pop %v743
        %v745 = vmul.f32 %v703, 1.442695
        %v746 = vpow.pop %v745
        %v747 = vmul.f32 %v704, 1.442695
        %v748 = vpow.pop %v747
        %v749 = vmul.f32 %v705, 1.442695
        %v750 = vpow.pop %v749
        %v751 = vmul.f32 %v706, 1.442695
        %v752 = vpow.pop %v751
        %v753 = vmul.f32 %v707, 1.442695
        %v754 = vpow.pop %v753
        %v755 = vmul.f32 %v708, 1.442695
        %v756 = vpow.pop %v755
        %v757 = vmul.f32 %v709, 1.442695
        %v758 = vpow.pop %v757
        %v759 = vmul.f32 %v710, 1.442695
        %v760 = vpow.pop %v759
        %v761 = vmul.f32 %v711, 1.442695
        %v762 = vpow.pop %v761
        %v763 = vmul.f32 %v712, 1.442695
        %v764 = vpow.pop %v763
        %v765 = vmul.f32 %v713, 1.442695
        %v766 = vpow.pop %v765
        %v767 = vmul.f32 %v714, 1.442695
        %v768 = vpow.pop %v767
        %v769 = vmul.f32 %v715, 1.442695
        %v770 = vpow.pop %v769
        %v771 = vmul.f32 %v716, 1.442695
        %v772 = vpow.pop %v771
        %v773 = vmul.f32 %v717, 1.442695
        %v774 = vpow.pop %v773
        %v775 = vmul.f32 %v718, 1.442695
        %v776 = vpow.pop %v775
        %v777 = vmul.f32 %v719, 1.442695
        %v778 = vpow.pop %v777
        %v779 = vmul.f32 %v720, 1.442695
        %v780 = vpow.pop %v779
        %v781 = vmul.f32 %v721, 1.442695
        %v782 = vpow.pop %v781
        %v783 = vmul.f32 %v722, 1.442695
        %v784 = vpow.pop %v783
        %v785 = vmul.f32 %v723, 1.442695
        %v786 = vpow.pop %v785
        %v787 = vmul.f32 %v724, 1.442695
        %v788 = vpow.pop %v787
        %v789 = vadd.f32 %v726, 1.0
        %v790 = vadd.f32 %v728, 1.0
        %v791 = vadd.f32 %v730, 1.0
        %v792 = vadd.f32 %v732, 1.0
        %v793 = vadd.f32 %v734, 1.0
        %v794 = vadd.f32 %v736, 1.0
        %v795 = vadd.f32 %v738, 1.0
        %v796 = vadd.f32 %v740, 1.0
        %v797 = vadd.f32 %v742, 1.0
        %v798 = vadd.f32 %v744, 1.0
        %v799 = vadd.f32 %v746, 1.0
        %v800 = vadd.f32 %v748, 1.0
        %v801 = vadd.f32 %v750, 1.0
        %v802 = vadd.f32 %v752, 1.0
        %v803 = vadd.f32 %v754, 1.0
        %v804 = vadd.f32 %v756, 1.0
        %v805 = vadd.f32 %v758, 1.0
        %v806 = vadd.f32 %v760, 1.0
        %v807 = vadd.f32 %v762, 1.0
        %v808 = vadd.f32 %v764, 1.0
        %v809 = vadd.f32 %v766, 1.0
        %v810 = vadd.f32 %v768, 1.0
        %v811 = vadd.f32 %v770, 1.0
        %v812 = vadd.f32 %v772, 1.0
        %v813 = vadd.f32 %v774, 1.0
        %v814 = vadd.f32 %v776, 1.0
        %v815 = vadd.f32 %v778, 1.0
        %v816 = vadd.f32 %v780, 1.0
        %v817 = vadd.f32 %v782, 1.0
        %v818 = vadd.f32 %v784, 1.0
        %v819 = vadd.f32 %v786, 1.0
        %v820 = vadd.f32 %v788, 1.0
        %v821 = vrcp.pop %v789
        %v822 = vmul.f32 1.0, %v821
        %v823 = vrcp.pop %v790
        %v824 = vmul.f32 1.0, %v823
        %v825 = vrcp.pop %v791
        %v826 = vmul.f32 1.0, %v825
        %v827 = vrcp.pop %v792
        %v828 = vmul.f32 1.0, %v827
        %v829 = vrcp.pop %v793
        %v830 = vmul.f32 1.0, %v829
        %v831 = vrcp.pop %v794
        %v832 = vmul.f32 1.0, %v831
        %v833 = vrcp.pop %v795
        %v834 = vmul.f32 1.0, %v833
        %v835 = vrcp.pop %v796
        %v836 = vmul.f32 1.0, %v835
        %v837 = vrcp.pop %v797
        %v838 = vmul.f32 1.0, %v837
        %v839 = vrcp.pop %v798
        %v840 = vmul.f32 1.0, %v839
        %v841 = vrcp.pop %v799
        %v842 = vmul.f32 1.0, %v841
        %v843 = vrcp.pop %v800
        %v844 = vmul.f32 1.0, %v843
        %v845 = vrcp.pop %v801
        %v846 = vmul.f32 1.0, %v845
        %v847 = vrcp.pop %v802
        %v848 = vmul.f32 1.0, %v847
        %v849 = vrcp.pop %v803
        %v850 = vmul.f32 1.0, %v849
        %v851 = vrcp.pop %v804
        %v852 = vmul.f32 1.0, %v851
        %v853 = vrcp.pop %v805
        %v854 = vmul.f32 1.0, %v853
        %v855 = vrcp.pop %v806
        %v856 = vmul.f32 1.0, %v855
        %v857 = vrcp.pop %v807
        %v858 = vmul.f32 1.0, %v857
        %v859 = vrcp.pop %v808
        %v860 = vmul.f32 1.0, %v859
        %v861 = vrcp.pop %v809
        %v862 = vmul.f32 1.0, %v861
        %v863 = vrcp.pop %v810
        %v864 = vmul.f32 1.0, %v863
        %v865 = vrcp.pop %v811
        %v866 = vmul.f32 1.0, %v865
        %v867 = vrcp.pop %v812
        %v868 = vmul.f32 1.0, %v867
        %v869 = vrcp.pop %v813
        %v870 = vmul.f32 1.0, %v869
        %v871 = vrcp.pop %v814
        %v872 = vmul.f32 1.0, %v871
        %v873 = vrcp.pop %v815
        %v874 = vmul.f32 1.0, %v873
        %v875 = vrcp.pop %v816
        %v876 = vmul.f32 1.0, %v875
        %v877 = vrcp.pop %v817
        %v878 = vmul.f32 1.0, %v877
        %v879 = vrcp.pop %v818
        %v880 = vmul.f32 1.0, %v879
        %v881 = vrcp.pop %v819
        %v882 = vmul.f32 1.0, %v881
        %v883 = vrcp.pop %v820
        %v884 = vmul.f32 1.0, %v883
        %v917 = vlaneseq
        %v918 = vand.u32 %v917, 127
        %v919 = vlaneseq
        %v920 = vshrl.u32 %v919, 7
        %v921 = vsub.s32 %v918, %v920
        %v922 = vrot.slane %v822, %v921
        %v923 = vadd.s32 %v918, 4294967288
        %v924 = vlaneseq
        %v925 = vshrl.u32 %v924, 7
        %v926 = vsub.s32 %v923, %v925
        %v927 = vrot.slane %v824, %v926
        %vm928 = vcmask 130112
        %v929 = vsel %vm928, %v927, %v922
        %v930 = vlaneseq
        %v931 = vshrl.u32 %v930, 7
        %v932 = vsub.s32 %v918, %v931
        %v933 = vrot.slane %v826, %v932
        %v934 = vlaneseq
        %v935 = vshrl.u32 %v934, 7
        %v936 = vsub.s32 %v923, %v935
        %v937 = vrot.slane %v828, %v936
        %v938 = vsel %vm928, %v937, %v933
        %v939 = vlaneseq
        %v940 = vshrl.u32 %v939, 7
        %v941 = vsub.s32 %v918, %v940
        %v942 = vrot.slane %v830, %v941
        %v943 = vlaneseq
        %v944 = vshrl.u32 %v943, 7
        %v945 = vsub.s32 %v923, %v944
        %v946 = vrot.slane %v832, %v945
        %v947 = vsel %vm928, %v946, %v942
        %v948 = vlaneseq
        %v949 = vshrl.u32 %v948, 7
        %v950 = vsub.s32 %v918, %v949
        %v951 = vrot.slane %v834, %v950
        %v952 = vlaneseq
        %v953 = vshrl.u32 %v952, 7
        %v954 = vsub.s32 %v923, %v953
        %v955 = vrot.slane %v836, %v954
        %v956 = vsel %vm928, %v955, %v951
        %v957 = vlaneseq
        %v958 = vshrl.u32 %v957, 7
        %v959 = vsub.s32 %v918, %v958
        %v960 = vrot.slane %v838, %v959
        %v961 = vlaneseq
        %v962 = vshrl.u32 %v961, 7
        %v963 = vsub.s32 %v923, %v962
        %v964 = vrot.slane %v840, %v963
        %v965 = vsel %vm928, %v964, %v960
        %v966 = vlaneseq
        %v967 = vshrl.u32 %v966, 7
        %v968 = vsub.s32 %v918, %v967
        %v969 = vrot.slane %v842, %v968
        %v970 = vlaneseq
        %v971 = vshrl.u32 %v970, 7
        %v972 = vsub.s32 %v923, %v971
        %v973 = vrot.slane %v844, %v972
        %v974 = vsel %vm928, %v973, %v969
        %v975 = vlaneseq
        %v976 = vshrl.u32 %v975, 7
        %v977 = vsub.s32 %v918, %v976
        %v978 = vrot.slane %v846, %v977
        %v979 = vlaneseq
        %v980 = vshrl.u32 %v979, 7
        %v981 = vsub.s32 %v923, %v980
        %v982 = vrot.slane %v848, %v981
        %v983 = vsel %vm928, %v982, %v978
        %v984 = vlaneseq
        %v985 = vshrl.u32 %v984, 7
        %v986 = vsub.s32 %v918, %v985
        %v987 = vrot.slane %v850, %v986
        %v988 = vlaneseq
        %v989 = vshrl.u32 %v988, 7
        %v990 = vsub.s32 %v923, %v989
        %v991 = vrot.slane %v852, %v990
        %v992 = vsel %vm928, %v991, %v987
        %v993 = vlaneseq
        %v994 = vshrl.u32 %v993, 7
        %v995 = vsub.s32 %v918, %v994
        %v996 = vrot.slane %v854, %v995
        %v997 = vlaneseq
        %v998 = vshrl.u32 %v997, 7
        %v999 = vsub.s32 %v923, %v998
        %v1000 = vrot.slane %v856, %v999
        %v1001 = vsel %vm928, %v1000, %v996
        %v1002 = vlaneseq
        %v1003 = vshrl.u32 %v1002, 7
        %v1004 = vsub.s32 %v918, %v1003
        %v1005 = vrot.slane %v858, %v1004
        %v1006 = vlaneseq
        %v1007 = vshrl.u32 %v1006, 7
        %v1008 = vsub.s32 %v923, %v1007
        %v1009 = vrot.slane %v860, %v1008
        %v1010 = vsel %vm928, %v1009, %v1005
        %v1011 = vlaneseq
        %v1012 = vshrl.u32 %v1011, 7
        %v1013 = vsub.s32 %v918, %v1012
        %v1014 = vrot.slane %v862, %v1013
        %v1015 = vlaneseq
        %v1016 = vshrl.u32 %v1015, 7
        %v1017 = vsub.s32 %v923, %v1016
        %v1018 = vrot.slane %v864, %v1017
        %v1019 = vsel %vm928, %v1018, %v1014
        %v1020 = vlaneseq
        %v1021 = vshrl.u32 %v1020, 7
        %v1022 = vsub.s32 %v918, %v1021
        %v1023 = vrot.slane %v866, %v1022
        %v1024 = vlaneseq
        %v1025 = vshrl.u32 %v1024, 7
        %v1026 = vsub.s32 %v923, %v1025
        %v1027 = vrot.slane %v868, %v1026
        %v1028 = vsel %vm928, %v1027, %v1023
        %v1029 = vlaneseq
        %v1030 = vshrl.u32 %v1029, 7
        %v1031 = vsub.s32 %v918, %v1030
        %v1032 = vrot.slane %v870, %v1031
        %v1033 = vlaneseq
        %v1034 = vshrl.u32 %v1033, 7
        %v1035 = vsub.s32 %v923, %v1034
        %v1036 = vrot.slane %v872, %v1035
        %v1037 = vsel %vm928, %v1036, %v1032
        %v1038 = vlaneseq
        %v1039 = vshrl.u32 %v1038, 7
        %v1040 = vsub.s32 %v918, %v1039
        %v1041 = vrot.slane %v874, %v1040
        %v1042 = vlaneseq
        %v1043 = vshrl.u32 %v1042, 7
        %v1044 = vsub.s32 %v923, %v1043
        %v1045 = vrot.slane %v876, %v1044
        %v1046 = vsel %vm928, %v1045, %v1041
        %v1047 = vlaneseq
        %v1048 = vshrl.u32 %v1047, 7
        %v1049 = vsub.s32 %v918, %v1048
        %v1050 = vrot.slane %v878, %v1049
        %v1051 = vlaneseq
        %v1052 = vshrl.u32 %v1051, 7
        %v1053 = vsub.s32 %v923, %v1052
        %v1054 = vrot.slane %v880, %v1053
        %v1055 = vsel %vm928, %v1054, %v1050
        %v1056 = vlaneseq
        %v1057 = vshrl.u32 %v1056, 7
        %v1058 = vsub.s32 %v918, %v1057
        %v1059 = vrot.slane %v882, %v1058
        %v1060 = vlaneseq
        %v1061 = vshrl.u32 %v1060, 7
        %v1062 = vsub.s32 %v923, %v1061
        %v1063 = vrot.slane %v884, %v1062
        %v1064 = vsel %vm928, %v1063, %v1059
        %vm1065 = vcmask 1041409
        %v1066 = vsel %vm1065, %v938, %v929
        %vm1067 = vcmask 1042434
        %v1068 = vsel %vm1067, %v947, %v1066
        %vm1069 = vcmask 1043459
        %v1070 = vsel %vm1069, %v956, %v1068
        %vm1071 = vcmask 1044484
        %v1072 = vsel %vm1071, %v965, %v1070
        %vm1073 = vcmask 1045509
        %v1074 = vsel %vm1073, %v974, %v1072
        %vm1075 = vcmask 1046534
        %v1076 = vsel %vm1075, %v983, %v1074
        %vm1077 = vcmask 1047559
        %v1078 = vsel %vm1077, %v992, %v1076
        %v1079 = vsel %vm1065, %v1010, %v1001
        %v1080 = vsel %vm1067, %v1019, %v1079
        %v1081 = vsel %vm1069, %v1028, %v1080
        %v1082 = vsel %vm1071, %v1037, %v1081
        %v1083 = vsel %vm1073, %v1046, %v1082
        %v1084 = vsel %vm1075, %v1055, %v1083
        %v1085 = vsel %vm1077, %v1064, %v1084
        %vm1088 = vcmask 130048
        %1089 = vst.msk [vmem:[%s203] sm:$0xff] %vm1088, %v1078
        %1090 = vst.msk [vmem:[%s203 + $0x8] sm:$0xff] %vm1088, %v1085
        %s1091 = sand.u32 %s114, 1
        %s1092 = scalar_lea.sflag [#allocation3], %s1091
        %s1093 = sand.u32 %s114, 1
        %s1094 = smul.addr %s1093, 16
        %s1095 = scalar_lea.vmem [#allocation2], %s1094
        // Predicated region
        $region33: #{model_forward.5} parent=31 // pred_check
          %p1096 = pneg %p124
        $region34: #{model_forward.5} parent=31 // pred_check_branch
          %1098 = sbr.rel (%p1096) target = $region36
        $region35: #{model_forward.5} parent=31 // pred_region
          %s1099 = smul.u32 2, %s22
          %s1101 = ssub.s32 256, 256
          %1102 = vsyncadd %s1092, %s1101
          %s1103 = smul.addr %s21, 2
          %s1104 = sadd.s32 %s1099, %s1103
          %s1105 = smul.addr %s1104, 128
          %s1106 = scalar_lea.hbm %s3, %s1105
          %s1107 = sshll.u32 %s1095, 4
          %s1108 = int_to_ptr.vmem [resolvable:$true] %s1107
          %1113 = dma.vmem_to_hbm [thread:$0]  %s1108, 256, %s1106, %s1092, 128, 128, 8
        $region36: #{model_forward.5} parent=31 // pred_fallthru
          _
      $region32: #{model_forward.5} parent=5 // pred_fallthru
        _
      %p1114 = scmp.le.s32.totalorder 2, %s12
      // Predicated region
      $region37: #{model_forward.5} parent=5 // pred_check
        %p1115 = pneg %p1114
      $region38: #{model_forward.5} parent=5 // pred_check_branch
        %1117 = sbr.rel (%p1115) target = $region40
      $region39: #{model_forward.5} parent=5 // pred_region
        %s1118 = ssub.s32 %s12, 2
        // Predicated region
        $region41: #{model_forward.5} parent=39 // pred_check
          %p1119 = pneg %p130
        $region42: #{model_forward.5} parent=39 // pred_check_branch
          %1121 = sbr.rel (%p1119) target = $region44
        $region43: #{model_forward.5} parent=39 // pred_region
          %s1122 = sand.u32 %s115, 1
          %s1123 = scalar_lea.sflag [#allocation3], %s1122
          %s1124 = sand.u32 %s115, 1
          %s1125 = smul.addr %s1124, 16
          %s1126 = scalar_lea.vmem [#allocation2], %s1125
          %1127 = dma.done %s1123, 256
        $region44: #{model_forward.5} parent=39 // pred_fallthru
          _
      $region40: #{model_forward.5} parent=5 // pred_fallthru
        _
    $region6: #{model_forward.5} parent=1 // loop_footer
      %s16 = sadd.s32 1, %s12
    $region7: #{model_forward.5} parent=1 // loop_footer_branch
      %11 = sbr.rel target = $region3
    $region8: #{model_forward.5} parent=1 // loop_exit
      _
    %1128 = vsyncpa [#allocation3], 1
    %s1129 = scalar_lea.sflag [#allocation3], 1
    %1130 = vsyncpa %s1129, 1

// kernel: model_forward.4
$region0: #{model_forward.4}
  #allocation0 [shape = 'u32[]', space=smem, size = 0x4, offset = 0x4, fixed_abs, tag = 'smem constant byte address 0x4 - core index']
  #allocation1 [shape = 'u32[144,128]{1,0:T(1,128)}', space=vmem, size = 0x12000, scoped, tag = 'internal scratch']
  #allocation2 [shape = 'f32[16,16,64]{2,1,0:T(8,128)}', space=vmem, size = 0x20000, scoped, tag = 'scratch operand']
  %s0 = inlined_call_operand.vmem [shape: f32[2,16,64], index: 0, kind: input, shape index: {}, may-alias: {0,1}]
  %s1 = inlined_call_operand.vmem [shape: f32[2,16,64], index: 1, kind: input, shape index: {}, may-alias: {0,1}]
  %s2 = inlined_call_operand.vmem [shape: f32[2,2,64], index: 2, kind: input, shape index: {}]
  %s3 = inlined_call_operand.vmem [shape: bf16[2,16,16,8], index: 3, kind: input, shape index: {}]
  %s4 = inlined_call_operand.vmem [shape: bf16[2,16,16,4], index: 4, kind: input, shape index: {}]
  %s5 = inlined_call_operand.vmem [shape: bf16[64,64], index: 5, kind: input, shape index: {}]
  %s6 = inlined_call_operand.vmem [shape: bf16[64,64], index: 6, kind: input, shape index: {}]
  %s7 = inlined_call_operand.vmem [shape: f32[1,64], index: 7, kind: input, shape index: {}]
  %s8 = inlined_call_operand.vmem [shape: bf16[64,64], index: 8, kind: input, shape index: {}]
  %s9 = inlined_call_operand.vmem [shape: bf16[8,64], index: 9, kind: input, shape index: {}]
  %s10 = inlined_call_operand.vmem [shape: bf16[4,64], index: 10, kind: input, shape index: {}]
  %s11 = inlined_call_operand.vmem [shape: bf16[2,16,16,64], index: 11, kind: output, shape index: {0}]
  %s12 = inlined_call_operand.vmem [shape: f32[2,1,2,64], index: 12, kind: output, shape index: {1}]
  %13 = xla_tuple %s11, %s12
  %s14 = sld [smem:[#allocation0]]
  $region89: #{model_forward.4} parent=0
    _
  %s16 = ssub.s32 1, %s14
  %s17 = scalar_select 0, %s16, %s14
  loop: start=0, step=1, limit=4
  $region2: #{model_forward.4} parent=0 // loop_pre_header
    _
  $region3: #{model_forward.4} parent=0 // loop_header
    %s19 = sphi 0, %s23
    %p20 = scmp.ge.s32.totalorder %s19, 4
    %s26 = sphi 0, %s38
    %s27 = sphi 0, %s34
    %s28 = sphi 0, %s26
    %s29 = sphi 0, %s27
    %s30 = sphi 0, %s28
    %s31 = sphi 0, %s29
    %s47 = sphi 0, %s49
    %s50 = sphi 0, %s47
    %s51 = sphi 0, %s50
    %s67 = sphi 0, %s51
    %s73 = sphi 0, %s75
    %s76 = sphi 0, %s73
    %s77 = sphi 0, %s76
    %s93 = sphi 0, %s77
    %s99 = sphi 0, %s101
    %s102 = sphi 0, %s99
    %s103 = sphi 0, %s102
    %s119 = sphi 0, %s103
    %s127 = sphi 0, %s129
    %s130 = sphi 0, %s127
    %s131 = sphi 0, %s130
    %s147 = sphi 0, %s131
    %s155 = sphi 0, %s157
    %s158 = sphi 0, %s155
    %s159 = sphi 0, %s158
    %s175 = sphi 0, %s159
    %s179 = sphi 0, %s179
    %s181 = sphi 0, %s179
    %s182 = sphi 0, %s181
    %s196 = sphi 0, %s182
    %s200 = sphi 0, %s200
    %s202 = sphi 0, %s200
    %s203 = sphi 0, %s202
    %s217 = sphi 0, %s203
    %s221 = sphi 0, %s221
    %s223 = sphi 0, %s221
    %s224 = sphi 0, %s223
    %s238 = sphi 0, %s224
    %s242 = sphi 0, %s242
    %s244 = sphi 0, %s242
    %s245 = sphi 0, %s244
    %s259 = sphi 0, %s245
    %s263 = sphi 0, %s263
    %s265 = sphi 0, %s263
    %s266 = sphi 0, %s265
    %s280 = sphi 0, %s266
    %s284 = sphi 0, %s284
    %s286 = sphi 0, %s284
    %s287 = sphi 0, %s286
    %s301 = sphi 0, %s287
    %s309 = sphi 0, %s311
    %s312 = sphi 0, %s309
    %s313 = sphi 0, %s312
    %s329 = sphi 0, %s313
    %s337 = sphi 0, %s339
    %s340 = sphi 0, %s337
    %s341 = sphi 0, %s340
    %s357 = sphi 0, %s341
  $region4: #{model_forward.4} parent=0 // loop_header_branch
    %22 = sbr.rel (%p20) target = $region8
  $region5: #{model_forward.4} parent=0 // loop_body
    %s24 = ssub.s32 %s19, 1
    %s25 = ssub.s32 %s19, 2
    %s32 = sadd.s32 1, %s27
    %p33 = scmp.ge.s32.totalorder %s32, 1
    %s34 = scalar_select %p33, 0, %s32
    %s35 = sadd.s32 1, %s26
    %s36 = scalar_select %p33, %s35, %s26
    %p37 = scmp.ge.s32.totalorder %s36, 2
    %s38 = scalar_select %p37, 0, %s36
    %p39 = scmp.lt.s32.totalorder %s27, 0
    %s40 = scalar_select %p39, %s27, 0
    %p41 = scmp.lt.s32.totalorder %s34, 0
    %s42 = scalar_select %p41, %s34, 0
    %s43 = ssub.s32 %s26, %s38
    %s44 = ssub.s32 %s40, %s42
    %s45 = sor.u32 %s43, %s44
    %p46 = scmp.eq.s32.totalorder %s45, 0
    %s48 = sadd.s32 %s47, 1
    %s49 = scalar_select %p46, %s47, %s48
    %p52 = pneg %p46
    %p53 = scmp.eq.s32.totalorder %s19, 1
    %p54 = por %p52, %p53
    %p55 = scmp.ne.s32.totalorder %s47, %s50
    %p56 = scmp.eq.s32.totalorder %s19, 0
    %p57 = por %p55, %p56
    %p58 = scmp.ne.s32.totalorder %s47, %s50
    %p59 = scmp.eq.s32.totalorder %s24, 1
    %p60 = por %p58, %p59
    %p61 = scmp.ne.s32.totalorder %s50, %s51
    %p62 = scmp.eq.s32.totalorder %s24, 0
    %p63 = por %p61, %p62
    %p64 = scmp.ne.s32.totalorder %s50, %s51
    %p65 = scmp.eq.s32.totalorder %s25, 1
    %p66 = por %p64, %p65
    %p68 = scmp.ne.s32.totalorder %s51, %s67
    %p69 = scmp.eq.s32.totalorder %s25, 0
    %p70 = por %p68, %p69
    %s71 = ssub.s32 %s26, %s38
    %p72 = scmp.eq.s32.totalorder %s71, 0
    %s74 = sadd.s32 %s73, 1
    %s75 = scalar_select %p72, %s73, %s74
    %p78 = pneg %p72
    %p79 = scmp.eq.s32.totalorder %s19, 1
    %p80 = por %p78, %p79
    %p81 = scmp.ne.s32.totalorder %s73, %s76
    %p82 = scmp.eq.s32.totalorder %s19, 0
    %p83 = por %p81, %p82
    %p84 = scmp.ne.s32.totalorder %s73, %s76
    %p85 = scmp.eq.s32.totalorder %s24, 1
    %p86 = por %p84, %p85
    %p87 = scmp.ne.s32.totalorder %s76, %s77
    %p88 = scmp.eq.s32.totalorder %s24, 0
    %p89 = por %p87, %p88
    %p90 = scmp.ne.s32.totalorder %s76, %s77
    %p91 = scmp.eq.s32.totalorder %s25, 1
    %p92 = por %p90, %p91
    %p94 = scmp.ne.s32.totalorder %s77, %s93
    %p95 = scmp.eq.s32.totalorder %s25, 0
    %p96 = por %p94, %p95
    %s97 = ssub.s32 %s26, %s38
    %p98 = scmp.eq.s32.totalorder %s97, 0
    %s100 = sadd.s32 %s99, 1
    %s101 = scalar_select %p98, %s99, %s100
    %p104 = pneg %p98
    %p105 = scmp.eq.s32.totalorder %s19, 1
    %p106 = por %p104, %p105
    %p107 = scmp.ne.s32.totalorder %s99, %s102
    %p108 = scmp.eq.s32.totalorder %s19, 0
    %p109 = por %p107, %p108
    %p110 = scmp.ne.s32.totalorder %s99, %s102
    %p111 = scmp.eq.s32.totalorder %s24, 1
    %p112 = por %p110, %p111
    %p113 = scmp.ne.s32.totalorder %s102, %s103
    %p114 = scmp.eq.s32.totalorder %s24, 0
    %p115 = por %p113, %p114
    %p116 = scmp.ne.s32.totalorder %s102, %s103
    %p117 = scmp.eq.s32.totalorder %s25, 1
    %p118 = por %p116, %p117
    %p120 = scmp.ne.s32.totalorder %s103, %s119
    %p121 = scmp.eq.s32.totalorder %s25, 0
    %p122 = por %p120, %p121
    %s123 = ssub.s32 %s26, %s38
    %s124 = ssub.s32 %s27, %s34
    %s125 = sor.u32 %s123, %s124
    %p126 = scmp.eq.s32.totalorder %s125, 0
    %s128 = sadd.s32 %s127, 1
    %s129 = scalar_select %p126, %s127, %s128
    %p132 = pneg %p126
    %p133 = scmp.eq.s32.totalorder %s19, 1
    %p134 = por %p132, %p133
    %p135 = scmp.ne.s32.totalorder %s127, %s130
    %p136 = scmp.eq.s32.totalorder %s19, 0
    %p137 = por %p135, %p136
    %p138 = scmp.ne.s32.totalorder %s127, %s130
    %p139 = scmp.eq.s32.totalorder %s24, 1
    %p140 = por %p138, %p139
    %p141 = scmp.ne.s32.totalorder %s130, %s131
    %p142 = scmp.eq.s32.totalorder %s24, 0
    %p143 = por %p141, %p142
    %p144 = scmp.ne.s32.totalorder %s130, %s131
    %p145 = scmp.eq.s32.totalorder %s25, 1
    %p146 = por %p144, %p145
    %p148 = scmp.ne.s32.totalorder %s131, %s147
    %p149 = scmp.eq.s32.totalorder %s25, 0
    %p150 = por %p148, %p149
    %s151 = ssub.s32 %s26, %s38
    %s152 = ssub.s32 %s27, %s34
    %s153 = sor.u32 %s151, %s152
    %p154 = scmp.eq.s32.totalorder %s153, 0
    %s156 = sadd.s32 %s155, 1
    %s157 = scalar_select %p154, %s155, %s156
    %p160 = pneg %p154
    %p161 = scmp.eq.s32.totalorder %s19, 1
    %p162 = por %p160, %p161
    %p163 = scmp.ne.s32.totalorder %s155, %s158
    %p164 = scmp.eq.s32.totalorder %s19, 0
    %p165 = por %p163, %p164
    %p166 = scmp.ne.s32.totalorder %s155, %s158
    %p167 = scmp.eq.s32.totalorder %s24, 1
    %p168 = por %p166, %p167
    %p169 = scmp.ne.s32.totalorder %s158, %s159
    %p170 = scmp.eq.s32.totalorder %s24, 0
    %p171 = por %p169, %p170
    %p172 = scmp.ne.s32.totalorder %s158, %s159
    %p173 = scmp.eq.s32.totalorder %s25, 1
    %p174 = por %p172, %p173
    %p176 = scmp.ne.s32.totalorder %s159, %s175
    %p177 = scmp.eq.s32.totalorder %s25, 0
    %p178 = por %p176, %p177
    %s180 = sadd.s32 %s179, 1
    %p183 = scmp.eq.s32.totalorder %s19, 1
    %p184 = scmp.ne.s32.totalorder %s179, %s181
    %p185 = scmp.eq.s32.totalorder %s19, 0
    %p186 = por %p184, %p185
    %p187 = scmp.ne.s32.totalorder %s179, %s181
    %p188 = scmp.eq.s32.totalorder %s24, 1
    %p189 = por %p187, %p188
    %p190 = scmp.ne.s32.totalorder %s181, %s182
    %p191 = scmp.eq.s32.totalorder %s24, 0
    %p192 = por %p190, %p191
    %p193 = scmp.ne.s32.totalorder %s181, %s182
    %p194 = scmp.eq.s32.totalorder %s25, 1
    %p195 = por %p193, %p194
    %p197 = scmp.ne.s32.totalorder %s182, %s196
    %p198 = scmp.eq.s32.totalorder %s25, 0
    %p199 = por %p197, %p198
    %s201 = sadd.s32 %s200, 1
    %p204 = scmp.eq.s32.totalorder %s19, 1
    %p205 = scmp.ne.s32.totalorder %s200, %s202
    %p206 = scmp.eq.s32.totalorder %s19, 0
    %p207 = por %p205, %p206
    %p208 = scmp.ne.s32.totalorder %s200, %s202
    %p209 = scmp.eq.s32.totalorder %s24, 1
    %p210 = por %p208, %p209
    %p211 = scmp.ne.s32.totalorder %s202, %s203
    %p212 = scmp.eq.s32.totalorder %s24, 0
    %p213 = por %p211, %p212
    %p214 = scmp.ne.s32.totalorder %s202, %s203
    %p215 = scmp.eq.s32.totalorder %s25, 1
    %p216 = por %p214, %p215
    %p218 = scmp.ne.s32.totalorder %s203, %s217
    %p219 = scmp.eq.s32.totalorder %s25, 0
    %p220 = por %p218, %p219
    %s222 = sadd.s32 %s221, 1
    %p225 = scmp.eq.s32.totalorder %s19, 1
    %p226 = scmp.ne.s32.totalorder %s221, %s223
    %p227 = scmp.eq.s32.totalorder %s19, 0
    %p228 = por %p226, %p227
    %p229 = scmp.ne.s32.totalorder %s221, %s223
    %p230 = scmp.eq.s32.totalorder %s24, 1
    %p231 = por %p229, %p230
    %p232 = scmp.ne.s32.totalorder %s223, %s224
    %p233 = scmp.eq.s32.totalorder %s24, 0
    %p234 = por %p232, %p233
    %p235 = scmp.ne.s32.totalorder %s223, %s224
    %p236 = scmp.eq.s32.totalorder %s25, 1
    %p237 = por %p235, %p236
    %p239 = scmp.ne.s32.totalorder %s224, %s238
    %p240 = scmp.eq.s32.totalorder %s25, 0
    %p241 = por %p239, %p240
    %s243 = sadd.s32 %s242, 1
    %p246 = scmp.eq.s32.totalorder %s19, 1
    %p247 = scmp.ne.s32.totalorder %s242, %s244
    %p248 = scmp.eq.s32.totalorder %s19, 0
    %p249 = por %p247, %p248
    %p250 = scmp.ne.s32.totalorder %s242, %s244
    %p251 = scmp.eq.s32.totalorder %s24, 1
    %p252 = por %p250, %p251
    %p253 = scmp.ne.s32.totalorder %s244, %s245
    %p254 = scmp.eq.s32.totalorder %s24, 0
    %p255 = por %p253, %p254
    %p256 = scmp.ne.s32.totalorder %s244, %s245
    %p257 = scmp.eq.s32.totalorder %s25, 1
    %p258 = por %p256, %p257
    %p260 = scmp.ne.s32.totalorder %s245, %s259
    %p261 = scmp.eq.s32.totalorder %s25, 0
    %p262 = por %p260, %p261
    %s264 = sadd.s32 %s263, 1
    %p267 = scmp.eq.s32.totalorder %s19, 1
    %p268 = scmp.ne.s32.totalorder %s263, %s265
    %p269 = scmp.eq.s32.totalorder %s19, 0
    %p270 = por %p268, %p269
    %p271 = scmp.ne.s32.totalorder %s263, %s265
    %p272 = scmp.eq.s32.totalorder %s24, 1
    %p273 = por %p271, %p272
    %p274 = scmp.ne.s32.totalorder %s265, %s266
    %p275 = scmp.eq.s32.totalorder %s24, 0
    %p276 = por %p274, %p275
    %p277 = scmp.ne.s32.totalorder %s265, %s266
    %p278 = scmp.eq.s32.totalorder %s25, 1
    %p279 = por %p277, %p278
    %p281 = scmp.ne.s32.totalorder %s266, %s280
    %p282 = scmp.eq.s32.totalorder %s25, 0
    %p283 = por %p281, %p282
    %s285 = sadd.s32 %s284, 1
    %p288 = scmp.eq.s32.totalorder %s19, 1
    %p289 = scmp.ne.s32.totalorder %s284, %s286
    %p290 = scmp.eq.s32.totalorder %s19, 0
    %p291 = por %p289, %p290
    %p292 = scmp.ne.s32.totalorder %s284, %s286
    %p293 = scmp.eq.s32.totalorder %s24, 1
    %p294 = por %p292, %p293
    %p295 = scmp.ne.s32.totalorder %s286, %s287
    %p296 = scmp.eq.s32.totalorder %s24, 0
    %p297 = por %p295, %p296
    %p298 = scmp.ne.s32.totalorder %s286, %s287
    %p299 = scmp.eq.s32.totalorder %s25, 1
    %p300 = por %p298, %p299
    %p302 = scmp.ne.s32.totalorder %s287, %s301
    %p303 = scmp.eq.s32.totalorder %s25, 0
    %p304 = por %p302, %p303
    %s305 = ssub.s32 %s26, %s38
    %s306 = ssub.s32 %s27, %s34
    %s307 = sor.u32 %s305, %s306
    %p308 = scmp.eq.s32.totalorder %s307, 0
    %s310 = sadd.s32 %s309, 1
    %s311 = scalar_select %p308, %s309, %s310
    %p314 = pneg %p308
    %p315 = scmp.eq.s32.totalorder %s19, 1
    %p316 = por %p314, %p315
    %p317 = scmp.ne.s32.totalorder %s309, %s312
    %p318 = scmp.eq.s32.totalorder %s19, 0
    %p319 = por %p317, %p318
    %p320 = scmp.ne.s32.totalorder %s309, %s312
    %p321 = scmp.eq.s32.totalorder %s24, 1
    %p322 = por %p320, %p321
    %p323 = scmp.ne.s32.totalorder %s312, %s313
    %p324 = scmp.eq.s32.totalorder %s24, 0
    %p325 = por %p323, %p324
    %p326 = scmp.ne.s32.totalorder %s312, %s313
    %p327 = scmp.eq.s32.totalorder %s25, 1
    %p328 = por %p326, %p327
    %p330 = scmp.ne.s32.totalorder %s313, %s329
    %p331 = scmp.eq.s32.totalorder %s25, 0
    %p332 = por %p330, %p331
    %s333 = ssub.s32 %s26, %s38
    %s334 = ssub.s32 %s27, %s34
    %s335 = sor.u32 %s333, %s334
    %p336 = scmp.eq.s32.totalorder %s335, 0
    %s338 = sadd.s32 %s337, 1
    %s339 = scalar_select %p336, %s337, %s338
    %p342 = pneg %p336
    %p343 = scmp.eq.s32.totalorder %s19, 1
    %p344 = por %p342, %p343
    %p345 = scmp.ne.s32.totalorder %s337, %s340
    %p346 = scmp.eq.s32.totalorder %s19, 0
    %p347 = por %p345, %p346
    %p348 = scmp.ne.s32.totalorder %s337, %s340
    %p349 = scmp.eq.s32.totalorder %s24, 1
    %p350 = por %p348, %p349
    %p351 = scmp.ne.s32.totalorder %s340, %s341
    %p352 = scmp.eq.s32.totalorder %s24, 0
    %p353 = por %p351, %p352
    %p354 = scmp.ne.s32.totalorder %s340, %s341
    %p355 = scmp.eq.s32.totalorder %s25, 1
    %p356 = por %p354, %p355
    %p358 = scmp.ne.s32.totalorder %s341, %s357
    %p359 = scmp.eq.s32.totalorder %s25, 0
    %p360 = por %p358, %p359
    %p361 = scmp.le.s32.totalorder 1, %s19
    %p362 = scmp.lt.s32.totalorder %s19, 3
    %p363 = pnand %p361, %p362
    %p364 = pneg %p363
    // Predicated region
    $region9: #{model_forward.4} parent=5 // pred_check
      _
    $region10: #{model_forward.4} parent=5 // pred_check_branch
      %366 = sbr.rel (%p363) target = $region12
    $region11: #{model_forward.4} parent=5 // pred_region
      %s367 = ssub.s32 %s19, 1
      // Predicated region
      $region13: #{model_forward.4} parent=11 // pred_check
        %p368 = pneg %p192
      $region14: #{model_forward.4} parent=11 // pred_check_branch
        %370 = sbr.rel (%p368) target = $region16
      $region15: #{model_forward.4} parent=11 // pred_region
        _
      $region16: #{model_forward.4} parent=11 // pred_fallthru
        _
      // Predicated region
      $region17: #{model_forward.4} parent=11 // pred_check
        %p371 = pneg %p213
      $region18: #{model_forward.4} parent=11 // pred_check_branch
        %373 = sbr.rel (%p371) target = $region20
      $region19: #{model_forward.4} parent=11 // pred_region
        _
      $region20: #{model_forward.4} parent=11 // pred_fallthru
        _
      // Predicated region
      $region21: #{model_forward.4} parent=11 // pred_check
        %p374 = pneg %p234
      $region22: #{model_forward.4} parent=11 // pred_check_branch
        %376 = sbr.rel (%p374) target = $region24
      $region23: #{model_forward.4} parent=11 // pred_region
        _
      $region24: #{model_forward.4} parent=11 // pred_fallthru
        _
      // Predicated region
      $region25: #{model_forward.4} parent=11 // pred_check
        %p377 = pneg %p255
      $region26: #{model_forward.4} parent=11 // pred_check_branch
        %379 = sbr.rel (%p377) target = $region28
      $region27: #{model_forward.4} parent=11 // pred_region
        _
      $region28: #{model_forward.4} parent=11 // pred_fallthru
        _
      // Predicated region
      $region29: #{model_forward.4} parent=11 // pred_check
        %p380 = pneg %p276
      $region30: #{model_forward.4} parent=11 // pred_check_branch
        %382 = sbr.rel (%p380) target = $region32
      $region31: #{model_forward.4} parent=11 // pred_region
        _
      $region32: #{model_forward.4} parent=11 // pred_fallthru
        _
      // Predicated region
      $region33: #{model_forward.4} parent=11 // pred_check
        %p383 = pneg %p297
      $region34: #{model_forward.4} parent=11 // pred_check_branch
        %385 = sbr.rel (%p383) target = $region36
      $region35: #{model_forward.4} parent=11 // pred_region
        _
      $region36: #{model_forward.4} parent=11 // pred_fallthru
        _
    $region12: #{model_forward.4} parent=5 // pred_fallthru
      _
    %p386 = scmp.lt.s32.totalorder %s19, 2
    // Predicated region
    $region37: #{model_forward.4} parent=5 // pred_check
      %p387 = pneg %p386
    $region38: #{model_forward.4} parent=5 // pred_check_branch
      %389 = sbr.rel (%p387) target = $region40
    $region39: #{model_forward.4} parent=5 // pred_region
      // Predicated region
      $region41: #{model_forward.4} parent=39 // pred_check
        %p390 = pneg %p57
      $region42: #{model_forward.4} parent=39 // pred_check_branch
        %392 = sbr.rel (%p390) target = $region44
      $region43: #{model_forward.4} parent=39 // pred_region
        %p393 = scmp.lt.s32.totalorder %s27, 0
        %s394 = scalar_select %p393, %s27, 0
        %s395 = smul.u32 2, %s394
        %p396 = scmp.lt.s32.totalorder %s26, 1
        %s397 = scalar_select %p396, %s26, 1
        %p398 = scmp.lt.s32.totalorder %s395, 1
        %s399 = scalar_select %p398, %s395, 1
        %s400 = smul.addr %s397, 2
        %s401 = sadd.s32 %s399, %s400
        %s402 = smul.addr %s401, 8
        %s403 = scalar_lea.vmem %s0, %s402
        %p404 = scmp.lt.s32.totalorder %s27, 0
        %s405 = scalar_select %p404, %s27, 0
        %s406 = smul.u32 2, %s405
      $region44: #{model_forward.4} parent=39 // pred_fallthru
        _
      // Predicated region
      $region45: #{model_forward.4} parent=39 // pred_check
        %p407 = pneg %p83
      $region46: #{model_forward.4} parent=39 // pred_check_branch
        %409 = sbr.rel (%p407) target = $region48
      $region47: #{model_forward.4} parent=39 // pred_region
        %p410 = scmp.lt.s32.totalorder %s26, 1
        %s411 = scalar_select %p410, %s26, 1
        %s412 = smul.addr %s411, 2
        %s413 = smul.addr %s412, 8
        %s414 = scalar_lea.vmem %s1, %s413
      $region48: #{model_forward.4} parent=39 // pred_fallthru
        _
      // Predicated region
      $region49: #{model_forward.4} parent=39 // pred_check
        %p415 = pneg %p109
      $region50: #{model_forward.4} parent=39 // pred_check_branch
        %417 = sbr.rel (%p415) target = $region52
      $region51: #{model_forward.4} parent=39 // pred_region
        %p418 = scmp.lt.s32.totalorder %s26, 1
        %s419 = scalar_select %p418, %s26, 1
        %s420 = smul.addr %s419, 2
        %s421 = scalar_lea.vmem %s2, %s420
      $region52: #{model_forward.4} parent=39 // pred_fallthru
        _
      // Predicated region
      $region53: #{model_forward.4} parent=39 // pred_check
        %p422 = pneg %p137
      $region54: #{model_forward.4} parent=39 // pred_check_branch
        %424 = sbr.rel (%p422) target = $region56
      $region55: #{model_forward.4} parent=39 // pred_region
        %s425 = smul.u32 16, %s27
        %p426 = scmp.lt.s32.totalorder %s26, 1
        %s427 = scalar_select %p426, %s26, 1
        %p428 = scmp.lt.s32.totalorder %s425, 15
        %s429 = scalar_select %p428, %s425, 15
        %s430 = smul.addr %s429, 2
        %s431 = smul.addr %s427, 32
        %s432 = sadd.s32 %s430, %s431
        %s433 = smul.addr %s432, 4
        %s434 = scalar_lea.vmem %s3, %s433
        %s435 = smul.u32 16, %s27
      $region56: #{model_forward.4} parent=39 // pred_fallthru
        _
      // Predicated region
      $region57: #{model_forward.4} parent=39 // pred_check
        %p436 = pneg %p165
      $region58: #{model_forward.4} parent=39 // pred_check_branch
        %438 = sbr.rel (%p436) target = $region60
      $region59: #{model_forward.4} parent=39 // pred_region
        %s439 = smul.u32 16, %s27
        %p440 = scmp.lt.s32.totalorder %s26, 1
        %s441 = scalar_select %p440, %s26, 1
        %p442 = scmp.lt.s32.totalorder %s439, 15
        %s443 = scalar_select %p442, %s439, 15
        %s444 = smul.addr %s443, 2
        %s445 = smul.addr %s441, 32
        %s446 = sadd.s32 %s444, %s445
        %s447 = smul.addr %s446, 4
        %s448 = scalar_lea.vmem %s4, %s447
        %s449 = smul.u32 16, %s27
      $region60: #{model_forward.4} parent=39 // pred_fallthru
        _
    $region40: #{model_forward.4} parent=5 // pred_fallthru
      _
    %p450 = scmp.le.s32.totalorder 1, %s19
    %p451 = scmp.lt.s32.totalorder %s19, 3
    %p452 = pnand %p450, %p451
    %p453 = pneg %p452
    // Predicated region
    $region61: #{model_forward.4} parent=5 // pred_check
      _
    $region62: #{model_forward.4} parent=5 // pred_check_branch
      %455 = sbr.rel (%p452) target = $region64
    $region63: #{model_forward.4} parent=5 // pred_region
      %s456 = ssub.s32 %s19, 1
      %p457 = scmp.lt.s32.totalorder %s29, 0
      %s458 = scalar_select %p457, %s29, 0
      %s459 = smul.u32 2, %s458
      %p460 = scmp.lt.s32.totalorder %s28, 1
      %s461 = scalar_select %p460, %s28, 1
      %p462 = scmp.lt.s32.totalorder %s459, 1
      %s463 = scalar_select %p462, %s459, 1
      %s464 = smul.addr %s461, 2
      %s465 = sadd.s32 %s463, %s464
      %s466 = smul.addr %s465, 8
      %s467 = scalar_lea.vmem %s0, %s466
      %p468 = pneg %p63
      %p469 = pneg %p60
      %p470 = scmp.lt.s32.totalorder %s28, 1
      %s471 = scalar_select %p470, %s28, 1
      %s472 = smul.addr %s471, 2
      %s473 = smul.addr %s472, 8
      %s474 = scalar_lea.vmem %s1, %s473
      %p475 = pneg %p89
      %p476 = pneg %p86
      %p477 = scmp.lt.s32.totalorder %s28, 1
      %s478 = scalar_select %p477, %s28, 1
      %s479 = smul.addr %s478, 2
      %s480 = scalar_lea.vmem %s2, %s479
      %p481 = pneg %p115
      %p482 = pneg %p112
      %s483 = smul.u32 16, %s29
      %p484 = scmp.lt.s32.totalorder %s28, 1
      %s485 = scalar_select %p484, %s28, 1
      %p486 = scmp.lt.s32.totalorder %s483, 15
      %s487 = scalar_select %p486, %s483, 15
      %s488 = smul.addr %s487, 2
      %s489 = smul.addr %s485, 32
      %s490 = sadd.s32 %s488, %s489
      %s491 = smul.addr %s490, 4
      %s492 = scalar_lea.vmem %s3, %s491
      %p493 = pneg %p143
      %p494 = pneg %p140
      %s495 = smul.u32 16, %s29
      %p496 = scmp.lt.s32.totalorder %s28, 1
      %s497 = scalar_select %p496, %s28, 1
      %p498 = scmp.lt.s32.totalorder %s495, 15
      %s499 = scalar_select %p498, %s495, 15
      %s500 = smul.addr %s499, 2
      %s501 = smul.addr %s497, 32
      %s502 = sadd.s32 %s500, %s501
      %s503 = smul.addr %s502, 4
      %s504 = scalar_lea.vmem %s4, %s503
      %p505 = pneg %p171
      %p506 = pneg %p168
      %p507 = pneg %p192
      %p508 = pneg %p189
      %p509 = pneg %p213
      %p510 = pneg %p210
      %p511 = pneg %p234
      %p512 = pneg %p231
      %p513 = pneg %p255
      %p514 = pneg %p252
      %p515 = pneg %p276
      %p516 = pneg %p273
      %p517 = pneg %p297
      %p518 = pneg %p294
      %p519 = pneg %p325
      %p520 = pneg %p322
      %s521 = smul.u32 16, %s29
      %p522 = scmp.lt.s32.totalorder %s28, 1
      %s523 = scalar_select %p522, %s28, 1
      %p524 = scmp.lt.s32.totalorder %s521, 15
      %s525 = scalar_select %p524, %s521, 15
      %s526 = smul.addr %s525, 2
      %s527 = smul.addr %s523, 32
      %s528 = sadd.s32 %s526, %s527
      %s529 = smul.addr %s528, 4
      %s530 = scalar_lea.vmem %s11, %s529
      %p531 = pneg %p353
      %p532 = pneg %p350
      %p533 = scmp.lt.s32.totalorder %s28, 1
      %s534 = scalar_select %p533, %s28, 1
      %p535 = scmp.lt.s32.totalorder %s29, 0
      %s536 = scalar_select %p535, %s29, 0
      %s537 = sadd.s32 %s536, %s534
      %s538 = smul.addr %s537, 2
      %s539 = scalar_lea.vmem %s12, %s538
      %p540 = scmp.lt.s32.totalorder %s29, 0
      %s541 = scalar_select %p540, %s29, 0
      %s542 = smul.u32 2, %s541
      %p543 = scmp.lt.s32.totalorder %s28, 1
      %s544 = scalar_select %p543, %s28, 1
      %p545 = scmp.lt.s32.totalorder %s542, 1
      %s546 = scalar_select %p545, %s542, 1
      %s547 = smul.addr %s544, 2
      %s548 = sadd.s32 %s546, %s547
      %s549 = smul.addr %s548, 8
      %s550 = scalar_lea.vmem %s0, %s549
      %p551 = scmp.lt.s32.totalorder %s29, 0
      %s552 = scalar_select %p551, %s29, 0
      %s553 = smul.u32 2, %s552
      %p554 = scmp.lt.s32.totalorder %s28, 1
      %s555 = scalar_select %p554, %s28, 1
      %s556 = smul.addr %s555, 2
      %s557 = smul.addr %s556, 8
      %s558 = scalar_lea.vmem %s1, %s557
      %p559 = scmp.lt.s32.totalorder %s28, 1
      %s560 = scalar_select %p559, %s28, 1
      %s561 = smul.addr %s560, 2
      %s562 = scalar_lea.vmem %s2, %s561
      %s563 = smul.u32 16, %s29
      %p564 = scmp.lt.s32.totalorder %s28, 1
      %s565 = scalar_select %p564, %s28, 1
      %p566 = scmp.lt.s32.totalorder %s563, 15
      %s567 = scalar_select %p566, %s563, 15
      %s568 = smul.addr %s567, 2
      %s569 = smul.addr %s565, 32
      %s570 = sadd.s32 %s568, %s569
      %s571 = smul.addr %s570, 4
      %s572 = scalar_lea.vmem %s3, %s571
      %s573 = smul.u32 16, %s29
      %s574 = smul.u32 16, %s29
      %p575 = scmp.lt.s32.totalorder %s28, 1
      %s576 = scalar_select %p575, %s28, 1
      %p577 = scmp.lt.s32.totalorder %s574, 15
      %s578 = scalar_select %p577, %s574, 15
      %s579 = smul.addr %s578, 2
      %s580 = smul.addr %s576, 32
      %s581 = sadd.s32 %s579, %s580
      %s582 = smul.addr %s581, 4
      %s583 = scalar_lea.vmem %s4, %s582
      %s584 = smul.u32 16, %s29
      %s585 = smul.u32 16, %s29
      %p586 = scmp.lt.s32.totalorder %s28, 1
      %s587 = scalar_select %p586, %s28, 1
      %p588 = scmp.lt.s32.totalorder %s585, 15
      %s589 = scalar_select %p588, %s585, 15
      %s590 = smul.addr %s589, 2
      %s591 = smul.addr %s587, 32
      %s592 = sadd.s32 %s590, %s591
      %s593 = smul.addr %s592, 4
      %s594 = scalar_lea.vmem %s11, %s593
      %s595 = smul.u32 16, %s29
      %p596 = scmp.lt.s32.totalorder %s28, 1
      %s597 = scalar_select %p596, %s28, 1
      %p598 = scmp.lt.s32.totalorder %s29, 0
      %s599 = scalar_select %p598, %s29, 0
      %s600 = sadd.s32 %s599, %s597
      %s601 = smul.addr %s600, 2
      %s602 = scalar_lea.vmem %s12, %s601
      %v604 = vld [vmem:[%s572] sm:$0xf]
      %v605 = vld [vmem:[%s572 + $0x4] sm:$0xf]
      %v606 = vld [vmem:[%s572 + $0x8] sm:$0xf]
      %v607 = vld [vmem:[%s572 + $0xc] sm:$0xf]
      %v608 = vld [vmem:[%s572 + $0x10] sm:$0xf]
      %v609 = vld [vmem:[%s572 + $0x14] sm:$0xf]
      %v610 = vld [vmem:[%s572 + $0x18] sm:$0xf]
      %v611 = vld [vmem:[%s572 + $0x1c] sm:$0xf]
      %v612 = vld [vmem:[%s572 + $0x20] sm:$0xf]
      %v613 = vld [vmem:[%s572 + $0x24] sm:$0xf]
      %v614 = vld [vmem:[%s572 + $0x28] sm:$0xf]
      %v615 = vld [vmem:[%s572 + $0x2c] sm:$0xf]
      %v616 = vld [vmem:[%s572 + $0x30] sm:$0xf]
      %v617 = vld [vmem:[%s572 + $0x34] sm:$0xf]
      %v618 = vld [vmem:[%s572 + $0x38] sm:$0xf]
      %v619 = vld [vmem:[%s572 + $0x3c] sm:$0xf]
      %v620 = vld [vmem:[%s572 + $0x40] sm:$0xf]
      %v621 = vld [vmem:[%s572 + $0x44] sm:$0xf]
      %v622 = vld [vmem:[%s572 + $0x48] sm:$0xf]
      %v623 = vld [vmem:[%s572 + $0x4c] sm:$0xf]
      %v624 = vld [vmem:[%s572 + $0x50] sm:$0xf]
      %v625 = vld [vmem:[%s572 + $0x54] sm:$0xf]
      %v626 = vld [vmem:[%s572 + $0x58] sm:$0xf]
      %v627 = vld [vmem:[%s572 + $0x5c] sm:$0xf]
      %v628 = vld [vmem:[%s572 + $0x60] sm:$0xf]
      %v629 = vld [vmem:[%s572 + $0x64] sm:$0xf]
      %v630 = vld [vmem:[%s572 + $0x68] sm:$0xf]
      %v631 = vld [vmem:[%s572 + $0x6c] sm:$0xf]
      %v632 = vld [vmem:[%s572 + $0x70] sm:$0xf]
      %v633 = vld [vmem:[%s572 + $0x74] sm:$0xf]
      %v634 = vld [vmem:[%s572 + $0x78] sm:$0xf]
      %v635 = vld [vmem:[%s572 + $0x7c] sm:$0xf]
      %v636 = vld [vmem:[%s9] sm:$0xf]
      %v637 = vld [vmem:[%s583] sm:$0xf]
      %v638 = vld [vmem:[%s583 + $0x4] sm:$0xf]
      %v639 = vld [vmem:[%s583 + $0x8] sm:$0xf]
      %v640 = vld [vmem:[%s583 + $0xc] sm:$0xf]
      %v641 = vld [vmem:[%s583 + $0x10] sm:$0xf]
      %v642 = vld [vmem:[%s583 + $0x14] sm:$0xf]
      %v643 = vld [vmem:[%s583 + $0x18] sm:$0xf]
      %v644 = vld [vmem:[%s583 + $0x1c] sm:$0xf]
      %v645 = vld [vmem:[%s583 + $0x20] sm:$0xf]
      %v646 = vld [vmem:[%s583 + $0x24] sm:$0xf]
      %v647 = vld [vmem:[%s583 + $0x28] sm:$0xf]
      %v648 = vld [vmem:[%s583 + $0x2c] sm:$0xf]
      %v649 = vld [vmem:[%s583 + $0x30] sm:$0xf]
      %v650 = vld [vmem:[%s583 + $0x34] sm:$0xf]
      %v651 = vld [vmem:[%s583 + $0x38] sm:$0xf]
      %v652 = vld [vmem:[%s583 + $0x3c] sm:$0xf]
      %v653 = vld [vmem:[%s583 + $0x40] sm:$0xf]
      %v654 = vld [vmem:[%s583 + $0x44] sm:$0xf]
      %v655 = vld [vmem:[%s583 + $0x48] sm:$0xf]
      %v656 = vld [vmem:[%s583 + $0x4c] sm:$0xf]
      %v657 = vld [vmem:[%s583 + $0x50] sm:$0xf]
      %v658 = vld [vmem:[%s583 + $0x54] sm:$0xf]
      %v659 = vld [vmem:[%s583 + $0x58] sm:$0xf]
      %v660 = vld [vmem:[%s583 + $0x5c] sm:$0xf]
      %v661 = vld [vmem:[%s583 + $0x60] sm:$0xf]
      %v662 = vld [vmem:[%s583 + $0x64] sm:$0xf]
      %v663 = vld [vmem:[%s583 + $0x68] sm:$0xf]
      %v664 = vld [vmem:[%s583 + $0x6c] sm:$0xf]
      %v665 = vld [vmem:[%s583 + $0x70] sm:$0xf]
      %v666 = vld [vmem:[%s583 + $0x74] sm:$0xf]
      %v667 = vld [vmem:[%s583 + $0x78] sm:$0xf]
      %v668 = vld [vmem:[%s583 + $0x7c] sm:$0xf]
      %v669 = vld [vmem:[%s10] sm:$0x3]
      %v702 = vunpack.c.l.b16 %v637
      %v703 = vunpack.c.l.b16 %v638
      %v704 = vunpack.c.l.b16 %v639
      %v705 = vunpack.c.l.b16 %v640
      %v706 = vunpack.c.l.b16 %v641
      %v707 = vunpack.c.l.b16 %v642
      %v708 = vunpack.c.l.b16 %v643
      %v709 = vunpack.c.l.b16 %v644
      %v710 = vunpack.c.l.b16 %v645
      %v711 = vunpack.c.l.b16 %v646
      %v712 = vunpack.c.l.b16 %v647
      %v713 = vunpack.c.l.b16 %v648
      %v714 = vunpack.c.l.b16 %v649
      %v715 = vunpack.c.l.b16 %v650
      %v716 = vunpack.c.l.b16 %v651
      %v717 = vunpack.c.l.b16 %v652
      %v718 = vunpack.c.l.b16 %v653
      %v719 = vunpack.c.l.b16 %v654
      %v720 = vunpack.c.l.b16 %v655
      %v721 = vunpack.c.l.b16 %v656
      %v722 = vunpack.c.l.b16 %v657
      %v723 = vunpack.c.l.b16 %v658
      %v724 = vunpack.c.l.b16 %v659
      %v725 = vunpack.c.l.b16 %v660
      %v726 = vunpack.c.l.b16 %v661
      %v727 = vunpack.c.l.b16 %v662
      %v728 = vunpack.c.l.b16 %v663
      %v729 = vunpack.c.l.b16 %v664
      %v730 = vunpack.c.l.b16 %v665
      %v731 = vunpack.c.l.b16 %v666
      %v732 = vunpack.c.l.b16 %v667
      %v733 = vunpack.c.l.b16 %v668
      %v734 = vpack.c.b16 %v703, %v702
      %v735 = vpack.c.b16 %v705, %v704
      %v736 = vpack.c.b16 %v707, %v706
      %v737 = vpack.c.b16 %v709, %v708
      %v738 = vpack.c.b16 %v711, %v710
      %v739 = vpack.c.b16 %v713, %v712
      %v740 = vpack.c.b16 %v715, %v714
      %v741 = vpack.c.b16 %v717, %v716
      %v742 = vpack.c.b16 %v719, %v718
      %v743 = vpack.c.b16 %v721, %v720
      %v744 = vpack.c.b16 %v723, %v722
      %v745 = vpack.c.b16 %v725, %v724
      %v746 = vpack.c.b16 %v727, %v726
      %v747 = vpack.c.b16 %v729, %v728
      %v748 = vpack.c.b16 %v731, %v730
      %v749 = vpack.c.b16 %v733, %v732
      %vm750 = vcmask 31744
      %v752 = vsel %vm750, %v734, 0
      %v755 = vsel %vm750, %v735, 0
      %v758 = vsel %vm750, %v736, 0
      %v761 = vsel %vm750, %v737, 0
      %v764 = vsel %vm750, %v738, 0
      %v767 = vsel %vm750, %v739, 0
      %v770 = vsel %vm750, %v740, 0
      %v773 = vsel %vm750, %v741, 0
      %v776 = vsel %vm750, %v742, 0
      %v779 = vsel %vm750, %v743, 0
      %v782 = vsel %vm750, %v744, 0
      %v785 = vsel %vm750, %v745, 0
      %v788 = vsel %vm750, %v746, 0
      %v791 = vsel %vm750, %v747, 0
      %v794 = vsel %vm750, %v748, 0
      %v797 = vsel %vm750, %v749, 0
      %vm799 = vcmask 1041408
      %v801 = vsel %vm799, %v669, 0
      %803 = vmatprep.subr.bf16.mxu0 0
      %804 = vmatpush1.bf16.msra.mxu0 %v801
      %805 = vmatprep.subr.bf16.mxu0 0
      %806 = vmatpush1.bf16.msra.mxu0 0
      %807 = vmatprep.subr.bf16.mxu0 0
      %808 = vmatpush1.bf16.msra.mxu0 0
      %809 = vmatprep.subr.bf16.mxu0 0
      %810 = vmatpush1.bf16.msra.mxu0 0
      %811 = vmatprep.subr.bf16.mxu0 0
      %812 = vmatpush1.bf16.msra.mxu0 0
      %813 = vmatprep.subr.bf16.mxu0 0
      %814 = vmatpush1.bf16.msra.mxu0 0
      %815 = vmatprep.subr.bf16.mxu0 0
      %816 = vmatpush1.bf16.msra.mxu0 0
      %817 = vmatprep.subr.bf16.mxu0 0
      %818 = vmatpush1.bf16.msra.mxu0 0
      %819 = vmatprep.subr.bf16.mxu0 0
      %820 = vmatpush1.bf16.msra.mxu0 0
      %821 = vmatprep.subr.bf16.mxu0 0
      %822 = vmatpush1.bf16.msra.mxu0 0
      %823 = vmatprep.subr.bf16.mxu0 0
      %824 = vmatpush1.bf16.msra.mxu0 0
      %825 = vmatprep.subr.bf16.mxu0 0
      %826 = vmatpush1.bf16.msra.mxu0 0
      %827 = vmatprep.subr.bf16.mxu0 0
      %828 = vmatpush1.bf16.msra.mxu0 0
      %829 = vmatprep.subr.bf16.mxu0 0
      %830 = vmatpush1.bf16.msra.mxu0 0
      %831 = vmatprep.subr.bf16.mxu0 0
      %832 = vmatpush1.bf16.msra.mxu0 0
      %833 = vmatprep.subr.bf16.mxu0 0
      %834 = vmatpush1.bf16.msra.mxu0 0
      %835 = vmatprep.mubr.bf16.mxu0 0
      %836 = vmatmul.mubr.bf16.gmra.mrb[0].mxu0 %v752
      %v837 = vpop.f32.mrb[0].mxu0
      %v838 = vadd.f32 0.0, %v837
      %v839 = vpop.f32.mrb[0].mxu0
      %v840 = vpop.f32.mrb[0].mxu0
      %v841 = vadd.f32 0.0, %v840
      %v842 = vpop.f32.mrb[0].mxu0
      %843 = vmatprep.mubr.bf16.mxu0 0
      %844 = vmatmul.mubr.bf16.gmra.mrb[0].mxu0 %v755
      %v845 = vpop.f32.mrb[0].mxu0
      %v846 = vadd.f32 0.0, %v845
      %v847 = vpop.f32.mrb[0].mxu0
      %v848 = vpop.f32.mrb[0].mxu0
      %v849 = vadd.f32 0.0, %v848
      %v850 = vpop.f32.mrb[0].mxu0
      %851 = vmatprep.mubr.bf16.mxu0 0
      %852 = vmatmul.mubr.bf16.gmra.mrb[0].mxu0 %v758
      %v853 = vpop.f32.mrb[0].mxu0
      %v854 = vadd.f32 0.0, %v853
      %v855 = vpop.f32.mrb[0].mxu0
      %v856 = vpop.f32.mrb[0].mxu0
      %v857 = vadd.f32 0.0, %v856
      %v858 = vpop.f32.mrb[0].mxu0
      %859 = vmatprep.mubr.bf16.mxu0 0
      %860 = vmatmul.mubr.bf16.gmra.mrb[0].mxu0 %v761
      %v861 = vpop.f32.mrb[0].mxu0
      %v862 = vadd.f32 0.0, %v861
      %v863 = vpop.f32.mrb[0].mxu0
      %v864 = vpop.f32.mrb[0].mxu0
      %v865 = vadd.f32 0.0, %v864
      %v866 = vpop.f32.mrb[0].mxu0
      %867 = vmatprep.mubr.bf16.mxu0 0
      %868 = vmatmul.mubr.bf16.gmra.mrb[0].mxu0 %v764
      %v869 = vpop.f32.mrb[0].mxu0
      %v870 = vadd.f32 0.0, %v869
      %v871 = vpop.f32.mrb[0].mxu0
      %v872 = vpop.f32.mrb[0].mxu0
      %v873 = vadd.f32 0.0, %v872
      %v874 = vpop.f32.mrb[0].mxu0
      %875 = vmatprep.mubr.bf16.mxu0 0
      %876 = vmatmul.mubr.bf16.gmra.mrb[0].mxu0 %v767
      %v877 = vpop.f32.mrb[0].mxu0
      %v878 = vadd.f32 0.0, %v877
      %v879 = vpop.f32.mrb[0].mxu0
      %v880 = vpop.f32.mrb[0].mxu0
      %v881 = vadd.f32 0.0, %v880
      %v882 = vpop.f32.mrb[0].mxu0
      %883 = vmatprep.mubr.bf16.mxu0 0
      %884 = vmatmul.mubr.bf16.gmra.mrb[0].mxu0 %v770
      %v885 = vpop.f32.mrb[0].mxu0
      %v886 = vadd.f32 0.0, %v885
      %v887 = vpop.f32.mrb[0].mxu0
      %v888 = vpop.f32.mrb[0].mxu0
      %v889 = vadd.f32 0.0, %v888
      %v890 = vpop.f32.mrb[0].mxu0
      %891 = vmatprep.mubr.bf16.mxu0 0
      %892 = vmatmul.mubr.bf16.gmra.mrb[0].mxu0 %v773
      %v893 = vpop.f32.mrb[0].mxu0
      %v894 = vadd.f32 0.0, %v893
      %v895 = vpop.f32.mrb[0].mxu0
      %v896 = vpop.f32.mrb[0].mxu0
      %v897 = vadd.f32 0.0, %v896
      %v898 = vpop.f32.mrb[0].mxu0
      %899 = vmatprep.mubr.bf16.mxu0 0
      %900 = vmatmul.mubr.bf16.gmra.mrb[0].mxu0 %v776
      %v901 = vpop.f32.mrb[0].mxu0
      %v902 = vadd.f32 0.0, %v901
      %v903 = vpop.f32.mrb[0].mxu0
      %v904 = vpop.f32.mrb[0].mxu0
      %v905 = vadd.f32 0.0, %v904
      %v906 = vpop.f32.mrb[0].mxu0
      %907 = vmatprep.mubr.bf16.mxu0 0
      %908 = vmatmul.mubr.bf16.gmra.mrb[0].mxu0 %v779
      %v909 = vpop.f32.mrb[0].mxu0
      %v910 = vadd.f32 0.0, %v909
      %v911 = vpop.f32.mrb[0].mxu0
      %v912 = vpop.f32.mrb[0].mxu0
      %v913 = vadd.f32 0.0, %v912
      %v914 = vpop.f32.mrb[0].mxu0
      %915 = vmatprep.mubr.bf16.mxu0 0
      %916 = vmatmul.mubr.bf16.gmra.mrb[0].mxu0 %v782
      %v917 = vpop.f32.mrb[0].mxu0
      %v918 = vadd.f32 0.0, %v917
      %v919 = vpop.f32.mrb[0].mxu0
      %v920 = vpop.f32.mrb[0].mxu0
      %v921 = vadd.f32 0.0, %v920
      %v922 = vpop.f32.mrb[0].mxu0
      %923 = vmatprep.mubr.bf16.mxu0 0
      %924 = vmatmul.mubr.bf16.gmra.mrb[0].mxu0 %v785
      %v925 = vpop.f32.mrb[0].mxu0
      %v926 = vadd.f32 0.0, %v925
      %v927 = vpop.f32.mrb[0].mxu0
      %v928 = vpop.f32.mrb[0].mxu0
      %v929 = vadd.f32 0.0, %v928
      %v930 = vpop.f32.mrb[0].mxu0
      %931 = vmatprep.mubr.bf16.mxu0 0
      %932 = vmatmul.mubr.bf16.gmra.mrb[0].mxu0 %v788
      %v933 = vpop.f32.mrb[0].mxu0
      %v934 = vadd.f32 0.0, %v933
      %v935 = vpop.f32.mrb[0].mxu0
      %v936 = vpop.f32.mrb[0].mxu0
      %v937 = vadd.f32 0.0, %v936
      %v938 = vpop.f32.mrb[0].mxu0
      %939 = vmatprep.mubr.bf16.mxu0 0
      %940 = vmatmul.mubr.bf16.gmra.mrb[0].mxu0 %v791
      %v941 = vpop.f32.mrb[0].mxu0
      %v942 = vadd.f32 0.0, %v941
      %v943 = vpop.f32.mrb[0].mxu0
      %v944 = vpop.f32.mrb[0].mxu0
      %v945 = vadd.f32 0.0, %v944
      %v946 = vpop.f32.mrb[0].mxu0
      %947 = vmatprep.mubr.bf16.mxu0 0
      %948 = vmatmul.mubr.bf16.gmra.mrb[0].mxu0 %v794
      %v949 = vpop.f32.mrb[0].mxu0
      %v950 = vadd.f32 0.0, %v949
      %v951 = vpop.f32.mrb[0].mxu0
      %v952 = vpop.f32.mrb[0].mxu0
      %v953 = vadd.f32 0.0, %v952
      %v954 = vpop.f32.mrb[0].mxu0
      %955 = vmatprep.mubr.bf16.mxu0 0
      %956 = vmatmul.mubr.bf16.gmra.mrb[0].mxu0 %v797
      %v957 = vpop.f32.mrb[0].mxu0
      %v958 = vadd.f32 0.0, %v957
      %v959 = vpop.f32.mrb[0].mxu0
      %v960 = vpop.f32.mrb[0].mxu0
      %v961 = vadd.f32 0.0, %v960
      %v962 = vpop.f32.mrb[0].mxu0
      %963 = vdwg.mxu0
      %v996 = vunpack.c.l.b16 %v604
      %v997 = vunpack.c.l.b16 %v605
      %v998 = vunpack.c.l.b16 %v606
      %v999 = vunpack.c.l.b16 %v607
      %v1000 = vunpack.c.l.b16 %v608
      %v1001 = vunpack.c.l.b16 %v609
      %v1002 = vunpack.c.l.b16 %v610
      %v1003 = vunpack.c.l.b16 %v611
      %v1004 = vunpack.c.l.b16 %v612
      %v1005 = vunpack.c.l.b16 %v613
      %v1006 = vunpack.c.l.b16 %v614
      %v1007 = vunpack.c.l.b16 %v615
      %v1008 = vunpack.c.l.b16 %v616
      %v1009 = vunpack.c.l.b16 %v617
      %v1010 = vunpack.c.l.b16 %v618
      %v1011 = vunpack.c.l.b16 %v619
      %v1012 = vunpack.c.l.b16 %v620
      %v1013 = vunpack.c.l.b16 %v621
      %v1014 = vunpack.c.l.b16 %v622
      %v1015 = vunpack.c.l.b16 %v623
      %v1016 = vunpack.c.l.b16 %v624
      %v1017 = vunpack.c.l.b16 %v625
      %v1018 = vunpack.c.l.b16 %v626
      %v1019 = vunpack.c.l.b16 %v627
      %v1020 = vunpack.c.l.b16 %v628
      %v1021 = vunpack.c.l.b16 %v629
      %v1022 = vunpack.c.l.b16 %v630
      %v1023 = vunpack.c.l.b16 %v631
      %v1024 = vunpack.c.l.b16 %v632
      %v1025 = vunpack.c.l.b16 %v633
      %v1026 = vunpack.c.l.b16 %v634
      %v1027 = vunpack.c.l.b16 %v635
      %v1028 = vpack.c.b16 %v997, %v996
      %v1029 = vpack.c.b16 %v999, %v998
      %v1030 = vpack.c.b16 %v1001, %v1000
      %v1031 = vpack.c.b16 %v1003, %v1002
      %v1032 = vpack.c.b16 %v1005, %v1004
      %v1033 = vpack.c.b16 %v1007, %v1006
      %v1034 = vpack.c.b16 %v1009, %v1008
      %v1035 = vpack.c.b16 %v1011, %v1010
      %v1036 = vpack.c.b16 %v1013, %v1012
      %v1037 = vpack.c.b16 %v1015, %v1014
      %v1038 = vpack.c.b16 %v1017, %v1016
      %v1039 = vpack.c.b16 %v1019, %v1018
      %v1040 = vpack.c.b16 %v1021, %v1020
      %v1041 = vpack.c.b16 %v1023, %v1022
      %v1042 = vpack.c.b16 %v1025, %v1024
      %v1043 = vpack.c.b16 %v1027, %v1026
      %vm1044 = vcmask 64512
      %v1046 = vsel %vm1044, %v1028, 0
      %v1049 = vsel %vm1044, %v1029, 0
      %v1052 = vsel %vm1044, %v1030, 0
      %v1055 = vsel %vm1044, %v1031, 0
      %v1058 = vsel %vm1044, %v1032, 0
      %v1061 = vsel %vm1044, %v1033, 0
      %v1064 = vsel %vm1044, %v1034, 0
      %v1067 = vsel %vm1044, %v1035, 0
      %v1070 = vsel %vm1044, %v1036, 0
      %v1073 = vsel %vm1044, %v1037, 0
      %v1076 = vsel %vm1044, %v1038, 0
      %v1079 = vsel %vm1044, %v1039, 0
      %v1082 = vsel %vm1044, %v1040, 0
      %v1085 = vsel %vm1044, %v1041, 0
      %v1088 = vsel %vm1044, %v1042, 0
      %v1091 = vsel %vm1044, %v1043, 0
      %vm1093 = vcmask 1043456
      %v1095 = vsel %vm1093, %v636, 0
      %1097 = vmatprep.subr.bf16.mxu0 0
      %1098 = vmatpush1.bf16.msra.mxu0 %v1095
      %1099 = vmatprep.subr.bf16.mxu0 0
      %1100 = vmatpush1.bf16.msra.mxu0 0
      %1101 = vmatprep.subr.bf16.mxu0 0
      %1102 = vmatpush1.bf16.msra.mxu0 0
      %1103 = vmatprep.subr.bf16.mxu0 0
      %1104 = vmatpush1.bf16.msra.mxu0 0
      %1105 = vmatprep.subr.bf16.mxu0 0
      %1106 = vmatpush1.bf16.msra.mxu0 0
      %1107 = vmatprep.subr.bf16.mxu0 0
      %1108 = vmatpush1.bf16.msra.mxu0 0
      %1109 = vmatprep.subr.bf16.mxu0 0
      %1110 = vmatpush1.bf16.msra.mxu0 0
      %1111 = vmatprep.subr.bf16.mxu0 0
      %1112 = vmatpush1.bf16.msra.mxu0 0
      %1113 = vmatprep.subr.bf16.mxu0 0
      %1114 = vmatpush1.bf16.msra.mxu0 0
      %1115 = vmatprep.subr.bf16.mxu0 0
      %1116 = vmatpush1.bf16.msra.mxu0 0
      %1117 = vmatprep.subr.bf16.mxu0 0
      %1118 = vmatpush1.bf16.msra.mxu0 0
      %1119 = vmatprep.subr.bf16.mxu0 0
      %1120 = vmatpush1.bf16.msra.mxu0 0
      %1121 = vmatprep.subr.bf16.mxu0 0
      %1122 = vmatpush1.bf16.msra.mxu0 0
      %1123 = vmatprep.subr.bf16.mxu0 0
      %1124 = vmatpush1.bf16.msra.mxu0 0
      %1125 = vmatprep.subr.bf16.mxu0 0
      %1126 = vmatpush1.bf16.msra.mxu0 0
      %1127 = vmatprep.subr.bf16.mxu0 0
      %1128 = vmatpush1.bf16.msra.mxu0 0
      %1129 = vmatprep.mubr.bf16.mxu0 0
      %1130 = vmatmul.mubr.bf16.gmra.mrb[0].mxu0 %v1046
      %v1131 = vpop.f32.mrb[0].mxu0
      %v1132 = vadd.f32 %v838, %v1131
      %v1133 = vpop.f32.mrb[0].mxu0
      %v1134 = vpop.f32.mrb[0].mxu0
      %v1135 = vadd.f32 %v841, %v1134
      %v1136 = vpop.f32.mrb[0].mxu0
      %1137 = vmatprep.mubr.bf16.mxu0 0
      %1138 = vmatmul.mubr.bf16.gmra.mrb[0].mxu0 %v1049
      %v1139 = vpop.f32.mrb[0].mxu0
      %v1140 = vadd.f32 %v846, %v1139
      %v1141 = vpop.f32.mrb[0].mxu0
      %v1142 = vpop.f32.mrb[0].mxu0
      %v1143 = vadd.f32 %v849, %v1142
      %v1144 = vpop.f32.mrb[0].mxu0
      %1145 = vmatprep.mubr.bf16.mxu0 0
      %1146 = vmatmul.mubr.bf16.gmra.mrb[0].mxu0 %v1052
      %v1147 = vpop.f32.mrb[0].mxu0
      %v1148 = vadd.f32 %v854, %v1147
      %v1149 = vpop.f32.mrb[0].mxu0
      %v1150 = vpop.f32.mrb[0].mxu0
      %v1151 = vadd.f32 %v857, %v1150
      %v1152 = vpop.f32.mrb[0].mxu0
      %1153 = vmatprep.mubr.bf16.mxu0 0
      %1154 = vmatmul.mubr.bf16.gmra.mrb[0].mxu0 %v1055
      %v1155 = vpop.f32.mrb[0].mxu0
      %v1156 = vadd.f32 %v862, %v1155
      %v1157 = vpop.f32.mrb[0].mxu0
      %v1158 = vpop.f32.mrb[0].mxu0
      %v1159 = vadd.f32 %v865, %v1158
      %v1160 = vpop.f32.mrb[0].mxu0
      %1161 = vmatprep.mubr.bf16.mxu0 0
      %1162 = vmatmul.mubr.bf16.gmra.mrb[0].mxu0 %v1058
      %v1163 = vpop.f32.mrb[0].mxu0
      %v1164 = vadd.f32 %v870, %v1163
      %v1165 = vpop.f32.mrb[0].mxu0
      %v1166 = vpop.f32.mrb[0].mxu0
      %v1167 = vadd.f32 %v873, %v1166
      %v1168 = vpop.f32.mrb[0].mxu0
      %1169 = vmatprep.mubr.bf16.mxu0 0
      %1170 = vmatmul.mubr.bf16.gmra.mrb[0].mxu0 %v1061
      %v1171 = vpop.f32.mrb[0].mxu0
      %v1172 = vadd.f32 %v878, %v1171
      %v1173 = vpop.f32.mrb[0].mxu0
      %v1174 = vpop.f32.mrb[0].mxu0
      %v1175 = vadd.f32 %v881, %v1174
      %v1176 = vpop.f32.mrb[0].mxu0
      %1177 = vmatprep.mubr.bf16.mxu0 0
      %1178 = vmatmul.mubr.bf16.gmra.mrb[0].mxu0 %v1064
      %v1179 = vpop.f32.mrb[0].mxu0
      %v1180 = vadd.f32 %v886, %v1179
      %v1181 = vpop.f32.mrb[0].mxu0
      %v1182 = vpop.f32.mrb[0].mxu0
      %v1183 = vadd.f32 %v889, %v1182
      %v1184 = vpop.f32.mrb[0].mxu0
      %1185 = vmatprep.mubr.bf16.mxu0 0
      %1186 = vmatmul.mubr.bf16.gmra.mrb[0].mxu0 %v1067
      %v1187 = vpop.f32.mrb[0].mxu0
      %v1188 = vadd.f32 %v894, %v1187
      %v1189 = vpop.f32.mrb[0].mxu0
      %v1190 = vpop.f32.mrb[0].mxu0
      %v1191 = vadd.f32 %v897, %v1190
      %v1192 = vpop.f32.mrb[0].mxu0
      %1193 = vmatprep.mubr.bf16.mxu0 0
      %1194 = vmatmul.mubr.bf16.gmra.mrb[0].mxu0 %v1070
      %v1195 = vpop.f32.mrb[0].mxu0
      %v1196 = vadd.f32 %v902, %v1195
      %v1197 = vpop.f32.mrb[0].mxu0
      %v1198 = vpop.f32.mrb[0].mxu0
      %v1199 = vadd.f32 %v905, %v1198
      %v1200 = vpop.f32.mrb[0].mxu0
      %1201 = vmatprep.mubr.bf16.mxu0 0
      %1202 = vmatmul.mubr.bf16.gmra.mrb[0].mxu0 %v1073
      %v1203 = vpop.f32.mrb[0].mxu0
      %v1204 = vadd.f32 %v910, %v1203
      %v1205 = vpop.f32.mrb[0].mxu0
      %v1206 = vpop.f32.mrb[0].mxu0
      %v1207 = vadd.f32 %v913, %v1206
      %v1208 = vpop.f32.mrb[0].mxu0
      %1209 = vmatprep.mubr.bf16.mxu0 0
      %1210 = vmatmul.mubr.bf16.gmra.mrb[0].mxu0 %v1076
      %v1211 = vpop.f32.mrb[0].mxu0
      %v1212 = vadd.f32 %v918, %v1211
      %v1213 = vpop.f32.mrb[0].mxu0
      %v1214 = vpop.f32.mrb[0].mxu0
      %v1215 = vadd.f32 %v921, %v1214
      %v1216 = vpop.f32.mrb[0].mxu0
      %1217 = vmatprep.mubr.bf16.mxu0 0
      %1218 = vmatmul.mubr.bf16.gmra.mrb[0].mxu0 %v1079
      %v1219 = vpop.f32.mrb[0].mxu0
      %v1220 = vadd.f32 %v926, %v1219
      %v1221 = vpop.f32.mrb[0].mxu0
      %v1222 = vpop.f32.mrb[0].mxu0
      %v1223 = vadd.f32 %v929, %v1222
      %v1224 = vpop.f32.mrb[0].mxu0
      %1225 = vmatprep.mubr.bf16.mxu0 0
      %1226 = vmatmul.mubr.bf16.gmra.mrb[0].mxu0 %v1082
      %v1227 = vpop.f32.mrb[0].mxu0
      %v1228 = vadd.f32 %v934, %v1227
      %v1229 = vpop.f32.mrb[0].mxu0
      %v1230 = vpop.f32.mrb[0].mxu0
      %v1231 = vadd.f32 %v937, %v1230
      %v1232 = vpop.f32.mrb[0].mxu0
      %1233 = vmatprep.mubr.bf16.mxu0 0
      %1234 = vmatmul.mubr.bf16.gmra.mrb[0].mxu0 %v1085
      %v1235 = vpop.f32.mrb[0].mxu0
      %v1236 = vadd.f32 %v942, %v1235
      %v1237 = vpop.f32.mrb[0].mxu0
      %v1238 = vpop.f32.mrb[0].mxu0
      %v1239 = vadd.f32 %v945, %v1238
      %v1240 = vpop.f32.mrb[0].mxu0
      %1241 = vmatprep.mubr.bf16.mxu0 0
      %1242 = vmatmul.mubr.bf16.gmra.mrb[0].mxu0 %v1088
      %v1243 = vpop.f32.mrb[0].mxu0
      %v1244 = vadd.f32 %v950, %v1243
      %v1245 = vpop.f32.mrb[0].mxu0
      %v1246 = vpop.f32.mrb[0].mxu0
      %v1247 = vadd.f32 %v953, %v1246
      %v1248 = vpop.f32.mrb[0].mxu0
      %1249 = vmatprep.mubr.bf16.mxu0 0
      %1250 = vmatmul.mubr.bf16.gmra.mrb[0].mxu0 %v1091
      %v1251 = vpop.f32.mrb[0].mxu0
      %v1252 = vadd.f32 %v958, %v1251
      %v1253 = vpop.f32.mrb[0].mxu0
      %v1254 = vpop.f32.mrb[0].mxu0
      %v1255 = vadd.f32 %v961, %v1254
      %v1256 = vpop.f32.mrb[0].mxu0
      %1257 = vdwg.mxu0
      %v1258 = vld [vmem:[%s562] sm:$0x1]
      %v1259 = vld [vmem:[%s562 + $0x1] sm:$0x1]
      %v1260 = vmul.f32 %v1258, 0.0069444445
      %v1261 = vmul.f32 %v1259, 0.0069444445
      %v1262 = vmul.f32 %v1260, %v1260
      %v1263 = vsub.f32 %v1261, %v1262
      %v1264 = vmax.f32 %v1263, 0.0
      %v1265 = vadd.f32 %v1264, 1e-05
      %v1266 = vrsqrt.pop %v1265
      %vm1267 = vcmask 523264
      %1268 = vst.msk [vmem:[#allocation2] sm:$0xff] %vm1267, %v1132
      %1269 = vst.msk [vmem:[#allocation2 + $0x8] sm:$0xff] %vm1267, %v1135
      %1270 = vst.msk [vmem:[#allocation2 + $0x10] sm:$0xff] %vm1267, %v1140
      %1271 = vst.msk [vmem:[#allocation2 + $0x18] sm:$0xff] %vm1267, %v1143
      %1272 = vst.msk [vmem:[#allocation2 + $0x20] sm:$0xff] %vm1267, %v1148
      %1273 = vst.msk [vmem:[#allocation2 + $0x28] sm:$0xff] %vm1267, %v1151
      %1274 = vst.msk [vmem:[#allocation2 + $0x30] sm:$0xff] %vm1267, %v1156
      %1275 = vst.msk [vmem:[#allocation2 + $0x38] sm:$0xff] %vm1267, %v1159
      %1276 = vst.msk [vmem:[#allocation2 + $0x40] sm:$0xff] %vm1267, %v1164
      %1277 = vst.msk [vmem:[#allocation2 + $0x48] sm:$0xff] %vm1267, %v1167
      %1278 = vst.msk [vmem:[#allocation2 + $0x50] sm:$0xff] %vm1267, %v1172
      %1279 = vst.msk [vmem:[#allocation2 + $0x58] sm:$0xff] %vm1267, %v1175
      %1280 = vst.msk [vmem:[#allocation2 + $0x60] sm:$0xff] %vm1267, %v1180
      %1281 = vst.msk [vmem:[#allocation2 + $0x68] sm:$0xff] %vm1267, %v1183
      %1282 = vst.msk [vmem:[#allocation2 + $0x70] sm:$0xff] %vm1267, %v1188
      %1283 = vst.msk [vmem:[#allocation2 + $0x78] sm:$0xff] %vm1267, %v1191
      %1284 = vst.msk [vmem:[#allocation2 + $0x80] sm:$0xff] %vm1267, %v1196
      %1285 = vst.msk [vmem:[#allocation2 + $0x88] sm:$0xff] %vm1267, %v1199
      %1286 = vst.msk [vmem:[#allocation2 + $0x90] sm:$0xff] %vm1267, %v1204
      %1287 = vst.msk [vmem:[#allocation2 + $0x98] sm:$0xff] %vm1267, %v1207
      %1288 = vst.msk [vmem:[#allocation2 + $0xa0] sm:$0xff] %vm1267, %v1212
      %1289 = vst.msk [vmem:[#allocation2 + $0xa8] sm:$0xff] %vm1267, %v1215
      %1290 = vst.msk [vmem:[#allocation2 + $0xb0] sm:$0xff] %vm1267, %v1220
      %1291 = vst.msk [vmem:[#allocation2 + $0xb8] sm:$0xff] %vm1267, %v1223
      %1292 = vst.msk [vmem:[#allocation2 + $0xc0] sm:$0xff] %vm1267, %v1228
      %1293 = vst.msk [vmem:[#allocation2 + $0xc8] sm:$0xff] %vm1267, %v1231
      %1294 = vst.msk [vmem:[#allocation2 + $0xd0] sm:$0xff] %vm1267, %v1236
      %1295 = vst.msk [vmem:[#allocation2 + $0xd8] sm:$0xff] %vm1267, %v1239
      %1296 = vst.msk [vmem:[#allocation2 + $0xe0] sm:$0xff] %vm1267, %v1244
      %1297 = vst.msk [vmem:[#allocation2 + $0xe8] sm:$0xff] %vm1267, %v1247
      %1298 = vst.msk [vmem:[#allocation2 + $0xf0] sm:$0xff] %vm1267, %v1252
      %1299 = vst.msk [vmem:[#allocation2 + $0xf8] sm:$0xff] %vm1267, %v1255
      %s1300 = smul.u32 %s29, 16
      %p1301 = scmp.lt.s32.totalorder %s1300, 12
      // Predicated region
      $region65: #{model_forward.4} parent=63 // pred_check
        %p1302 = pneg %p1301
      $region66: #{model_forward.4} parent=63 // pred_check_branch
        %1304 = sbr.rel (%p1302) target = $region68
      $region67: #{model_forward.4} parent=63 // pred_region
        %v1305 = vld [vmem:[#allocation2] sm:$0xff]
        %v1306 = vld [vmem:[#allocation2 + $0x8] sm:$0xf]
        %v1307 = vld [vmem:[#allocation2 + $0x10] sm:$0xff]
        %v1308 = vld [vmem:[#allocation2 + $0x18] sm:$0xf]
        %v1309 = vld [vmem:[#allocation2 + $0x20] sm:$0xff]
        %v1310 = vld [vmem:[#allocation2 + $0x28] sm:$0xf]
        %v1311 = vld [vmem:[#allocation2 + $0x30] sm:$0xff]
        %v1312 = vld [vmem:[#allocation2 + $0x38] sm:$0xf]
        %v1313 = vld [vmem:[#allocation2 + $0x40] sm:$0xff]
        %v1314 = vld [vmem:[#allocation2 + $0x48] sm:$0xf]
        %v1315 = vld [vmem:[#allocation2 + $0x50] sm:$0xff]
        %v1316 = vld [vmem:[#allocation2 + $0x58] sm:$0xf]
        %v1317 = vld [vmem:[#allocation2 + $0x60] sm:$0xff]
        %v1318 = vld [vmem:[#allocation2 + $0x68] sm:$0xf]
        %v1319 = vld [vmem:[#allocation2 + $0x70] sm:$0xff]
        %v1320 = vld [vmem:[#allocation2 + $0x78] sm:$0xf]
        %v1321 = vld [vmem:[#allocation2 + $0x80] sm:$0xff]
        %v1322 = vld [vmem:[#allocation2 + $0x88] sm:$0xf]
        %v1323 = vld [vmem:[#allocation2 + $0x90] sm:$0xff]
        %v1324 = vld [vmem:[#allocation2 + $0x98] sm:$0xf]
        %v1325 = vld [vmem:[#allocation2 + $0xa0] sm:$0xff]
        %v1326 = vld [vmem:[#allocation2 + $0xa8] sm:$0xf]
        %v1327 = vld [vmem:[#allocation2 + $0xb0] sm:$0xff]
        %v1328 = vld [vmem:[#allocation2 + $0xb8] sm:$0xf]
        %v1329 = vld [vmem:[#allocation2 + $0xc0] sm:$0xff]
        %v1330 = vld [vmem:[#allocation2 + $0xc8] sm:$0xf]
        %v1331 = vld [vmem:[#allocation2 + $0xd0] sm:$0xff]
        %v1332 = vld [vmem:[#allocation2 + $0xd8] sm:$0xf]
        %v1333 = vld [vmem:[#allocation2 + $0xe0] sm:$0xff]
        %v1334 = vld [vmem:[#allocation2 + $0xe8] sm:$0xf]
        %v1335 = vld [vmem:[#allocation2 + $0xf0] sm:$0xff]
        %v1336 = vld [vmem:[#allocation2 + $0xf8] sm:$0xf]
        %v1337 = vld [vmem:[%s550] sm:$0xff]
        %v1338 = vld [vmem:[%s550 + $0x8] sm:$0xff]
        %v1339 = vld [vmem:[%s558] sm:$0xff]
        %v1340 = vld [vmem:[%s558 + $0x8] sm:$0xff]
        %v1341 = vld [vmem:[%s5] sm:$0xf]
        %v1342 = vld [vmem:[%s5 + $0x4] sm:$0xf]
        %v1343 = vld [vmem:[%s5 + $0x8] sm:$0xf]
        %v1344 = vld [vmem:[%s5 + $0xc] sm:$0xf]
        %v1345 = vld [vmem:[%s5 + $0x10] sm:$0xf]
        %v1346 = vld [vmem:[%s5 + $0x14] sm:$0xf]
        %v1347 = vld [vmem:[%s5 + $0x18] sm:$0xf]
        %v1348 = vld [vmem:[%s5 + $0x1c] sm:$0xf]
        %v1349 = vld [vmem:[%s6] sm:$0xf]
        %v1350 = vld [vmem:[%s6 + $0x4] sm:$0xf]
        %v1351 = vld [vmem:[%s6 + $0x8] sm:$0xf]
        %v1352 = vld [vmem:[%s6 + $0xc] sm:$0xf]
        %v1353 = vld [vmem:[%s6 + $0x10] sm:$0xf]
        %v1354 = vld [vmem:[%s6 + $0x14] sm:$0xf]
        %v1355 = vld [vmem:[%s6 + $0x18] sm:$0xf]
        %v1356 = vld [vmem:[%s6 + $0x1c] sm:$0xf]
        %v1357 = vld [vmem:[%s7] sm:$0x1]
        %v1360 = vcombine.high %v1337, %v1337
        %v1362 = vunpack.c.l.s4 1966171168
        %v1363 = vunpack.c.0.s8 %v1362
        %v1364 = vlaneseq
        %v1365 = vshrl.u32 %v1364, 7
        %v1366 = vsub.s32 %v1363, %v1365
        %v1367 = vrot.slane %v1337, %v1366
        %v1369 = vunpack.c.l.s4 1966171168
        %v1370 = vunpack.c.0.s8 %v1369
        %v1371 = vlaneseq
        %v1372 = vshrl.u32 %v1371, 7
        %v1373 = vsub.s32 %v1370, %v1372
        %v1374 = vrot.slane %v1360, %v1373
        %v1375 = vcombine.high %v1367, %v1367
        %v1376 = vcombine.high %v1374, %v1374
        %v1378 = vunpack.c.l.s4 1966171168
        %v1379 = vunpack.c.0.s8 %v1378
        %v1380 = vlaneseq
        %v1381 = vshrl.u32 %v1380, 7
        %v1382 = vsub.s32 %v1379, %v1381
        %v1383 = vrot.slane %v1367, %v1382
        %v1385 = vunpack.c.l.s4 1966171168
        %v1386 = vunpack.c.0.s8 %v1385
        %v1387 = vlaneseq
        %v1388 = vshrl.u32 %v1387, 7
        %v1389 = vsub.s32 %v1386, %v1388
        %v1390 = vrot.slane %v1374, %v1389
        %v1392 = vunpack.c.l.s4 1966171168
        %v1393 = vunpack.c.0.s8 %v1392
        %v1394 = vlaneseq
        %v1395 = vshrl.u32 %v1394, 7
        %v1396 = vsub.s32 %v1393, %v1395
        %v1397 = vrot.slane %v1375, %v1396
        %v1399 = vunpack.c.l.s4 1966171168
        %v1400 = vunpack.c.0.s8 %v1399
        %v1401 = vlaneseq
        %v1402 = vshrl.u32 %v1401, 7
        %v1403 = vsub.s32 %v1400, %v1402
        %v1404 = vrot.slane %v1376, %v1403
        %v1405 = vcombine.high %v1383, %v1383
        %v1406 = vcombine.high %v1390, %v1390
        %v1407 = vcombine.high %v1397, %v1397
        %v1408 = vcombine.high %v1404, %v1404
        %v1409 = vcombine.high %v1338, %v1338
        %v1411 = vunpack.c.l.s4 1966171168
        %v1412 = vunpack.c.0.s8 %v1411
        %v1413 = vlaneseq
        %v1414 = vshrl.u32 %v1413, 7
        %v1415 = vsub.s32 %v1412, %v1414
        %v1416 = vrot.slane %v1338, %v1415
        %v1418 = vunpack.c.l.s4 1966171168
        %v1419 = vunpack.c.0.s8 %v1418
        %v1420 = vlaneseq
        %v1421 = vshrl.u32 %v1420, 7
        %v1422 = vsub.s32 %v1419, %v1421
        %v1423 = vrot.slane %v1409, %v1422
        %v1424 = vcombine.high %v1416, %v1416
        %v1425 = vcombine.high %v1423, %v1423
        %v1427 = vunpack.c.l.s4 1966171168
        %v1428 = vunpack.c.0.s8 %v1427
        %v1429 = vlaneseq
        %v1430 = vshrl.u32 %v1429, 7
        %v1431 = vsub.s32 %v1428, %v1430
        %v1432 = vrot.slane %v1416, %v1431
        %v1434 = vunpack.c.l.s4 1966171168
        %v1435 = vunpack.c.0.s8 %v1434
        %v1436 = vlaneseq
        %v1437 = vshrl.u32 %v1436, 7
        %v1438 = vsub.s32 %v1435, %v1437
        %v1439 = vrot.slane %v1423, %v1438
        %v1441 = vunpack.c.l.s4 1966171168
        %v1442 = vunpack.c.0.s8 %v1441
        %v1443 = vlaneseq
        %v1444 = vshrl.u32 %v1443, 7
        %v1445 = vsub.s32 %v1442, %v1444
        %v1446 = vrot.slane %v1424, %v1445
        %v1448 = vunpack.c.l.s4 1966171168
        %v1449 = vunpack.c.0.s8 %v1448
        %v1450 = vlaneseq
        %v1451 = vshrl.u32 %v1450, 7
        %v1452 = vsub.s32 %v1449, %v1451
        %v1453 = vrot.slane %v1425, %v1452
        %v1454 = vcombine.high %v1432, %v1432
        %v1455 = vcombine.high %v1439, %v1439
        %v1456 = vcombine.high %v1446, %v1446
        %v1457 = vcombine.high %v1453, %v1453
        %v1458 = vlaneseq
        %v1459 = vshrl.u32 %v1458, 7
        %v1460 = vsub.s32 0, %v1459
        %v1461 = vrot.slane %v1383, %v1460
        %v1462 = vlaneseq
        %v1463 = vshrl.u32 %v1462, 7
        %v1464 = vsub.s32 0, %v1463
        %v1465 = vrot.slane %v1397, %v1464
        %v1466 = vlaneseq
        %v1467 = vshrl.u32 %v1466, 7
        %v1468 = vsub.s32 0, %v1467
        %v1469 = vrot.slane %v1405, %v1468
        %v1470 = vlaneseq
        %v1471 = vshrl.u32 %v1470, 7
        %v1472 = vsub.s32 0, %v1471
        %v1473 = vrot.slane %v1407, %v1472
        %v1474 = vlaneseq
        %v1475 = vshrl.u32 %v1474, 7
        %v1476 = vsub.s32 0, %v1475
        %v1477 = vrot.slane %v1390, %v1476
        %v1478 = vlaneseq
        %v1479 = vshrl.u32 %v1478, 7
        %v1480 = vsub.s32 0, %v1479
        %v1481 = vrot.slane %v1404, %v1480
        %v1482 = vlaneseq
        %v1483 = vshrl.u32 %v1482, 7
        %v1484 = vsub.s32 0, %v1483
        %v1485 = vrot.slane %v1406, %v1484
        %v1486 = vlaneseq
        %v1487 = vshrl.u32 %v1486, 7
        %v1488 = vsub.s32 0, %v1487
        %v1489 = vrot.slane %v1408, %v1488
        %v1490 = vlaneseq
        %v1491 = vshrl.u32 %v1490, 7
        %v1492 = vsub.s32 0, %v1491
        %v1493 = vrot.slane %v1432, %v1492
        %v1494 = vlaneseq
        %v1495 = vshrl.u32 %v1494, 7
        %v1496 = vsub.s32 0, %v1495
        %v1497 = vrot.slane %v1446, %v1496
        %v1498 = vlaneseq
        %v1499 = vshrl.u32 %v1498, 7
        %v1500 = vsub.s32 0, %v1499
        %v1501 = vrot.slane %v1454, %v1500
        %v1502 = vlaneseq
        %v1503 = vshrl.u32 %v1502, 7
        %v1504 = vsub.s32 0, %v1503
        %v1505 = vrot.slane %v1456, %v1504
        %v1506 = vlaneseq
        %v1507 = vshrl.u32 %v1506, 7
        %v1508 = vsub.s32 0, %v1507
        %v1509 = vrot.slane %v1439, %v1508
        %v1510 = vlaneseq
        %v1511 = vshrl.u32 %v1510, 7
        %v1512 = vsub.s32 0, %v1511
        %v1513 = vrot.slane %v1453, %v1512
        %v1514 = vlaneseq
        %v1515 = vshrl.u32 %v1514, 7
        %v1516 = vsub.s32 0, %v1515
        %v1517 = vrot.slane %v1455, %v1516
        %v1518 = vlaneseq
        %v1519 = vshrl.u32 %v1518, 7
        %v1520 = vsub.s32 0, %v1519
        %v1521 = vrot.slane %v1457, %v1520
        %v1538 = vsub.f32 %v1461, %v1339
        %v1539 = vsub.f32 %v1461, %v1340
        %v1540 = vsub.f32 %v1465, %v1339
        %v1541 = vsub.f32 %v1465, %v1340
        %v1542 = vsub.f32 %v1469, %v1339
        %v1543 = vsub.f32 %v1469, %v1340
        %v1544 = vsub.f32 %v1473, %v1339
        %v1545 = vsub.f32 %v1473, %v1340
        %v1546 = vsub.f32 %v1477, %v1339
        %v1547 = vsub.f32 %v1477, %v1340
        %v1548 = vsub.f32 %v1481, %v1339
        %v1549 = vsub.f32 %v1481, %v1340
        %v1550 = vsub.f32 %v1485, %v1339
        %v1551 = vsub.f32 %v1485, %v1340
        %v1552 = vsub.f32 %v1489, %v1339
        %v1553 = vsub.f32 %v1489, %v1340
        %v1554 = vsub.f32 %v1493, %v1339
        %v1555 = vsub.f32 %v1493, %v1340
        %v1556 = vsub.f32 %v1497, %v1339
        %v1557 = vsub.f32 %v1497, %v1340
        %v1558 = vsub.f32 %v1501, %v1339
        %v1559 = vsub.f32 %v1501, %v1340
        %v1560 = vsub.f32 %v1505, %v1339
        %v1561 = vsub.f32 %v1505, %v1340
        %v1562 = vsub.f32 %v1509, %v1339
        %v1563 = vsub.f32 %v1509, %v1340
        %v1564 = vsub.f32 %v1513, %v1339
        %v1565 = vsub.f32 %v1513, %v1340
        %v1566 = vsub.f32 %v1517, %v1339
        %v1567 = vsub.f32 %v1517, %v1340
        %v1568 = vsub.f32 %v1521, %v1339
        %v1569 = vsub.f32 %v1521, %v1340
        %v1570 = vand.u32 2147483647, %v1538
        %v1571 = vand.u32 2147483647, %v1539
        %v1572 = vand.u32 2147483647, %v1540
        %v1573 = vand.u32 2147483647, %v1541
        %v1574 = vand.u32 2147483647, %v1542
        %v1575 = vand.u32 2147483647, %v1543
        %v1576 = vand.u32 2147483647, %v1544
        %v1577 = vand.u32 2147483647, %v1545
        %v1578 = vand.u32 2147483647, %v1546
        %v1579 = vand.u32 2147483647, %v1547
        %v1580 = vand.u32 2147483647, %v1548
        %v1581 = vand.u32 2147483647, %v1549
        %v1582 = vand.u32 2147483647, %v1550
        %v1583 = vand.u32 2147483647, %v1551
        %v1584 = vand.u32 2147483647, %v1552
        %v1585 = vand.u32 2147483647, %v1553
        %v1586 = vand.u32 2147483647, %v1554
        %v1587 = vand.u32 2147483647, %v1555
        %v1588 = vand.u32 2147483647, %v1556
        %v1589 = vand.u32 2147483647, %v1557
        %v1590 = vand.u32 2147483647, %v1558
        %v1591 = vand.u32 2147483647, %v1559
        %v1592 = vand.u32 2147483647, %v1560
        %v1593 = vand.u32 2147483647, %v1561
        %v1594 = vand.u32 2147483647, %v1562
        %v1595 = vand.u32 2147483647, %v1563
        %v1596 = vand.u32 2147483647, %v1564
        %v1597 = vand.u32 2147483647, %v1565
        %v1598 = vand.u32 2147483647, %v1566
        %v1599 = vand.u32 2147483647, %v1567
        %v1600 = vand.u32 2147483647, %v1568
        %v1601 = vand.u32 2147483647, %v1569
        %v1602 = vpack.c.bf16 %v1571, %v1570
        %v1603 = vpack.c.bf16 %v1573, %v1572
        %v1604 = vpack.c.bf16 %v1575, %v1574
        %v1605 = vpack.c.bf16 %v1577, %v1576
        %v1606 = vpack.c.bf16 %v1579, %v1578
        %v1607 = vpack.c.bf16 %v1581, %v1580
        %v1608 = vpack.c.bf16 %v1583, %v1582
        %v1609 = vpack.c.bf16 %v1585, %v1584
        %v1610 = vpack.c.bf16 %v1587, %v1586
        %v1611 = vpack.c.bf16 %v1589, %v1588
        %v1612 = vpack.c.bf16 %v1591, %v1590
        %v1613 = vpack.c.bf16 %v1593, %v1592
        %v1614 = vpack.c.bf16 %v1595, %v1594
        %v1615 = vpack.c.bf16 %v1597, %v1596
        %v1616 = vpack.c.bf16 %v1599, %v1598
        %v1617 = vpack.c.bf16 %v1601, %v1600
        %v1618 = vmul.f32 %v1461, %v1339
        %v1619 = vmul.f32 %v1461, %v1340
        %v1620 = vmul.f32 %v1465, %v1339
        %v1621 = vmul.f32 %v1465, %v1340
        %v1622 = vmul.f32 %v1469, %v1339
        %v1623 = vmul.f32 %v1469, %v1340
        %v1624 = vmul.f32 %v1473, %v1339
        %v1625 = vmul.f32 %v1473, %v1340
        %v1626 = vmul.f32 %v1477, %v1339
        %v1627 = vmul.f32 %v1477, %v1340
        %v1628 = vmul.f32 %v1481, %v1339
        %v1629 = vmul.f32 %v1481, %v1340
        %v1630 = vmul.f32 %v1485, %v1339
        %v1631 = vmul.f32 %v1485, %v1340
        %v1632 = vmul.f32 %v1489, %v1339
        %v1633 = vmul.f32 %v1489, %v1340
        %v1634 = vmul.f32 %v1493, %v1339
        %v1635 = vmul.f32 %v1493, %v1340
        %v1636 = vmul.f32 %v1497, %v1339
        %v1637 = vmul.f32 %v1497, %v1340
        %v1638 = vmul.f32 %v1501, %v1339
        %v1639 = vmul.f32 %v1501, %v1340
        %v1640 = vmul.f32 %v1505, %v1339
        %v1641 = vmul.f32 %v1505, %v1340
        %v1642 = vmul.f32 %v1509, %v1339
        %v1643 = vmul.f32 %v1509, %v1340
        %v1644 = vmul.f32 %v1513, %v1339
        %v1645 = vmul.f32 %v1513, %v1340
        %v1646 = vmul.f32 %v1517, %v1339
        %v1647 = vmul.f32 %v1517, %v1340
        %v1648 = vmul.f32 %v1521, %v1339
        %v1649 = vmul.f32 %v1521, %v1340
        %v1650 = vpack.c.bf16 %v1619, %v1618
        %v1651 = vpack.c.bf16 %v1621, %v1620
        %v1652 = vpack.c.bf16 %v1623, %v1622
        %v1653 = vpack.c.bf16 %v1625, %v1624
        %v1654 = vpack.c.bf16 %v1627, %v1626
        %v1655 = vpack.c.bf16 %v1629, %v1628
        %v1656 = vpack.c.bf16 %v1631, %v1630
        %v1657 = vpack.c.bf16 %v1633, %v1632
        %v1658 = vpack.c.bf16 %v1635, %v1634
        %v1659 = vpack.c.bf16 %v1637, %v1636
        %v1660 = vpack.c.bf16 %v1639, %v1638
        %v1661 = vpack.c.bf16 %v1641, %v1640
        %v1662 = vpack.c.bf16 %v1643, %v1642
        %v1663 = vpack.c.bf16 %v1645, %v1644
        %v1664 = vpack.c.bf16 %v1647, %v1646
        %v1665 = vpack.c.bf16 %v1649, %v1648
        %v1674 = vunpack.c.l.b16 %v1349
        %v1675 = vunpack.c.l.b16 %v1350
        %v1676 = vunpack.c.l.b16 %v1351
        %v1677 = vunpack.c.l.b16 %v1352
        %v1678 = vunpack.c.l.b16 %v1353
        %v1679 = vunpack.c.l.b16 %v1354
        %v1680 = vunpack.c.l.b16 %v1355
        %v1681 = vunpack.c.l.b16 %v1356
        %v1682 = vpack.c.b16 %v1675, %v1674
        %v1683 = vpack.c.b16 %v1677, %v1676
        %v1684 = vpack.c.b16 %v1679, %v1678
        %v1685 = vpack.c.b16 %v1681, %v1680
        %v1691 = vsel %vm1267, %v1650, 0
        %v1694 = vsel %vm1267, %v1651, 0
        %v1697 = vsel %vm1267, %v1652, 0
        %v1700 = vsel %vm1267, %v1653, 0
        %v1703 = vsel %vm1267, %v1654, 0
        %v1706 = vsel %vm1267, %v1655, 0
        %v1709 = vsel %vm1267, %v1656, 0
        %v1712 = vsel %vm1267, %v1657, 0
        %v1715 = vsel %vm1267, %v1658, 0
        %v1718 = vsel %vm1267, %v1659, 0
        %v1721 = vsel %vm1267, %v1660, 0
        %v1724 = vsel %vm1267, %v1661, 0
        %v1727 = vsel %vm1267, %v1662, 0
        %v1730 = vsel %vm1267, %v1663, 0
        %v1733 = vsel %vm1267, %v1664, 0
        %v1736 = vsel %vm1267, %v1665, 0
        %1738 = vmatprep.subr.bf16.mxu0 0
        %1739 = vmatpush1.bf16.msra.mxu0 %v1682
        %1740 = vmatprep.subr.bf16.mxu0 0
        %1741 = vmatpush1.bf16.msra.mxu0 %v1683
        %1742 = vmatprep.subr.bf16.mxu0 0
        %1743 = vmatpush1.bf16.msra.mxu0 %v1684
        %1744 = vmatprep.subr.bf16.mxu0 0
        %1745 = vmatpush1.bf16.msra.mxu0 %v1685
        %1746 = vmatprep.subr.bf16.mxu0 0
        %1747 = vmatpush1.bf16.msra.mxu0 0
        %1748 = vmatprep.subr.bf16.mxu0 0
        %1749 = vmatpush1.bf16.msra.mxu0 0
        %1750 = vmatprep.subr.bf16.mxu0 0
        %1751 = vmatpush1.bf16.msra.mxu0 0
        %1752 = vmatprep.subr.bf16.mxu0 0
        %1753 = vmatpush1.bf16.msra.mxu0 0
        %1754 = vmatprep.subr.bf16.mxu0 0
        %1755 = vmatpush1.bf16.msra.mxu0 0
        %1756 = vmatprep.subr.bf16.mxu0 0
        %1757 = vmatpush1.bf16.msra.mxu0 0
        %1758 = vmatprep.subr.bf16.mxu0 0
        %1759 = vmatpush1.bf16.msra.mxu0 0
        %1760 = vmatprep.subr.bf16.mxu0 0
        %1761 = vmatpush1.bf16.msra.mxu0 0
        %1762 = vmatprep.subr.bf16.mxu0 0
        %1763 = vmatpush1.bf16.msra.mxu0 0
        %1764 = vmatprep.subr.bf16.mxu0 0
        %1765 = vmatpush1.bf16.msra.mxu0 0
        %1766 = vmatprep.subr.bf16.mxu0 0
        %1767 = vmatpush1.bf16.msra.mxu0 0
        %1768 = vmatprep.subr.bf16.mxu0 0
        %1769 = vmatpush1.bf16.msra.mxu0 0
        %1770 = vmatprep.mubr.bf16.mxu0 0
        %1771 = vmatmul.mubr.bf16.gmra.mrb[0].mxu0 %v1691
        %v1772 = vpop.f32.mrb[0].mxu0
        %v1773 = vadd.f32 0.0, %v1772
        %v1774 = vpop.f32.mrb[0].mxu0
        %v1775 = vpop.f32.mrb[0].mxu0
        %v1776 = vadd.f32 0.0, %v1775
        %v1777 = vpop.f32.mrb[0].mxu0
        %1778 = vmatprep.mubr.bf16.mxu0 0
        %1779 = vmatmul.mubr.bf16.gmra.mrb[0].mxu0 %v1694
        %v1780 = vpop.f32.mrb[0].mxu0
        %v1781 = vadd.f32 0.0, %v1780
        %v1782 = vpop.f32.mrb[0].mxu0
        %v1783 = vpop.f32.mrb[0].mxu0
        %v1784 = vadd.f32 0.0, %v1783
        %v1785 = vpop.f32.mrb[0].mxu0
        %1786 = vmatprep.mubr.bf16.mxu0 0
        %1787 = vmatmul.mubr.bf16.gmra.mrb[0].mxu0 %v1697
        %v1788 = vpop.f32.mrb[0].mxu0
        %v1789 = vadd.f32 0.0, %v1788
        %v1790 = vpop.f32.mrb[0].mxu0
        %v1791 = vpop.f32.mrb[0].mxu0
        %v1792 = vadd.f32 0.0, %v1791
        %v1793 = vpop.f32.mrb[0].mxu0
        %1794 = vmatprep.mubr.bf16.mxu0 0
        %1795 = vmatmul.mubr.bf16.gmra.mrb[0].mxu0 %v1700
        %v1796 = vpop.f32.mrb[0].mxu0
        %v1797 = vadd.f32 0.0, %v1796
        %v1798 = vpop.f32.mrb[0].mxu0
        %v1799 = vpop.f32.mrb[0].mxu0
        %v1800 = vadd.f32 0.0, %v1799
        %v1801 = vpop.f32.mrb[0].mxu0
        %1802 = vmatprep.mubr.bf16.mxu0 0
        %1803 = vmatmul.mubr.bf16.gmra.mrb[0].mxu0 %v1703
        %v1804 = vpop.f32.mrb[0].mxu0
        %v1805 = vadd.f32 0.0, %v1804
        %v1806 = vpop.f32.mrb[0].mxu0
        %v1807 = vpop.f32.mrb[0].mxu0
        %v1808 = vadd.f32 0.0, %v1807
        %v1809 = vpop.f32.mrb[0].mxu0
        %1810 = vmatprep.mubr.bf16.mxu0 0
        %1811 = vmatmul.mubr.bf16.gmra.mrb[0].mxu0 %v1706
        %v1812 = vpop.f32.mrb[0].mxu0
        %v1813 = vadd.f32 0.0, %v1812
        %v1814 = vpop.f32.mrb[0].mxu0
        %v1815 = vpop.f32.mrb[0].mxu0
        %v1816 = vadd.f32 0.0, %v1815
        %v1817 = vpop.f32.mrb[0].mxu0
        %1818 = vmatprep.mubr.bf16.mxu0 0
        %1819 = vmatmul.mubr.bf16.gmra.mrb[0].mxu0 %v1709
        %v1820 = vpop.f32.mrb[0].mxu0
        %v1821 = vadd.f32 0.0, %v1820
        %v1822 = vpop.f32.mrb[0].mxu0
        %v1823 = vpop.f32.mrb[0].mxu0
        %v1824 = vadd.f32 0.0, %v1823
        %v1825 = vpop.f32.mrb[0].mxu0
        %1826 = vmatprep.mubr.bf16.mxu0 0
        %1827 = vmatmul.mubr.bf16.gmra.mrb[0].mxu0 %v1712
        %v1828 = vpop.f32.mrb[0].mxu0
        %v1829 = vadd.f32 0.0, %v1828
        %v1830 = vpop.f32.mrb[0].mxu0
        %v1831 = vpop.f32.mrb[0].mxu0
        %v1832 = vadd.f32 0.0, %v1831
        %v1833 = vpop.f32.mrb[0].mxu0
        %1834 = vmatprep.mubr.bf16.mxu0 0
        %1835 = vmatmul.mubr.bf16.gmra.mrb[0].mxu0 %v1715
        %v1836 = vpop.f32.mrb[0].mxu0
        %v1837 = vadd.f32 0.0, %v1836
        %v1838 = vpop.f32.mrb[0].mxu0
        %v1839 = vpop.f32.mrb[0].mxu0
        %v1840 = vadd.f32 0.0, %v1839
        %v1841 = vpop.f32.mrb[0].mxu0
        %1842 = vmatprep.mubr.bf16.mxu0 0
        %1843 = vmatmul.mubr.bf16.gmra.mrb[0].mxu0 %v1718
        %v1844 = vpop.f32.mrb[0].mxu0
        %v1845 = vadd.f32 0.0, %v1844
        %v1846 = vpop.f32.mrb[0].mxu0
        %v1847 = vpop.f32.mrb[0].mxu0
        %v1848 = vadd.f32 0.0, %v1847
        %v1849 = vpop.f32.mrb[0].mxu0
        %1850 = vmatprep.mubr.bf16.mxu0 0
        %1851 = vmatmul.mubr.bf16.gmra.mrb[0].mxu0 %v1721
        %v1852 = vpop.f32.mrb[0].mxu0
        %v1853 = vadd.f32 0.0, %v1852
        %v1854 = vpop.f32.mrb[0].mxu0
        %v1855 = vpop.f32.mrb[0].mxu0
        %v1856 = vadd.f32 0.0, %v1855
        %v1857 = vpop.f32.mrb[0].mxu0
        %1858 = vmatprep.mubr.bf16.mxu0 0
        %1859 = vmatmul.mubr.bf16.gmra.mrb[0].mxu0 %v1724
        %v1860 = vpop.f32.mrb[0].mxu0
        %v1861 = vadd.f32 0.0, %v1860
        %v1862 = vpop.f32.mrb[0].mxu0
        %v1863 = vpop.f32.mrb[0].mxu0
        %v1864 = vadd.f32 0.0, %v1863
        %v1865 = vpop.f32.mrb[0].mxu0
        %1866 = vmatprep.mubr.bf16.mxu0 0
        %1867 = vmatmul.mubr.bf16.gmra.mrb[0].mxu0 %v1727
        %v1868 = vpop.f32.mrb[0].mxu0
        %v1869 = vadd.f32 0.0, %v1868
        %v1870 = vpop.f32.mrb[0].mxu0
        %v1871 = vpop.f32.mrb[0].mxu0
        %v1872 = vadd.f32 0.0, %v1871
        %v1873 = vpop.f32.mrb[0].mxu0
        %1874 = vmatprep.mubr.bf16.mxu0 0
        %1875 = vmatmul.mubr.bf16.gmra.mrb[0].mxu0 %v1730
        %v1876 = vpop.f32.mrb[0].mxu0
        %v1877 = vadd.f32 0.0, %v1876
        %v1878 = vpop.f32.mrb[0].mxu0
        %v1879 = vpop.f32.mrb[0].mxu0
        %v1880 = vadd.f32 0.0, %v1879
        %v1881 = vpop.f32.mrb[0].mxu0
        %1882 = vmatprep.mubr.bf16.mxu0 0
        %1883 = vmatmul.mubr.bf16.gmra.mrb[0].mxu0 %v1733
        %v1884 = vpop.f32.mrb[0].mxu0
        %v1885 = vadd.f32 0.0, %v1884
        %v1886 = vpop.f32.mrb[0].mxu0
        %v1887 = vpop.f32.mrb[0].mxu0
        %v1888 = vadd.f32 0.0, %v1887
        %v1889 = vpop.f32.mrb[0].mxu0
        %1890 = vmatprep.mubr.bf16.mxu0 0
        %1891 = vmatmul.mubr.bf16.gmra.mrb[0].mxu0 %v1736
        %v1892 = vpop.f32.mrb[0].mxu0
        %v1893 = vadd.f32 0.0, %v1892
        %v1894 = vpop.f32.mrb[0].mxu0
        %v1895 = vpop.f32.mrb[0].mxu0
        %v1896 = vadd.f32 0.0, %v1895
        %v1897 = vpop.f32.mrb[0].mxu0
        %1898 = vdwg.mxu0
        %v1907 = vunpack.c.l.b16 %v1341
        %v1908 = vunpack.c.l.b16 %v1342
        %v1909 = vunpack.c.l.b16 %v1343
        %v1910 = vunpack.c.l.b16 %v1344
        %v1911 = vunpack.c.l.b16 %v1345
        %v1912 = vunpack.c.l.b16 %v1346
        %v1913 = vunpack.c.l.b16 %v1347
        %v1914 = vunpack.c.l.b16 %v1348
        %v1915 = vpack.c.b16 %v1908, %v1907
        %v1916 = vpack.c.b16 %v1910, %v1909
        %v1917 = vpack.c.b16 %v1912, %v1911
        %v1918 = vpack.c.b16 %v1914, %v1913
        %v1924 = vsel %vm1267, %v1602, 0
        %v1927 = vsel %vm1267, %v1603, 0
        %v1930 = vsel %vm1267, %v1604, 0
        %v1933 = vsel %vm1267, %v1605, 0
        %v1936 = vsel %vm1267, %v1606, 0
        %v1939 = vsel %vm1267, %v1607, 0
        %v1942 = vsel %vm1267, %v1608, 0
        %v1945 = vsel %vm1267, %v1609, 0
        %v1948 = vsel %vm1267, %v1610, 0
        %v1951 = vsel %vm1267, %v1611, 0
        %v1954 = vsel %vm1267, %v1612, 0
        %v1957 = vsel %vm1267, %v1613, 0
        %v1960 = vsel %vm1267, %v1614, 0
        %v1963 = vsel %vm1267, %v1615, 0
        %v1966 = vsel %vm1267, %v1616, 0
        %v1969 = vsel %vm1267, %v1617, 0
        %1971 = vmatprep.subr.bf16.mxu0 0
        %1972 = vmatpush1.bf16.msra.mxu0 %v1915
        %1973 = vmatprep.subr.bf16.mxu0 0
        %1974 = vmatpush1.bf16.msra.mxu0 %v1916
        %1975 = vmatprep.subr.bf16.mxu0 0
        %1976 = vmatpush1.bf16.msra.mxu0 %v1917
        %1977 = vmatprep.subr.bf16.mxu0 0
        %1978 = vmatpush1.bf16.msra.mxu0 %v1918
        %1979 = vmatprep.subr.bf16.mxu0 0
        %1980 = vmatpush1.bf16.msra.mxu0 0
        %1981 = vmatprep.subr.bf16.mxu0 0
        %1982 = vmatpush1.bf16.msra.mxu0 0
        %1983 = vmatprep.subr.bf16.mxu0 0
        %1984 = vmatpush1.bf16.msra.mxu0 0
        %1985 = vmatprep.subr.bf16.mxu0 0
        %1986 = vmatpush1.bf16.msra.mxu0 0
        %1987 = vmatprep.subr.bf16.mxu0 0
        %1988 = vmatpush1.bf16.msra.mxu0 0
        %1989 = vmatprep.subr.bf16.mxu0 0
        %1990 = vmatpush1.bf16.msra.mxu0 0
        %1991 = vmatprep.subr.bf16.mxu0 0
        %1992 = vmatpush1.bf16.msra.mxu0 0
        %1993 = vmatprep.subr.bf16.mxu0 0
        %1994 = vmatpush1.bf16.msra.mxu0 0
        %1995 = vmatprep.subr.bf16.mxu0 0
        %1996 = vmatpush1.bf16.msra.mxu0 0
        %1997 = vmatprep.subr.bf16.mxu0 0
        %1998 = vmatpush1.bf16.msra.mxu0 0
        %1999 = vmatprep.subr.bf16.mxu0 0
        %2000 = vmatpush1.bf16.msra.mxu0 0
        %2001 = vmatprep.subr.bf16.mxu0 0
        %2002 = vmatpush1.bf16.msra.mxu0 0
        %2003 = vmatprep.mubr.bf16.mxu0 0
        %2004 = vmatmul.mubr.bf16.gmra.mrb[0].mxu0 %v1924
        %v2005 = vpop.f32.mrb[0].mxu0
        %v2006 = vadd.f32 %v1773, %v2005
        %v2007 = vpop.f32.mrb[0].mxu0
        %v2008 = vpop.f32.mrb[0].mxu0
        %v2009 = vadd.f32 %v1776, %v2008
        %v2010 = vpop.f32.mrb[0].mxu0
        %2011 = vmatprep.mubr.bf16.mxu0 0
        %2012 = vmatmul.mubr.bf16.gmra.mrb[0].mxu0 %v1927
        %v2013 = vpop.f32.mrb[0].mxu0
        %v2014 = vadd.f32 %v1781, %v2013
        %v2015 = vpop.f32.mrb[0].mxu0
        %v2016 = vpop.f32.mrb[0].mxu0
        %v2017 = vadd.f32 %v1784, %v2016
        %v2018 = vpop.f32.mrb[0].mxu0
        %2019 = vmatprep.mubr.bf16.mxu0 0
        %2020 = vmatmul.mubr.bf16.gmra.mrb[0].mxu0 %v1930
        %v2021 = vpop.f32.mrb[0].mxu0
        %v2022 = vadd.f32 %v1789, %v2021
        %v2023 = vpop.f32.mrb[0].mxu0
        %v2024 = vpop.f32.mrb[0].mxu0
        %v2025 = vadd.f32 %v1792, %v2024
        %v2026 = vpop.f32.mrb[0].mxu0
        %2027 = vmatprep.mubr.bf16.mxu0 0
        %2028 = vmatmul.mubr.bf16.gmra.mrb[0].mxu0 %v1933
        %v2029 = vpop.f32.mrb[0].mxu0
        %v2030 = vadd.f32 %v1797, %v2029
        %v2031 = vpop.f32.mrb[0].mxu0
        %v2032 = vpop.f32.mrb[0].mxu0
        %v2033 = vadd.f32 %v1800, %v2032
        %v2034 = vpop.f32.mrb[0].mxu0
        %2035 = vmatprep.mubr.bf16.mxu0 0
        %2036 = vmatmul.mubr.bf16.gmra.mrb[0].mxu0 %v1936
        %v2037 = vpop.f32.mrb[0].mxu0
        %v2038 = vadd.f32 %v1805, %v2037
        %v2039 = vpop.f32.mrb[0].mxu0
        %v2040 = vpop.f32.mrb[0].mxu0
        %v2041 = vadd.f32 %v1808, %v2040
        %v2042 = vpop.f32.mrb[0].mxu0
        %2043 = vmatprep.mubr.bf16.mxu0 0
        %2044 = vmatmul.mubr.bf16.gmra.mrb[0].mxu0 %v1939
        %v2045 = vpop.f32.mrb[0].mxu0
        %v2046 = vadd.f32 %v1813, %v2045
        %v2047 = vpop.f32.mrb[0].mxu0
        %v2048 = vpop.f32.mrb[0].mxu0
        %v2049 = vadd.f32 %v1816, %v2048
        %v2050 = vpop.f32.mrb[0].mxu0
        %2051 = vmatprep.mubr.bf16.mxu0 0
        %2052 = vmatmul.mubr.bf16.gmra.mrb[0].mxu0 %v1942
        %v2053 = vpop.f32.mrb[0].mxu0
        %v2054 = vadd.f32 %v1821, %v2053
        %v2055 = vpop.f32.mrb[0].mxu0
        %v2056 = vpop.f32.mrb[0].mxu0
        %v2057 = vadd.f32 %v1824, %v2056
        %v2058 = vpop.f32.mrb[0].mxu0
        %2059 = vmatprep.mubr.bf16.mxu0 0
        %2060 = vmatmul.mubr.bf16.gmra.mrb[0].mxu0 %v1945
        %v2061 = vpop.f32.mrb[0].mxu0
        %v2062 = vadd.f32 %v1829, %v2061
        %v2063 = vpop.f32.mrb[0].mxu0
        %v2064 = vpop.f32.mrb[0].mxu0
        %v2065 = vadd.f32 %v1832, %v2064
        %v2066 = vpop.f32.mrb[0].mxu0
        %2067 = vmatprep.mubr.bf16.mxu0 0
        %2068 = vmatmul.mubr.bf16.gmra.mrb[0].mxu0 %v1948
        %v2069 = vpop.f32.mrb[0].mxu0
        %v2070 = vadd.f32 %v1837, %v2069
        %v2071 = vpop.f32.mrb[0].mxu0
        %v2072 = vpop.f32.mrb[0].mxu0
        %v2073 = vadd.f32 %v1840, %v2072
        %v2074 = vpop.f32.mrb[0].mxu0
        %2075 = vmatprep.mubr.bf16.mxu0 0
        %2076 = vmatmul.mubr.bf16.gmra.mrb[0].mxu0 %v1951
        %v2077 = vpop.f32.mrb[0].mxu0
        %v2078 = vadd.f32 %v1845, %v2077
        %v2079 = vpop.f32.mrb[0].mxu0
        %v2080 = vpop.f32.mrb[0].mxu0
        %v2081 = vadd.f32 %v1848, %v2080
        %v2082 = vpop.f32.mrb[0].mxu0
        %2083 = vmatprep.mubr.bf16.mxu0 0
        %2084 = vmatmul.mubr.bf16.gmra.mrb[0].mxu0 %v1954
        %v2085 = vpop.f32.mrb[0].mxu0
        %v2086 = vadd.f32 %v1853, %v2085
        %v2087 = vpop.f32.mrb[0].mxu0
        %v2088 = vpop.f32.mrb[0].mxu0
        %v2089 = vadd.f32 %v1856, %v2088
        %v2090 = vpop.f32.mrb[0].mxu0
        %2091 = vmatprep.mubr.bf16.mxu0 0
        %2092 = vmatmul.mubr.bf16.gmra.mrb[0].mxu0 %v1957
        %v2093 = vpop.f32.mrb[0].mxu0
        %v2094 = vadd.f32 %v1861, %v2093
        %v2095 = vpop.f32.mrb[0].mxu0
        %v2096 = vpop.f32.mrb[0].mxu0
        %v2097 = vadd.f32 %v1864, %v2096
        %v2098 = vpop.f32.mrb[0].mxu0
        %2099 = vmatprep.mubr.bf16.mxu0 0
        %2100 = vmatmul.mubr.bf16.gmra.mrb[0].mxu0 %v1960
        %v2101 = vpop.f32.mrb[0].mxu0
        %v2102 = vadd.f32 %v1869, %v2101
        %v2103 = vpop.f32.mrb[0].mxu0
        %v2104 = vpop.f32.mrb[0].mxu0
        %v2105 = vadd.f32 %v1872, %v2104
        %v2106 = vpop.f32.mrb[0].mxu0
        %2107 = vmatprep.mubr.bf16.mxu0 0
        %2108 = vmatmul.mubr.bf16.gmra.mrb[0].mxu0 %v1963
        %v2109 = vpop.f32.mrb[0].mxu0
        %v2110 = vadd.f32 %v1877, %v2109
        %v2111 = vpop.f32.mrb[0].mxu0
        %v2112 = vpop.f32.mrb[0].mxu0
        %v2113 = vadd.f32 %v1880, %v2112
        %v2114 = vpop.f32.mrb[0].mxu0
        %2115 = vmatprep.mubr.bf16.mxu0 0
        %2116 = vmatmul.mubr.bf16.gmra.mrb[0].mxu0 %v1966
        %v2117 = vpop.f32.mrb[0].mxu0
        %v2118 = vadd.f32 %v1885, %v2117
        %v2119 = vpop.f32.mrb[0].mxu0
        %v2120 = vpop.f32.mrb[0].mxu0
        %v2121 = vadd.f32 %v1888, %v2120
        %v2122 = vpop.f32.mrb[0].mxu0
        %2123 = vmatprep.mubr.bf16.mxu0 0
        %2124 = vmatmul.mubr.bf16.gmra.mrb[0].mxu0 %v1969
        %v2125 = vpop.f32.mrb[0].mxu0
        %v2126 = vadd.f32 %v1893, %v2125
        %v2127 = vpop.f32.mrb[0].mxu0
        %v2128 = vpop.f32.mrb[0].mxu0
        %v2129 = vadd.f32 %v1896, %v2128
        %v2130 = vpop.f32.mrb[0].mxu0
        %2131 = vdwg.mxu0
        %v2133 = vlaneseq
        %v2134 = vshrl.u32 %v2133, 7
        %v2135 = vsub.s32 0, %v2134
        %v2136 = vrot.slane %v1357, %v2135
        %v2138 = vadd.f32 %v2006, %v2136
        %v2139 = vadd.f32 %v2009, %v2136
        %v2140 = vadd.f32 %v2014, %v2136
        %v2141 = vadd.f32 %v2017, %v2136
        %v2142 = vadd.f32 %v2022, %v2136
        %v2143 = vadd.f32 %v2025, %v2136
        %v2144 = vadd.f32 %v2030, %v2136
        %v2145 = vadd.f32 %v2033, %v2136
        %v2146 = vadd.f32 %v2038, %v2136
        %v2147 = vadd.f32 %v2041, %v2136
        %v2148 = vadd.f32 %v2046, %v2136
        %v2149 = vadd.f32 %v2049, %v2136
        %v2150 = vadd.f32 %v2054, %v2136
        %v2151 = vadd.f32 %v2057, %v2136
        %v2152 = vadd.f32 %v2062, %v2136
        %v2153 = vadd.f32 %v2065, %v2136
        %v2154 = vadd.f32 %v2070, %v2136
        %v2155 = vadd.f32 %v2073, %v2136
        %v2156 = vadd.f32 %v2078, %v2136
        %v2157 = vadd.f32 %v2081, %v2136
        %v2158 = vadd.f32 %v2086, %v2136
        %v2159 = vadd.f32 %v2089, %v2136
        %v2160 = vadd.f32 %v2094, %v2136
        %v2161 = vadd.f32 %v2097, %v2136
        %v2162 = vadd.f32 %v2102, %v2136
        %v2163 = vadd.f32 %v2105, %v2136
        %v2164 = vadd.f32 %v2110, %v2136
        %v2165 = vadd.f32 %v2113, %v2136
        %v2166 = vadd.f32 %v2118, %v2136
        %v2167 = vadd.f32 %v2121, %v2136
        %v2168 = vadd.f32 %v2126, %v2136
        %v2169 = vadd.f32 %v2129, %v2136
        %v2170 = vlaneseq
        %v2171 = vshrl.u32 %v2170, 7
        %v2172 = vsub.s32 0, %v2171
        %v2173 = vrot.slane %v1260, %v2172
        %v2174 = vsub.f32 %v2138, %v2173
        %v2175 = vsub.f32 %v2139, %v2173
        %v2176 = vsub.f32 %v2140, %v2173
        %v2177 = vsub.f32 %v2141, %v2173
        %v2178 = vsub.f32 %v2142, %v2173
        %v2179 = vsub.f32 %v2143, %v2173
        %v2180 = vsub.f32 %v2144, %v2173
        %v2181 = vsub.f32 %v2145, %v2173
        %v2182 = vsub.f32 %v2146, %v2173
        %v2183 = vsub.f32 %v2147, %v2173
        %v2184 = vsub.f32 %v2148, %v2173
        %v2185 = vsub.f32 %v2149, %v2173
        %v2186 = vsub.f32 %v2150, %v2173
        %v2187 = vsub.f32 %v2151, %v2173
        %v2188 = vsub.f32 %v2152, %v2173
        %v2189 = vsub.f32 %v2153, %v2173
        %v2190 = vsub.f32 %v2154, %v2173
        %v2191 = vsub.f32 %v2155, %v2173
        %v2192 = vsub.f32 %v2156, %v2173
        %v2193 = vsub.f32 %v2157, %v2173
        %v2194 = vsub.f32 %v2158, %v2173
        %v2195 = vsub.f32 %v2159, %v2173
        %v2196 = vsub.f32 %v2160, %v2173
        %v2197 = vsub.f32 %v2161, %v2173
        %v2198 = vsub.f32 %v2162, %v2173
        %v2199 = vsub.f32 %v2163, %v2173
        %v2200 = vsub.f32 %v2164, %v2173
        %v2201 = vsub.f32 %v2165, %v2173
        %v2202 = vsub.f32 %v2166, %v2173
        %v2203 = vsub.f32 %v2167, %v2173
        %v2204 = vsub.f32 %v2168, %v2173
        %v2205 = vsub.f32 %v2169, %v2173
        %v2206 = vlaneseq
        %v2207 = vshrl.u32 %v2206, 7
        %v2208 = vsub.s32 0, %v2207
        %v2209 = vrot.slane %v1266, %v2208
        %v2210 = vmul.f32 %v2174, %v2209
        %v2211 = vmul.f32 %v2175, %v2209
        %v2212 = vmul.f32 %v2176, %v2209
        %v2213 = vmul.f32 %v2177, %v2209
        %v2214 = vmul.f32 %v2178, %v2209
        %v2215 = vmul.f32 %v2179, %v2209
        %v2216 = vmul.f32 %v2180, %v2209
        %v2217 = vmul.f32 %v2181, %v2209
        %v2218 = vmul.f32 %v2182, %v2209
        %v2219 = vmul.f32 %v2183, %v2209
        %v2220 = vmul.f32 %v2184, %v2209
        %v2221 = vmul.f32 %v2185, %v2209
        %v2222 = vmul.f32 %v2186, %v2209
        %v2223 = vmul.f32 %v2187, %v2209
        %v2224 = vmul.f32 %v2188, %v2209
        %v2225 = vmul.f32 %v2189, %v2209
        %v2226 = vmul.f32 %v2190, %v2209
        %v2227 = vmul.f32 %v2191, %v2209
        %v2228 = vmul.f32 %v2192, %v2209
        %v2229 = vmul.f32 %v2193, %v2209
        %v2230 = vmul.f32 %v2194, %v2209
        %v2231 = vmul.f32 %v2195, %v2209
        %v2232 = vmul.f32 %v2196, %v2209
        %v2233 = vmul.f32 %v2197, %v2209
        %v2234 = vmul.f32 %v2198, %v2209
        %v2235 = vmul.f32 %v2199, %v2209
        %v2236 = vmul.f32 %v2200, %v2209
        %v2237 = vmul.f32 %v2201, %v2209
        %v2238 = vmul.f32 %v2202, %v2209
        %v2239 = vmul.f32 %v2203, %v2209
        %v2240 = vmul.f32 %v2204, %v2209
        %v2241 = vmul.f32 %v2205, %v2209
        %v2242 = vmax.f32 %v2210, 0.0
        %v2243 = vmax.f32 %v2211, 0.0
        %v2244 = vmax.f32 %v2212, 0.0
        %v2245 = vmax.f32 %v2213, 0.0
        %v2246 = vmax.f32 %v2214, 0.0
        %v2247 = vmax.f32 %v2215, 0.0
        %v2248 = vmax.f32 %v2216, 0.0
        %v2249 = vmax.f32 %v2217, 0.0
        %v2250 = vmax.f32 %v2218, 0.0
        %v2251 = vmax.f32 %v2219, 0.0
        %v2252 = vmax.f32 %v2220, 0.0
        %v2253 = vmax.f32 %v2221, 0.0
        %v2254 = vmax.f32 %v2222, 0.0
        %v2255 = vmax.f32 %v2223, 0.0
        %v2256 = vmax.f32 %v2224, 0.0
        %v2257 = vmax.f32 %v2225, 0.0
        %v2258 = vmax.f32 %v2226, 0.0
        %v2259 = vmax.f32 %v2227, 0.0
        %v2260 = vmax.f32 %v2228, 0.0
        %v2261 = vmax.f32 %v2229, 0.0
        %v2262 = vmax.f32 %v2230, 0.0
        %v2263 = vmax.f32 %v2231, 0.0
        %v2264 = vmax.f32 %v2232, 0.0
        %v2265 = vmax.f32 %v2233, 0.0
        %v2266 = vmax.f32 %v2234, 0.0
        %v2267 = vmax.f32 %v2235, 0.0
        %v2268 = vmax.f32 %v2236, 0.0
        %v2269 = vmax.f32 %v2237, 0.0
        %v2270 = vmax.f32 %v2238, 0.0
        %v2271 = vmax.f32 %v2239, 0.0
        %v2272 = vmax.f32 %v2240, 0.0
        %v2273 = vmax.f32 %v2241, 0.0
        %v2274 = vstv %s1300
        %v2275 = vadd.s32 %v2274, 1
        %v2276 = vadd.s32 %v2274, 2
        %v2277 = vadd.s32 %v2274, 3
        %v2278 = vadd.s32 %v2274, 4
        %v2279 = vadd.s32 %v2274, 5
        %v2280 = vadd.s32 %v2274, 6
        %v2281 = vadd.s32 %v2274, 7
        %v2282 = vadd.s32 %v2274, 8
        %v2283 = vadd.s32 %v2274, 9
        %v2284 = vadd.s32 %v2274, 10
        %v2285 = vadd.s32 %v2274, 11
        %v2286 = vadd.s32 %v2274, 12
        %v2287 = vadd.s32 %v2274, 13
        %v2288 = vadd.s32 %v2274, 14
        %v2289 = vadd.s32 %v2274, 15
        %vm2290 = vcmp.lt.s32.totalorder %v2274, 12
        %vm2291 = vcmp.lt.s32.totalorder %v2275, 12
        %vm2292 = vcmp.lt.s32.totalorder %v2276, 12
        %vm2293 = vcmp.lt.s32.totalorder %v2277, 12
        %vm2294 = vcmp.lt.s32.totalorder %v2278, 12
        %vm2295 = vcmp.lt.s32.totalorder %v2279, 12
        %vm2296 = vcmp.lt.s32.totalorder %v2280, 12
        %vm2297 = vcmp.lt.s32.totalorder %v2281, 12
        %vm2298 = vcmp.lt.s32.totalorder %v2282, 12
        %vm2299 = vcmp.lt.s32.totalorder %v2283, 12
        %vm2300 = vcmp.lt.s32.totalorder %v2284, 12
        %vm2301 = vcmp.lt.s32.totalorder %v2285, 12
        %vm2302 = vcmp.lt.s32.totalorder %v2286, 12
        %vm2303 = vcmp.lt.s32.totalorder %v2287, 12
        %vm2304 = vcmp.lt.s32.totalorder %v2288, 12
        %vm2305 = vcmp.lt.s32.totalorder %v2289, 12
        %v2306 = vsel %vm2290, %v2242, 0.0
        %v2307 = vsel %vm2290, %v2243, 0.0
        %v2308 = vsel %vm2291, %v2244, 0.0
        %v2309 = vsel %vm2291, %v2245, 0.0
        %v2310 = vsel %vm2292, %v2246, 0.0
        %v2311 = vsel %vm2292, %v2247, 0.0
        %v2312 = vsel %vm2293, %v2248, 0.0
        %v2313 = vsel %vm2293, %v2249, 0.0
        %v2314 = vsel %vm2294, %v2250, 0.0
        %v2315 = vsel %vm2294, %v2251, 0.0
        %v2316 = vsel %vm2295, %v2252, 0.0
        %v2317 = vsel %vm2295, %v2253, 0.0
        %v2318 = vsel %vm2296, %v2254, 0.0
        %v2319 = vsel %vm2296, %v2255, 0.0
        %v2320 = vsel %vm2297, %v2256, 0.0
        %v2321 = vsel %vm2297, %v2257, 0.0
        %v2322 = vsel %vm2298, %v2258, 0.0
        %v2323 = vsel %vm2298, %v2259, 0.0
        %v2324 = vsel %vm2299, %v2260, 0.0
        %v2325 = vsel %vm2299, %v2261, 0.0
        %v2326 = vsel %vm2300, %v2262, 0.0
        %v2327 = vsel %vm2300, %v2263, 0.0
        %v2328 = vsel %vm2301, %v2264, 0.0
        %v2329 = vsel %vm2301, %v2265, 0.0
        %v2330 = vsel %vm2302, %v2266, 0.0
        %v2331 = vsel %vm2302, %v2267, 0.0
        %v2332 = vsel %vm2303, %v2268, 0.0
        %v2333 = vsel %vm2303, %v2269, 0.0
        %v2334 = vsel %vm2304, %v2270, 0.0
        %v2335 = vsel %vm2304, %v2271, 0.0
        %v2336 = vsel %vm2305, %v2272, 0.0
        %v2337 = vsel %vm2305, %v2273, 0.0
        %v2338 = vpack.c.bf16 %v2307, %v2306
        %v2339 = vpack.c.bf16 %v2309, %v2308
        %v2340 = vpack.c.bf16 %v2311, %v2310
        %v2341 = vpack.c.bf16 %v2313, %v2312
        %v2342 = vpack.c.bf16 %v2315, %v2314
        %v2343 = vpack.c.bf16 %v2317, %v2316
        %v2344 = vpack.c.bf16 %v2319, %v2318
        %v2345 = vpack.c.bf16 %v2321, %v2320
        %v2346 = vpack.c.bf16 %v2323, %v2322
        %v2347 = vpack.c.bf16 %v2325, %v2324
        %v2348 = vpack.c.bf16 %v2327, %v2326
        %v2349 = vpack.c.bf16 %v2329, %v2328
        %v2350 = vpack.c.bf16 %v2331, %v2330
        %v2351 = vpack.c.bf16 %v2333, %v2332
        %v2352 = vpack.c.bf16 %v2335, %v2334
        %v2353 = vpack.c.bf16 %v2337, %v2336
        %v2354 = vld [vmem:[%s8] sm:$0xf]
        %v2355 = vld [vmem:[%s8 + $0x4] sm:$0xf]
        %v2356 = vld [vmem:[%s8 + $0x8] sm:$0xf]
        %v2357 = vld [vmem:[%s8 + $0xc] sm:$0xf]
        %v2358 = vld [vmem:[%s8 + $0x10] sm:$0xf]
        %v2359 = vld [vmem:[%s8 + $0x14] sm:$0xf]
        %v2360 = vld [vmem:[%s8 + $0x18] sm:$0xf]
        %v2361 = vld [vmem:[%s8 + $0x1c] sm:$0xf]
        %v2378 = vcombine.high %v2338, %v2338
        %v2380 = vunpack.c.l.s4 1983009808
        %v2381 = vunpack.c.0.s8 %v2380
        %v2382 = vlaneseq
        %v2383 = vshrl.u32 %v2382, 7
        %v2384 = vsub.s32 %v2381, %v2383
        %v2385 = vrot.slane %v2338, %v2384
        %v2387 = vunpack.c.l.s4 1983009808
        %v2388 = vunpack.c.0.s8 %v2387
        %v2389 = vlaneseq
        %v2390 = vshrl.u32 %v2389, 7
        %v2391 = vsub.s32 %v2388, %v2390
        %v2392 = vrot.slane %v2378, %v2391
        %v2393 = vcombine.high %v2385, %v2385
        %v2394 = vcombine.high %v2339, %v2339
        %v2396 = vunpack.c.l.s4 1983009808
        %v2397 = vunpack.c.0.s8 %v2396
        %v2398 = vlaneseq
        %v2399 = vshrl.u32 %v2398, 7
        %v2400 = vsub.s32 %v2397, %v2399
        %v2401 = vrot.slane %v2339, %v2400
        %v2403 = vunpack.c.l.s4 1983009808
        %v2404 = vunpack.c.0.s8 %v2403
        %v2405 = vlaneseq
        %v2406 = vshrl.u32 %v2405, 7
        %v2407 = vsub.s32 %v2404, %v2406
        %v2408 = vrot.slane %v2394, %v2407
        %v2409 = vcombine.high %v2401, %v2401
        %v2410 = vcombine.high %v2340, %v2340
        %v2412 = vunpack.c.l.s4 1983009808
        %v2413 = vunpack.c.0.s8 %v2412
        %v2414 = vlaneseq
        %v2415 = vshrl.u32 %v2414, 7
        %v2416 = vsub.s32 %v2413, %v2415
        %v2417 = vrot.slane %v2340, %v2416
        %v2419 = vunpack.c.l.s4 1983009808
        %v2420 = vunpack.c.0.s8 %v2419
        %v2421 = vlaneseq
        %v2422 = vshrl.u32 %v2421, 7
        %v2423 = vsub.s32 %v2420, %v2422
        %v2424 = vrot.slane %v2410, %v2423
        %v2425 = vcombine.high %v2417, %v2417
        %v2426 = vcombine.high %v2341, %v2341
        %v2428 = vunpack.c.l.s4 1983009808
        %v2429 = vunpack.c.0.s8 %v2428
        %v2430 = vlaneseq
        %v2431 = vshrl.u32 %v2430, 7
        %v2432 = vsub.s32 %v2429, %v2431
        %v2433 = vrot.slane %v2341, %v2432
        %v2435 = vunpack.c.l.s4 1983009808
        %v2436 = vunpack.c.0.s8 %v2435
        %v2437 = vlaneseq
        %v2438 = vshrl.u32 %v2437, 7
        %v2439 = vsub.s32 %v2436, %v2438
        %v2440 = vrot.slane %v2426, %v2439
        %v2441 = vcombine.high %v2433, %v2433
        %v2442 = vcombine.high %v2342, %v2342
        %v2444 = vunpack.c.l.s4 1983009808
        %v2445 = vunpack.c.0.s8 %v2444
        %v2446 = vlaneseq
        %v2447 = vshrl.u32 %v2446, 7
        %v2448 = vsub.s32 %v2445, %v2447
        %v2449 = vrot.slane %v2342, %v2448
        %v2451 = vunpack.c.l.s4 1983009808
        %v2452 = vunpack.c.0.s8 %v2451
        %v2453 = vlaneseq
        %v2454 = vshrl.u32 %v2453, 7
        %v2455 = vsub.s32 %v2452, %v2454
        %v2456 = vrot.slane %v2442, %v2455
        %v2457 = vcombine.high %v2449, %v2449
        %v2458 = vcombine.high %v2343, %v2343
        %v2460 = vunpack.c.l.s4 1983009808
        %v2461 = vunpack.c.0.s8 %v2460
        %v2462 = vlaneseq
        %v2463 = vshrl.u32 %v2462, 7
        %v2464 = vsub.s32 %v2461, %v2463
        %v2465 = vrot.slane %v2343, %v2464
        %v2467 = vunpack.c.l.s4 1983009808
        %v2468 = vunpack.c.0.s8 %v2467
        %v2469 = vlaneseq
        %v2470 = vshrl.u32 %v2469, 7
        %v2471 = vsub.s32 %v2468, %v2470
        %v2472 = vrot.slane %v2458, %v2471
        %v2473 = vcombine.high %v2465, %v2465
        %v2474 = vcombine.high %v2344, %v2344
        %v2476 = vunpack.c.l.s4 1983009808
        %v2477 = vunpack.c.0.s8 %v2476
        %v2478 = vlaneseq
        %v2479 = vshrl.u32 %v2478, 7
        %v2480 = vsub.s32 %v2477, %v2479
        %v2481 = vrot.slane %v2344, %v2480
        %v2483 = vunpack.c.l.s4 1983009808
        %v2484 = vunpack.c.0.s8 %v2483
        %v2485 = vlaneseq
        %v2486 = vshrl.u32 %v2485, 7
        %v2487 = vsub.s32 %v2484, %v2486
        %v2488 = vrot.slane %v2474, %v2487
        %v2489 = vcombine.high %v2481, %v2481
        %v2490 = vcombine.high %v2345, %v2345
        %v2492 = vunpack.c.l.s4 1983009808
        %v2493 = vunpack.c.0.s8 %v2492
        %v2494 = vlaneseq
        %v2495 = vshrl.u32 %v2494, 7
        %v2496 = vsub.s32 %v2493, %v2495
        %v2497 = vrot.slane %v2345, %v2496
        %v2499 = vunpack.c.l.s4 1983009808
        %v2500 = vunpack.c.0.s8 %v2499
        %v2501 = vlaneseq
        %v2502 = vshrl.u32 %v2501, 7
        %v2503 = vsub.s32 %v2500, %v2502
        %v2504 = vrot.slane %v2490, %v2503
        %v2505 = vcombine.high %v2497, %v2497
        %v2506 = vcombine.high %v2346, %v2346
        %v2508 = vunpack.c.l.s4 1983009808
        %v2509 = vunpack.c.0.s8 %v2508
        %v2510 = vlaneseq
        %v2511 = vshrl.u32 %v2510, 7
        %v2512 = vsub.s32 %v2509, %v2511
        %v2513 = vrot.slane %v2346, %v2512
        %v2515 = vunpack.c.l.s4 1983009808
        %v2516 = vunpack.c.0.s8 %v2515
        %v2517 = vlaneseq
        %v2518 = vshrl.u32 %v2517, 7
        %v2519 = vsub.s32 %v2516, %v2518
        %v2520 = vrot.slane %v2506, %v2519
        %v2521 = vcombine.high %v2513, %v2513
        %v2522 = vcombine.high %v2347, %v2347
        %v2524 = vunpack.c.l.s4 1983009808
        %v2525 = vunpack.c.0.s8 %v2524
        %v2526 = vlaneseq
        %v2527 = vshrl.u32 %v2526, 7
        %v2528 = vsub.s32 %v2525, %v2527
        %v2529 = vrot.slane %v2347, %v2528
        %v2531 = vunpack.c.l.s4 1983009808
        %v2532 = vunpack.c.0.s8 %v2531
        %v2533 = vlaneseq
        %v2534 = vshrl.u32 %v2533, 7
        %v2535 = vsub.s32 %v2532, %v2534
        %v2536 = vrot.slane %v2522, %v2535
        %v2537 = vcombine.high %v2529, %v2529
        %v2538 = vcombine.high %v2348, %v2348
        %v2540 = vunpack.c.l.s4 1983009808
        %v2541 = vunpack.c.0.s8 %v2540
        %v2542 = vlaneseq
        %v2543 = vshrl.u32 %v2542, 7
        %v2544 = vsub.s32 %v2541, %v2543
        %v2545 = vrot.slane %v2348, %v2544
        %v2547 = vunpack.c.l.s4 1983009808
        %v2548 = vunpack.c.0.s8 %v2547
        %v2549 = vlaneseq
        %v2550 = vshrl.u32 %v2549, 7
        %v2551 = vsub.s32 %v2548, %v2550
        %v2552 = vrot.slane %v2538, %v2551
        %v2553 = vcombine.high %v2545, %v2545
        %v2554 = vcombine.high %v2349, %v2349
        %v2556 = vunpack.c.l.s4 1983009808
        %v2557 = vunpack.c.0.s8 %v2556
        %v2558 = vlaneseq
        %v2559 = vshrl.u32 %v2558, 7
        %v2560 = vsub.s32 %v2557, %v2559
        %v2561 = vrot.slane %v2349, %v2560
        %v2563 = vunpack.c.l.s4 1983009808
        %v2564 = vunpack.c.0.s8 %v2563
        %v2565 = vlaneseq
        %v2566 = vshrl.u32 %v2565, 7
        %v2567 = vsub.s32 %v2564, %v2566
        %v2568 = vrot.slane %v2554, %v2567
        %v2569 = vcombine.high %v2561, %v2561
        %v2570 = vcombine.high %v2350, %v2350
        %v2572 = vunpack.c.l.s4 1983009808
        %v2573 = vunpack.c.0.s8 %v2572
        %v2574 = vlaneseq
        %v2575 = vshrl.u32 %v2574, 7
        %v2576 = vsub.s32 %v2573, %v2575
        %v2577 = vrot.slane %v2350, %v2576
        %v2579 = vunpack.c.l.s4 1983009808
        %v2580 = vunpack.c.0.s8 %v2579
        %v2581 = vlaneseq
        %v2582 = vshrl.u32 %v2581, 7
        %v2583 = vsub.s32 %v2580, %v2582
        %v2584 = vrot.slane %v2570, %v2583
        %v2585 = vcombine.high %v2577, %v2577
        %v2586 = vcombine.high %v2351, %v2351
        %v2588 = vunpack.c.l.s4 1983009808
        %v2589 = vunpack.c.0.s8 %v2588
        %v2590 = vlaneseq
        %v2591 = vshrl.u32 %v2590, 7
        %v2592 = vsub.s32 %v2589, %v2591
        %v2593 = vrot.slane %v2351, %v2592
        %v2595 = vunpack.c.l.s4 1983009808
        %v2596 = vunpack.c.0.s8 %v2595
        %v2597 = vlaneseq
        %v2598 = vshrl.u32 %v2597, 7
        %v2599 = vsub.s32 %v2596, %v2598
        %v2600 = vrot.slane %v2586, %v2599
        %v2601 = vcombine.high %v2593, %v2593
        %v2602 = vcombine.high %v2352, %v2352
        %v2604 = vunpack.c.l.s4 1983009808
        %v2605 = vunpack.c.0.s8 %v2604
        %v2606 = vlaneseq
        %v2607 = vshrl.u32 %v2606, 7
        %v2608 = vsub.s32 %v2605, %v2607
        %v2609 = vrot.slane %v2352, %v2608
        %v2611 = vunpack.c.l.s4 1983009808
        %v2612 = vunpack.c.0.s8 %v2611
        %v2613 = vlaneseq
        %v2614 = vshrl.u32 %v2613, 7
        %v2615 = vsub.s32 %v2612, %v2614
        %v2616 = vrot.slane %v2602, %v2615
        %v2617 = vcombine.high %v2609, %v2609
        %v2618 = vcombine.high %v2353, %v2353
        %v2620 = vunpack.c.l.s4 1983009808
        %v2621 = vunpack.c.0.s8 %v2620
        %v2622 = vlaneseq
        %v2623 = vshrl.u32 %v2622, 7
        %v2624 = vsub.s32 %v2621, %v2623
        %v2625 = vrot.slane %v2353, %v2624
        %v2627 = vunpack.c.l.s4 1983009808
        %v2628 = vunpack.c.0.s8 %v2627
        %v2629 = vlaneseq
        %v2630 = vshrl.u32 %v2629, 7
        %v2631 = vsub.s32 %v2628, %v2630
        %v2632 = vrot.slane %v2618, %v2631
        %v2633 = vcombine.high %v2625, %v2625
        %v2634 = vcombine.low %v2385, %v2393
        %v2635 = vcombine.low %v2392, %v2401
        %v2637 = vunpack.c.l.s4 1983009808
        %v2638 = vunpack.c.0.s8 %v2637
        %v2639 = vlaneseq
        %v2640 = vshrl.u32 %v2639, 7
        %v2641 = vsub.s32 %v2638, %v2640
        %v2642 = vrot.slane %v2634, %v2641
        %v2644 = vunpack.c.l.s4 1983009808
        %v2645 = vunpack.c.0.s8 %v2644
        %v2646 = vlaneseq
        %v2647 = vshrl.u32 %v2646, 7
        %v2648 = vsub.s32 %v2645, %v2647
        %v2649 = vrot.slane %v2635, %v2648
        %v2650 = vcombine.low %v2642, %v2649
        %v2651 = vcombine.low %v2409, %v2408
        %v2652 = vcombine.low %v2417, %v2425
        %v2654 = vunpack.c.l.s4 1983009808
        %v2655 = vunpack.c.0.s8 %v2654
        %v2656 = vlaneseq
        %v2657 = vshrl.u32 %v2656, 7
        %v2658 = vsub.s32 %v2655, %v2657
        %v2659 = vrot.slane %v2651, %v2658
        %v2661 = vunpack.c.l.s4 1983009808
        %v2662 = vunpack.c.0.s8 %v2661
        %v2663 = vlaneseq
        %v2664 = vshrl.u32 %v2663, 7
        %v2665 = vsub.s32 %v2662, %v2664
        %v2666 = vrot.slane %v2652, %v2665
        %v2667 = vcombine.low %v2659, %v2666
        %v2668 = vcombine.low %v2424, %v2433
        %v2669 = vcombine.low %v2441, %v2440
        %v2671 = vunpack.c.l.s4 1983009808
        %v2672 = vunpack.c.0.s8 %v2671
        %v2673 = vlaneseq
        %v2674 = vshrl.u32 %v2673, 7
        %v2675 = vsub.s32 %v2672, %v2674
        %v2676 = vrot.slane %v2668, %v2675
        %v2678 = vunpack.c.l.s4 1983009808
        %v2679 = vunpack.c.0.s8 %v2678
        %v2680 = vlaneseq
        %v2681 = vshrl.u32 %v2680, 7
        %v2682 = vsub.s32 %v2679, %v2681
        %v2683 = vrot.slane %v2669, %v2682
        %v2684 = vcombine.low %v2676, %v2683
        %v2685 = vcombine.low %v2449, %v2457
        %v2686 = vcombine.low %v2456, %v2465
        %v2688 = vunpack.c.l.s4 1983009808
        %v2689 = vunpack.c.0.s8 %v2688
        %v2690 = vlaneseq
        %v2691 = vshrl.u32 %v2690, 7
        %v2692 = vsub.s32 %v2689, %v2691
        %v2693 = vrot.slane %v2685, %v2692
        %v2695 = vunpack.c.l.s4 1983009808
        %v2696 = vunpack.c.0.s8 %v2695
        %v2697 = vlaneseq
        %v2698 = vshrl.u32 %v2697, 7
        %v2699 = vsub.s32 %v2696, %v2698
        %v2700 = vrot.slane %v2686, %v2699
        %v2701 = vcombine.low %v2693, %v2700
        %v2702 = vcombine.low %v2473, %v2472
        %v2703 = vcombine.low %v2481, %v2489
        %v2705 = vunpack.c.l.s4 1983009808
        %v2706 = vunpack.c.0.s8 %v2705
        %v2707 = vlaneseq
        %v2708 = vshrl.u32 %v2707, 7
        %v2709 = vsub.s32 %v2706, %v2708
        %v2710 = vrot.slane %v2702, %v2709
        %v2712 = vunpack.c.l.s4 1983009808
        %v2713 = vunpack.c.0.s8 %v2712
        %v2714 = vlaneseq
        %v2715 = vshrl.u32 %v2714, 7
        %v2716 = vsub.s32 %v2713, %v2715
        %v2717 = vrot.slane %v2703, %v2716
        %v2718 = vcombine.low %v2710, %v2717
        %v2719 = vcombine.low %v2488, %v2497
        %v2720 = vcombine.low %v2505, %v2504
        %v2722 = vunpack.c.l.s4 1983009808
        %v2723 = vunpack.c.0.s8 %v2722
        %v2724 = vlaneseq
        %v2725 = vshrl.u32 %v2724, 7
        %v2726 = vsub.s32 %v2723, %v2725
        %v2727 = vrot.slane %v2719, %v2726
        %v2729 = vunpack.c.l.s4 1983009808
        %v2730 = vunpack.c.0.s8 %v2729
        %v2731 = vlaneseq
        %v2732 = vshrl.u32 %v2731, 7
        %v2733 = vsub.s32 %v2730, %v2732
        %v2734 = vrot.slane %v2720, %v2733
        %v2735 = vcombine.low %v2727, %v2734
        %v2736 = vcombine.low %v2513, %v2521
        %v2737 = vcombine.low %v2520, %v2529
        %v2739 = vunpack.c.l.s4 1983009808
        %v2740 = vunpack.c.0.s8 %v2739
        %v2741 = vlaneseq
        %v2742 = vshrl.u32 %v2741, 7
        %v2743 = vsub.s32 %v2740, %v2742
        %v2744 = vrot.slane %v2736, %v2743
        %v2746 = vunpack.c.l.s4 1983009808
        %v2747 = vunpack.c.0.s8 %v2746
        %v2748 = vlaneseq
        %v2749 = vshrl.u32 %v2748, 7
        %v2750 = vsub.s32 %v2747, %v2749
        %v2751 = vrot.slane %v2737, %v2750
        %v2752 = vcombine.low %v2744, %v2751
        %v2753 = vcombine.low %v2537, %v2536
        %v2754 = vcombine.low %v2545, %v2553
        %v2756 = vunpack.c.l.s4 1983009808
        %v2757 = vunpack.c.0.s8 %v2756
        %v2758 = vlaneseq
        %v2759 = vshrl.u32 %v2758, 7
        %v2760 = vsub.s32 %v2757, %v2759
        %v2761 = vrot.slane %v2753, %v2760
        %v2763 = vunpack.c.l.s4 1983009808
        %v2764 = vunpack.c.0.s8 %v2763
        %v2765 = vlaneseq
        %v2766 = vshrl.u32 %v2765, 7
        %v2767 = vsub.s32 %v2764, %v2766
        %v2768 = vrot.slane %v2754, %v2767
        %v2769 = vcombine.low %v2761, %v2768
        %v2770 = vcombine.low %v2552, %v2561
        %v2771 = vcombine.low %v2569, %v2568
        %v2773 = vunpack.c.l.s4 1983009808
        %v2774 = vunpack.c.0.s8 %v2773
        %v2775 = vlaneseq
        %v2776 = vshrl.u32 %v2775, 7
        %v2777 = vsub.s32 %v2774, %v2776
        %v2778 = vrot.slane %v2770, %v2777
        %v2780 = vunpack.c.l.s4 1983009808
        %v2781 = vunpack.c.0.s8 %v2780
        %v2782 = vlaneseq
        %v2783 = vshrl.u32 %v2782, 7
        %v2784 = vsub.s32 %v2781, %v2783
        %v2785 = vrot.slane %v2771, %v2784
        %v2786 = vcombine.low %v2778, %v2785
        %v2787 = vcombine.low %v2577, %v2585
        %v2788 = vcombine.low %v2584, %v2593
        %v2790 = vunpack.c.l.s4 1983009808
        %v2791 = vunpack.c.0.s8 %v2790
        %v2792 = vlaneseq
        %v2793 = vshrl.u32 %v2792, 7
        %v2794 = vsub.s32 %v2791, %v2793
        %v2795 = vrot.slane %v2787, %v2794
        %v2797 = vunpack.c.l.s4 1983009808
        %v2798 = vunpack.c.0.s8 %v2797
        %v2799 = vlaneseq
        %v2800 = vshrl.u32 %v2799, 7
        %v2801 = vsub.s32 %v2798, %v2800
        %v2802 = vrot.slane %v2788, %v2801
        %v2803 = vcombine.low %v2795, %v2802
        %v2804 = vcombine.low %v2601, %v2600
        %v2805 = vcombine.low %v2609, %v2617
        %v2807 = vunpack.c.l.s4 1983009808
        %v2808 = vunpack.c.0.s8 %v2807
        %v2809 = vlaneseq
        %v2810 = vshrl.u32 %v2809, 7
        %v2811 = vsub.s32 %v2808, %v2810
        %v2812 = vrot.slane %v2804, %v2811
        %v2814 = vunpack.c.l.s4 1983009808
        %v2815 = vunpack.c.0.s8 %v2814
        %v2816 = vlaneseq
        %v2817 = vshrl.u32 %v2816, 7
        %v2818 = vsub.s32 %v2815, %v2817
        %v2819 = vrot.slane %v2805, %v2818
        %v2820 = vcombine.low %v2812, %v2819
        %v2821 = vcombine.low %v2616, %v2625
        %v2822 = vcombine.low %v2633, %v2632
        %v2824 = vunpack.c.l.s4 1983009808
        %v2825 = vunpack.c.0.s8 %v2824
        %v2826 = vlaneseq
        %v2827 = vshrl.u32 %v2826, 7
        %v2828 = vsub.s32 %v2825, %v2827
        %v2829 = vrot.slane %v2821, %v2828
        %v2831 = vunpack.c.l.s4 1983009808
        %v2832 = vunpack.c.0.s8 %v2831
        %v2833 = vlaneseq
        %v2834 = vshrl.u32 %v2833, 7
        %v2835 = vsub.s32 %v2832, %v2834
        %v2836 = vrot.slane %v2822, %v2835
        %v2837 = vcombine.low %v2829, %v2836
        %v2846 = vunpack.c.l.b16 %v2354
        %v2847 = vunpack.c.l.b16 %v2355
        %v2848 = vunpack.c.l.b16 %v2356
        %v2849 = vunpack.c.l.b16 %v2357
        %v2850 = vunpack.c.l.b16 %v2358
        %v2851 = vunpack.c.l.b16 %v2359
        %v2852 = vunpack.c.l.b16 %v2360
        %v2853 = vunpack.c.l.b16 %v2361
        %v2854 = vpack.c.b16 %v2847, %v2846
        %v2855 = vpack.c.b16 %v2849, %v2848
        %v2856 = vpack.c.b16 %v2851, %v2850
        %v2857 = vpack.c.b16 %v2853, %v2852
        %v2863 = vsel %vm1267, %v2650, 0
        %v2866 = vsel %vm1267, %v2667, 0
        %v2869 = vsel %vm1267, %v2684, 0
        %v2872 = vsel %vm1267, %v2701, 0
        %v2875 = vsel %vm1267, %v2718, 0
        %v2878 = vsel %vm1267, %v2735, 0
        %v2881 = vsel %vm1267, %v2752, 0
        %v2884 = vsel %vm1267, %v2769, 0
        %v2887 = vsel %vm1267, %v2786, 0
        %v2890 = vsel %vm1267, %v2803, 0
        %v2893 = vsel %vm1267, %v2820, 0
        %v2896 = vsel %vm1267, %v2837, 0
        %2898 = vmatprep.subr.bf16.mxu0 0
        %2899 = vmatpush1.bf16.msra.mxu0 %v2854
        %2900 = vmatprep.subr.bf16.mxu0 0
        %2901 = vmatpush1.bf16.msra.mxu0 %v2855
        %2902 = vmatprep.subr.bf16.mxu0 0
        %2903 = vmatpush1.bf16.msra.mxu0 %v2856
        %2904 = vmatprep.subr.bf16.mxu0 0
        %2905 = vmatpush1.bf16.msra.mxu0 %v2857
        %2906 = vmatprep.subr.bf16.mxu0 0
        %2907 = vmatpush1.bf16.msra.mxu0 0
        %2908 = vmatprep.subr.bf16.mxu0 0
        %2909 = vmatpush1.bf16.msra.mxu0 0
        %2910 = vmatprep.subr.bf16.mxu0 0
        %2911 = vmatpush1.bf16.msra.mxu0 0
        %2912 = vmatprep.subr.bf16.mxu0 0
        %2913 = vmatpush1.bf16.msra.mxu0 0
        %2914 = vmatprep.subr.bf16.mxu0 0
        %2915 = vmatpush1.bf16.msra.mxu0 0
        %2916 = vmatprep.subr.bf16.mxu0 0
        %2917 = vmatpush1.bf16.msra.mxu0 0
        %2918 = vmatprep.subr.bf16.mxu0 0
        %2919 = vmatpush1.bf16.msra.mxu0 0
        %2920 = vmatprep.subr.bf16.mxu0 0
        %2921 = vmatpush1.bf16.msra.mxu0 0
        %2922 = vmatprep.subr.bf16.mxu0 0
        %2923 = vmatpush1.bf16.msra.mxu0 0
        %2924 = vmatprep.subr.bf16.mxu0 0
        %2925 = vmatpush1.bf16.msra.mxu0 0
        %2926 = vmatprep.subr.bf16.mxu0 0
        %2927 = vmatpush1.bf16.msra.mxu0 0
        %2928 = vmatprep.subr.bf16.mxu0 0
        %2929 = vmatpush1.bf16.msra.mxu0 0
        %2930 = vmatprep.mubr.bf16.mxu0 0
        %2931 = vmatmul.mubr.bf16.gmra.mrb[0].mxu0 %v2863
        %v2932 = vpop.f32.mrb[0].mxu0
        %v2933 = vadd.f32 0.0, %v2932
        %v2934 = vpop.f32.mrb[0].mxu0
        %v2935 = vpop.f32.mrb[0].mxu0
        %v2936 = vadd.f32 0.0, %v2935
        %v2937 = vpop.f32.mrb[0].mxu0
        %2938 = vmatprep.mubr.bf16.mxu0 0
        %2939 = vmatmul.mubr.bf16.gmra.mrb[0].mxu0 %v2866
        %v2940 = vpop.f32.mrb[0].mxu0
        %v2941 = vadd.f32 0.0, %v2940
        %v2942 = vpop.f32.mrb[0].mxu0
        %v2943 = vpop.f32.mrb[0].mxu0
        %v2944 = vadd.f32 0.0, %v2943
        %v2945 = vpop.f32.mrb[0].mxu0
        %2946 = vmatprep.mubr.bf16.mxu0 0
        %2947 = vmatmul.mubr.bf16.gmra.mrb[0].mxu0 %v2869
        %v2948 = vpop.f32.mrb[0].mxu0
        %v2949 = vadd.f32 0.0, %v2948
        %v2950 = vpop.f32.mrb[0].mxu0
        %v2951 = vpop.f32.mrb[0].mxu0
        %v2952 = vadd.f32 0.0, %v2951
        %v2953 = vpop.f32.mrb[0].mxu0
        %2954 = vmatprep.mubr.bf16.mxu0 0
        %2955 = vmatmul.mubr.bf16.gmra.mrb[0].mxu0 %v2872
        %v2956 = vpop.f32.mrb[0].mxu0
        %v2957 = vadd.f32 0.0, %v2956
        %v2958 = vpop.f32.mrb[0].mxu0
        %v2959 = vpop.f32.mrb[0].mxu0
        %v2960 = vadd.f32 0.0, %v2959
        %v2961 = vpop.f32.mrb[0].mxu0
        %2962 = vmatprep.mubr.bf16.mxu0 0
        %2963 = vmatmul.mubr.bf16.gmra.mrb[0].mxu0 %v2875
        %v2964 = vpop.f32.mrb[0].mxu0
        %v2965 = vadd.f32 0.0, %v2964
        %v2966 = vpop.f32.mrb[0].mxu0
        %v2967 = vpop.f32.mrb[0].mxu0
        %v2968 = vadd.f32 0.0, %v2967
        %v2969 = vpop.f32.mrb[0].mxu0
        %2970 = vmatprep.mubr.bf16.mxu0 0
        %2971 = vmatmul.mubr.bf16.gmra.mrb[0].mxu0 %v2878
        %v2972 = vpop.f32.mrb[0].mxu0
        %v2973 = vadd.f32 0.0, %v2972
        %v2974 = vpop.f32.mrb[0].mxu0
        %v2975 = vpop.f32.mrb[0].mxu0
        %v2976 = vadd.f32 0.0, %v2975
        %v2977 = vpop.f32.mrb[0].mxu0
        %2978 = vmatprep.mubr.bf16.mxu0 0
        %2979 = vmatmul.mubr.bf16.gmra.mrb[0].mxu0 %v2881
        %v2980 = vpop.f32.mrb[0].mxu0
        %v2981 = vadd.f32 0.0, %v2980
        %v2982 = vpop.f32.mrb[0].mxu0
        %v2983 = vpop.f32.mrb[0].mxu0
        %v2984 = vadd.f32 0.0, %v2983
        %v2985 = vpop.f32.mrb[0].mxu0
        %2986 = vmatprep.mubr.bf16.mxu0 0
        %2987 = vmatmul.mubr.bf16.gmra.mrb[0].mxu0 %v2884
        %v2988 = vpop.f32.mrb[0].mxu0
        %v2989 = vadd.f32 0.0, %v2988
        %v2990 = vpop.f32.mrb[0].mxu0
        %v2991 = vpop.f32.mrb[0].mxu0
        %v2992 = vadd.f32 0.0, %v2991
        %v2993 = vpop.f32.mrb[0].mxu0
        %2994 = vmatprep.mubr.bf16.mxu0 0
        %2995 = vmatmul.mubr.bf16.gmra.mrb[0].mxu0 %v2887
        %v2996 = vpop.f32.mrb[0].mxu0
        %v2997 = vadd.f32 0.0, %v2996
        %v2998 = vpop.f32.mrb[0].mxu0
        %v2999 = vpop.f32.mrb[0].mxu0
        %v3000 = vadd.f32 0.0, %v2999
        %v3001 = vpop.f32.mrb[0].mxu0
        %3002 = vmatprep.mubr.bf16.mxu0 0
        %3003 = vmatmul.mubr.bf16.gmra.mrb[0].mxu0 %v2890
        %v3004 = vpop.f32.mrb[0].mxu0
        %v3005 = vadd.f32 0.0, %v3004
        %v3006 = vpop.f32.mrb[0].mxu0
        %v3007 = vpop.f32.mrb[0].mxu0
        %v3008 = vadd.f32 0.0, %v3007
        %v3009 = vpop.f32.mrb[0].mxu0
        %3010 = vmatprep.mubr.bf16.mxu0 0
        %3011 = vmatmul.mubr.bf16.gmra.mrb[0].mxu0 %v2893
        %v3012 = vpop.f32.mrb[0].mxu0
        %v3013 = vadd.f32 0.0, %v3012
        %v3014 = vpop.f32.mrb[0].mxu0
        %v3015 = vpop.f32.mrb[0].mxu0
        %v3016 = vadd.f32 0.0, %v3015
        %v3017 = vpop.f32.mrb[0].mxu0
        %3018 = vmatprep.mubr.bf16.mxu0 0
        %3019 = vmatmul.mubr.bf16.gmra.mrb[0].mxu0 %v2896
        %v3020 = vpop.f32.mrb[0].mxu0
        %v3021 = vadd.f32 0.0, %v3020
        %v3022 = vpop.f32.mrb[0].mxu0
        %v3023 = vpop.f32.mrb[0].mxu0
        %v3024 = vadd.f32 0.0, %v3023
        %v3025 = vpop.f32.mrb[0].mxu0
        %3026 = vdwg.mxu0
        %v3051 = vcombine.high %v2933, %v2933
        %v3052 = vcombine.high %v2936, %v2936
        %v3053 = vcombine.high %v2941, %v2941
        %v3054 = vcombine.high %v2944, %v2944
        %v3055 = vcombine.high %v2949, %v2949
        %v3056 = vcombine.high %v2952, %v2952
        %v3057 = vcombine.high %v2957, %v2957
        %v3058 = vcombine.high %v2960, %v2960
        %v3059 = vcombine.high %v2965, %v2965
        %v3060 = vcombine.high %v2968, %v2968
        %v3061 = vcombine.high %v2973, %v2973
        %v3062 = vcombine.high %v2976, %v2976
        %v3063 = vcombine.high %v2981, %v2981
        %v3064 = vcombine.high %v2984, %v2984
        %v3065 = vcombine.high %v2989, %v2989
        %v3066 = vcombine.high %v2992, %v2992
        %v3067 = vcombine.high %v2997, %v2997
        %v3068 = vcombine.high %v3000, %v3000
        %v3069 = vcombine.high %v3005, %v3005
        %v3070 = vcombine.high %v3008, %v3008
        %v3071 = vcombine.high %v3013, %v3013
        %v3072 = vcombine.high %v3016, %v3016
        %v3073 = vcombine.high %v3021, %v3021
        %v3074 = vcombine.high %v3024, %v3024
        %v3083 = vcombine.low %v2933, %v3051
        %v3084 = vcombine.low %v3052, %v2941
        %v3085 = vcombine.low %v2944, %v3054
        %v3086 = vcombine.low %v3055, %v2952
        %v3087 = vcombine.low %v2957, %v3057
        %v3088 = vcombine.low %v3058, %v2965
        %v3089 = vcombine.low %v2968, %v3060
        %v3090 = vcombine.low %v3061, %v2976
        %v3091 = vcombine.low %v2981, %v3063
        %v3092 = vcombine.low %v3064, %v2989
        %v3093 = vcombine.low %v2992, %v3066
        %v3094 = vcombine.low %v3067, %v3000
        %v3095 = vcombine.low %v3005, %v3069
        %v3096 = vcombine.low %v3070, %v3013
        %v3097 = vcombine.low %v3016, %v3072
        %v3098 = vcombine.low %v3073, %v3024
        %v3115 = vadd.f32 %v1305, %v3083
        %v3116 = vadd.f32 %v1306, %v2936
        %v3117 = vadd.f32 %v1307, %v3084
        %v3118 = vadd.f32 %v1308, %v3053
        %v3119 = vadd.f32 %v1309, %v3085
        %v3120 = vadd.f32 %v1310, %v2949
        %v3121 = vadd.f32 %v1311, %v3086
        %v3122 = vadd.f32 %v1312, %v3056
        %v3123 = vadd.f32 %v1313, %v3087
        %v3124 = vadd.f32 %v1314, %v2960
        %v3125 = vadd.f32 %v1315, %v3088
        %v3126 = vadd.f32 %v1316, %v3059
        %v3127 = vadd.f32 %v1317, %v3089
        %v3128 = vadd.f32 %v1318, %v2973
        %v3129 = vadd.f32 %v1319, %v3090
        %v3130 = vadd.f32 %v1320, %v3062
        %v3131 = vadd.f32 %v1321, %v3091
        %v3132 = vadd.f32 %v1322, %v2984
        %v3133 = vadd.f32 %v1323, %v3092
        %v3134 = vadd.f32 %v1324, %v3065
        %v3135 = vadd.f32 %v1325, %v3093
        %v3136 = vadd.f32 %v1326, %v2997
        %v3137 = vadd.f32 %v1327, %v3094
        %v3138 = vadd.f32 %v1328, %v3068
        %v3139 = vadd.f32 %v1329, %v3095
        %v3140 = vadd.f32 %v1330, %v3008
        %v3141 = vadd.f32 %v1331, %v3096
        %v3142 = vadd.f32 %v1332, %v3071
        %v3143 = vadd.f32 %v1333, %v3097
        %v3144 = vadd.f32 %v1334, %v3021
        %v3145 = vadd.f32 %v1335, %v3098
        %v3146 = vadd.f32 %v1336, %v3074
        %3147 = vst.msk [vmem:[#allocation2] sm:$0xff] %vm1267, %v3115
        %vm3148 = vcmask 519168
        %3149 = vst.msk [vmem:[#allocation2 + $0x8] sm:$0xf] %vm3148, %v3116
        %3150 = vst.msk [vmem:[#allocation2 + $0x10] sm:$0xff] %vm1267, %v3117
        %3151 = vst.msk [vmem:[#allocation2 + $0x18] sm:$0xf] %vm3148, %v3118
        %3152 = vst.msk [vmem:[#allocation2 + $0x20] sm:$0xff] %vm1267, %v3119
        %3153 = vst.msk [vmem:[#allocation2 + $0x28] sm:$0xf] %vm3148, %v3120
        %3154 = vst.msk [vmem:[#allocation2 + $0x30] sm:$0xff] %vm1267, %v3121
        %3155 = vst.msk [vmem:[#allocation2 + $0x38] sm:$0xf] %vm3148, %v3122
        %3156 = vst.msk [vmem:[#allocation2 + $0x40] sm:$0xff] %vm1267, %v3123
        %3157 = vst.msk [vmem:[#allocation2 + $0x48] sm:$0xf] %vm3148, %v3124
        %3158 = vst.msk [vmem:[#allocation2 + $0x50] sm:$0xff] %vm1267, %v3125
        %3159 = vst.msk [vmem:[#allocation2 + $0x58] sm:$0xf] %vm3148, %v3126
        %3160 = vst.msk [vmem:[#allocation2 + $0x60] sm:$0xff] %vm1267, %v3127
        %3161 = vst.msk [vmem:[#allocation2 + $0x68] sm:$0xf] %vm3148, %v3128
        %3162 = vst.msk [vmem:[#allocation2 + $0x70] sm:$0xff] %vm1267, %v3129
        %3163 = vst.msk [vmem:[#allocation2 + $0x78] sm:$0xf] %vm3148, %v3130
        %3164 = vst.msk [vmem:[#allocation2 + $0x80] sm:$0xff] %vm1267, %v3131
        %3165 = vst.msk [vmem:[#allocation2 + $0x88] sm:$0xf] %vm3148, %v3132
        %3166 = vst.msk [vmem:[#allocation2 + $0x90] sm:$0xff] %vm1267, %v3133
        %3167 = vst.msk [vmem:[#allocation2 + $0x98] sm:$0xf] %vm3148, %v3134
        %3168 = vst.msk [vmem:[#allocation2 + $0xa0] sm:$0xff] %vm1267, %v3135
        %3169 = vst.msk [vmem:[#allocation2 + $0xa8] sm:$0xf] %vm3148, %v3136
        %3170 = vst.msk [vmem:[#allocation2 + $0xb0] sm:$0xff] %vm1267, %v3137
        %3171 = vst.msk [vmem:[#allocation2 + $0xb8] sm:$0xf] %vm3148, %v3138
        %3172 = vst.msk [vmem:[#allocation2 + $0xc0] sm:$0xff] %vm1267, %v3139
        %3173 = vst.msk [vmem:[#allocation2 + $0xc8] sm:$0xf] %vm3148, %v3140
        %3174 = vst.msk [vmem:[#allocation2 + $0xd0] sm:$0xff] %vm1267, %v3141
        %3175 = vst.msk [vmem:[#allocation2 + $0xd8] sm:$0xf] %vm3148, %v3142
        %3176 = vst.msk [vmem:[#allocation2 + $0xe0] sm:$0xff] %vm1267, %v3143
        %3177 = vst.msk [vmem:[#allocation2 + $0xe8] sm:$0xf] %vm3148, %v3144
        %3178 = vst.msk [vmem:[#allocation2 + $0xf0] sm:$0xff] %vm1267, %v3145
        %3179 = vst.msk [vmem:[#allocation2 + $0xf8] sm:$0xf] %vm3148, %v3146
      $region68: #{model_forward.4} parent=63 // pred_fallthru
        _
      %v3180 = vld [vmem:[#allocation2] sm:$0xff]
      %v3181 = vld [vmem:[#allocation2 + $0x8] sm:$0xff]
      %v3182 = vld [vmem:[#allocation2 + $0x10] sm:$0xff]
      %v3183 = vld [vmem:[#allocation2 + $0x18] sm:$0xff]
      %v3184 = vld [vmem:[#allocation2 + $0x20] sm:$0xff]
      %v3185 = vld [vmem:[#allocation2 + $0x28] sm:$0xff]
      %v3186 = vld [vmem:[#allocation2 + $0x30] sm:$0xff]
      %v3187 = vld [vmem:[#allocation2 + $0x38] sm:$0xff]
      %v3188 = vld [vmem:[#allocation2 + $0x40] sm:$0xff]
      %v3189 = vld [vmem:[#allocation2 + $0x48] sm:$0xff]
      %v3190 = vld [vmem:[#allocation2 + $0x50] sm:$0xff]
      %v3191 = vld [vmem:[#allocation2 + $0x58] sm:$0xff]
      %v3192 = vld [vmem:[#allocation2 + $0x60] sm:$0xff]
      %v3193 = vld [vmem:[#allocation2 + $0x68] sm:$0xff]
      %v3194 = vld [vmem:[#allocation2 + $0x70] sm:$0xff]
      %v3195 = vld [vmem:[#allocation2 + $0x78] sm:$0xff]
      %v3196 = vld [vmem:[#allocation2 + $0x80] sm:$0xff]
      %v3197 = vld [vmem:[#allocation2 + $0x88] sm:$0xff]
      %v3198 = vld [vmem:[#allocation2 + $0x90] sm:$0xff]
      %v3199 = vld [vmem:[#allocation2 + $0x98] sm:$0xff]
      %v3200 = vld [vmem:[#allocation2 + $0xa0] sm:$0xff]
      %v3201 = vld [vmem:[#allocation2 + $0xa8] sm:$0xff]
      %v3202 = vld [vmem:[#allocation2 + $0xb0] sm:$0xff]
      %v3203 = vld [vmem:[#allocation2 + $0xb8] sm:$0xff]
      %v3204 = vld [vmem:[#allocation2 + $0xc0] sm:$0xff]
      %v3205 = vld [vmem:[#allocation2 + $0xc8] sm:$0xff]
      %v3206 = vld [vmem:[#allocation2 + $0xd0] sm:$0xff]
      %v3207 = vld [vmem:[#allocation2 + $0xd8] sm:$0xff]
      %v3208 = vld [vmem:[#allocation2 + $0xe0] sm:$0xff]
      %v3209 = vld [vmem:[#allocation2 + $0xe8] sm:$0xff]
      %v3210 = vld [vmem:[#allocation2 + $0xf0] sm:$0xff]
      %v3211 = vld [vmem:[#allocation2 + $0xf8] sm:$0xff]
      %v3212 = vpack.c.bf16 %v3181, %v3180
      %v3213 = vpack.c.bf16 %v3183, %v3182
      %v3214 = vpack.c.bf16 %v3185, %v3184
      %v3215 = vpack.c.bf16 %v3187, %v3186
      %v3216 = vpack.c.bf16 %v3189, %v3188
      %v3217 = vpack.c.bf16 %v3191, %v3190
      %v3218 = vpack.c.bf16 %v3193, %v3192
      %v3219 = vpack.c.bf16 %v3195, %v3194
      %v3220 = vpack.c.bf16 %v3197, %v3196
      %v3221 = vpack.c.bf16 %v3199, %v3198
      %v3222 = vpack.c.bf16 %v3201, %v3200
      %v3223 = vpack.c.bf16 %v3203, %v3202
      %v3224 = vpack.c.bf16 %v3205, %v3204
      %v3225 = vpack.c.bf16 %v3207, %v3206
      %v3226 = vpack.c.bf16 %v3209, %v3208
      %v3227 = vpack.c.bf16 %v3211, %v3210
      %v3244 = vunpack.c.l.b16 %v3212
      %v3245 = vunpack.c.h.b16 %v3212
      %v3246 = vunpack.c.l.b16 %v3213
      %v3247 = vunpack.c.h.b16 %v3213
      %v3248 = vunpack.c.l.b16 %v3214
      %v3249 = vunpack.c.h.b16 %v3214
      %v3250 = vunpack.c.l.b16 %v3215
      %v3251 = vunpack.c.h.b16 %v3215
      %v3252 = vunpack.c.l.b16 %v3216
      %v3253 = vunpack.c.h.b16 %v3216
      %v3254 = vunpack.c.l.b16 %v3217
      %v3255 = vunpack.c.h.b16 %v3217
      %v3256 = vunpack.c.l.b16 %v3218
      %v3257 = vunpack.c.h.b16 %v3218
      %v3258 = vunpack.c.l.b16 %v3219
      %v3259 = vunpack.c.h.b16 %v3219
      %v3260 = vunpack.c.l.b16 %v3220
      %v3261 = vunpack.c.h.b16 %v3220
      %v3262 = vunpack.c.l.b16 %v3221
      %v3263 = vunpack.c.h.b16 %v3221
      %v3264 = vunpack.c.l.b16 %v3222
      %v3265 = vunpack.c.h.b16 %v3222
      %v3266 = vunpack.c.l.b16 %v3223
      %v3267 = vunpack.c.h.b16 %v3223
      %v3268 = vunpack.c.l.b16 %v3224
      %v3269 = vunpack.c.h.b16 %v3224
      %v3270 = vunpack.c.l.b16 %v3225
      %v3271 = vunpack.c.h.b16 %v3225
      %v3272 = vunpack.c.l.b16 %v3226
      %v3273 = vunpack.c.h.b16 %v3226
      %v3274 = vunpack.c.l.b16 %v3227
      %v3275 = vunpack.c.h.b16 %v3227
      %v3276 = vpack.c.b16 %v3244, %v3244
      %v3277 = vpack.c.b16 %v3245, %v3245
      %v3278 = vpack.c.b16 %v3246, %v3246
      %v3279 = vpack.c.b16 %v3247, %v3247
      %v3280 = vpack.c.b16 %v3248, %v3248
      %v3281 = vpack.c.b16 %v3249, %v3249
      %v3282 = vpack.c.b16 %v3250, %v3250
      %v3283 = vpack.c.b16 %v3251, %v3251
      %v3284 = vpack.c.b16 %v3252, %v3252
      %v3285 = vpack.c.b16 %v3253, %v3253
      %v3286 = vpack.c.b16 %v3254, %v3254
      %v3287 = vpack.c.b16 %v3255, %v3255
      %v3288 = vpack.c.b16 %v3256, %v3256
      %v3289 = vpack.c.b16 %v3257, %v3257
      %v3290 = vpack.c.b16 %v3258, %v3258
      %v3291 = vpack.c.b16 %v3259, %v3259
      %v3292 = vpack.c.b16 %v3260, %v3260
      %v3293 = vpack.c.b16 %v3261, %v3261
      %v3294 = vpack.c.b16 %v3262, %v3262
      %v3295 = vpack.c.b16 %v3263, %v3263
      %v3296 = vpack.c.b16 %v3264, %v3264
      %v3297 = vpack.c.b16 %v3265, %v3265
      %v3298 = vpack.c.b16 %v3266, %v3266
      %v3299 = vpack.c.b16 %v3267, %v3267
      %v3300 = vpack.c.b16 %v3268, %v3268
      %v3301 = vpack.c.b16 %v3269, %v3269
      %v3302 = vpack.c.b16 %v3270, %v3270
      %v3303 = vpack.c.b16 %v3271, %v3271
      %v3304 = vpack.c.b16 %v3272, %v3272
      %v3305 = vpack.c.b16 %v3273, %v3273
      %v3306 = vpack.c.b16 %v3274, %v3274
      %v3307 = vpack.c.b16 %v3275, %v3275
      %vm3340 = vcmask 519168
      %3341 = vst.msk [vmem:[%s594] sm:$0xf] %vm3340, %v3276
      %3342 = vst.msk [vmem:[%s594 + $0x4] sm:$0xf] %vm3340, %v3277
      %3343 = vst.msk [vmem:[%s594 + $0x8] sm:$0xf] %vm3340, %v3278
      %3344 = vst.msk [vmem:[%s594 + $0xc] sm:$0xf] %vm3340, %v3279
      %3345 = vst.msk [vmem:[%s594 + $0x10] sm:$0xf] %vm3340, %v3280
      %3346 = vst.msk [vmem:[%s594 + $0x14] sm:$0xf] %vm3340, %v3281
      %3347 = vst.msk [vmem:[%s594 + $0x18] sm:$0xf] %vm3340, %v3282
      %3348 = vst.msk [vmem:[%s594 + $0x1c] sm:$0xf] %vm3340, %v3283
      %3349 = vst.msk [vmem:[%s594 + $0x20] sm:$0xf] %vm3340, %v3284
      %3350 = vst.msk [vmem:[%s594 + $0x24] sm:$0xf] %vm3340, %v3285
      %3351 = vst.msk [vmem:[%s594 + $0x28] sm:$0xf] %vm3340, %v3286
      %3352 = vst.msk [vmem:[%s594 + $0x2c] sm:$0xf] %vm3340, %v3287
      %3353 = vst.msk [vmem:[%s594 + $0x30] sm:$0xf] %vm3340, %v3288
      %3354 = vst.msk [vmem:[%s594 + $0x34] sm:$0xf] %vm3340, %v3289
      %3355 = vst.msk [vmem:[%s594 + $0x38] sm:$0xf] %vm3340, %v3290
      %3356 = vst.msk [vmem:[%s594 + $0x3c] sm:$0xf] %vm3340, %v3291
      %3357 = vst.msk [vmem:[%s594 + $0x40] sm:$0xf] %vm3340, %v3292
      %3358 = vst.msk [vmem:[%s594 + $0x44] sm:$0xf] %vm3340, %v3293
      %3359 = vst.msk [vmem:[%s594 + $0x48] sm:$0xf] %vm3340, %v3294
      %3360 = vst.msk [vmem:[%s594 + $0x4c] sm:$0xf] %vm3340, %v3295
      %3361 = vst.msk [vmem:[%s594 + $0x50] sm:$0xf] %vm3340, %v3296
      %3362 = vst.msk [vmem:[%s594 + $0x54] sm:$0xf] %vm3340, %v3297
      %3363 = vst.msk [vmem:[%s594 + $0x58] sm:$0xf] %vm3340, %v3298
      %3364 = vst.msk [vmem:[%s594 + $0x5c] sm:$0xf] %vm3340, %v3299
      %3365 = vst.msk [vmem:[%s594 + $0x60] sm:$0xf] %vm3340, %v3300
      %3366 = vst.msk [vmem:[%s594 + $0x64] sm:$0xf] %vm3340, %v3301
      %3367 = vst.msk [vmem:[%s594 + $0x68] sm:$0xf] %vm3340, %v3302
      %3368 = vst.msk [vmem:[%s594 + $0x6c] sm:$0xf] %vm3340, %v3303
      %3369 = vst.msk [vmem:[%s594 + $0x70] sm:$0xf] %vm3340, %v3304
      %3370 = vst.msk [vmem:[%s594 + $0x74] sm:$0xf] %vm3340, %v3305
      %3371 = vst.msk [vmem:[%s594 + $0x78] sm:$0xf] %vm3340, %v3306
      %3372 = vst.msk [vmem:[%s594 + $0x7c] sm:$0xf] %vm3340, %v3307
      %v3373 = vsel %vm1267, %v3180, 0.0
      %v3374 = vsel %vm1267, %v3181, 0.0
      %v3375 = vadd.f32 %v3373, %v3374
      %v3376 = vsel %vm1267, %v3182, 0.0
      %v3377 = vadd.f32 %v3375, %v3376
      %v3378 = vsel %vm1267, %v3183, 0.0
      %v3379 = vadd.f32 %v3377, %v3378
      %v3380 = vsel %vm1267, %v3184, 0.0
      %v3381 = vadd.f32 %v3379, %v3380
      %v3382 = vsel %vm1267, %v3185, 0.0
      %v3383 = vadd.f32 %v3381, %v3382
      %v3384 = vsel %vm1267, %v3186, 0.0
      %v3385 = vadd.f32 %v3383, %v3384
      %v3386 = vsel %vm1267, %v3187, 0.0
      %v3387 = vadd.f32 %v3385, %v3386
      %v3388 = vsel %vm1267, %v3188, 0.0
      %v3389 = vadd.f32 %v3387, %v3388
      %v3390 = vsel %vm1267, %v3189, 0.0
      %v3391 = vadd.f32 %v3389, %v3390
      %v3392 = vsel %vm1267, %v3190, 0.0
      %v3393 = vadd.f32 %v3391, %v3392
      %v3394 = vsel %vm1267, %v3191, 0.0
      %v3395 = vadd.f32 %v3393, %v3394
      %v3396 = vsel %vm1267, %v3192, 0.0
      %v3397 = vadd.f32 %v3395, %v3396
      %v3398 = vsel %vm1267, %v3193, 0.0
      %v3399 = vadd.f32 %v3397, %v3398
      %v3400 = vsel %vm1267, %v3194, 0.0
      %v3401 = vadd.f32 %v3399, %v3400
      %v3402 = vsel %vm1267, %v3195, 0.0
      %v3403 = vadd.f32 %v3401, %v3402
      %v3404 = vsel %vm1267, %v3196, 0.0
      %v3405 = vadd.f32 %v3403, %v3404
      %v3406 = vsel %vm1267, %v3197, 0.0
      %v3407 = vadd.f32 %v3405, %v3406
      %v3408 = vsel %vm1267, %v3198, 0.0
      %v3409 = vadd.f32 %v3407, %v3408
      %v3410 = vsel %vm1267, %v3199, 0.0
      %v3411 = vadd.f32 %v3409, %v3410
      %v3412 = vsel %vm1267, %v3200, 0.0
      %v3413 = vadd.f32 %v3411, %v3412
      %v3414 = vsel %vm1267, %v3201, 0.0
      %v3415 = vadd.f32 %v3413, %v3414
      %v3416 = vsel %vm1267, %v3202, 0.0
      %v3417 = vadd.f32 %v3415, %v3416
      %v3418 = vsel %vm1267, %v3203, 0.0
      %v3419 = vadd.f32 %v3417, %v3418
      %v3420 = vsel %vm1267, %v3204, 0.0
      %v3421 = vadd.f32 %v3419, %v3420
      %v3422 = vsel %vm1267, %v3205, 0.0
      %v3423 = vadd.f32 %v3421, %v3422
      %v3424 = vsel %vm1267, %v3206, 0.0
      %v3425 = vadd.f32 %v3423, %v3424
      %v3426 = vsel %vm1267, %v3207, 0.0
      %v3427 = vadd.f32 %v3425, %v3426
      %v3428 = vsel %vm1267, %v3208, 0.0
      %v3429 = vadd.f32 %v3427, %v3428
      %v3430 = vsel %vm1267, %v3209, 0.0
      %v3431 = vadd.f32 %v3429, %v3430
      %v3432 = vsel %vm1267, %v3210, 0.0
      %v3433 = vadd.f32 %v3431, %v3432
      %v3434 = vsel %vm1267, %v3211, 0.0
      %v3435 = vadd.f32 %v3433, %v3434
      %v3436 = vrot.slane %v3435, 4
      %v3437 = vadd.f32 %v3435, %v3436
      %v3438 = vrot.slane %v3437, 2
      %v3439 = vadd.f32 %v3437, %v3438
      %v3440 = vrot.slane %v3439, 1
      %v3441 = vadd.f32 %v3439, %v3440
      %vm3442 = vcmask 516096
      %3443 = vst.msk [vmem:[%s602] sm:$0x1] %vm3442, %v3441
      %v3444 = vmul.f32 %v3180, %v3180
      %v3445 = vmul.f32 %v3181, %v3181
      %v3446 = vmul.f32 %v3182, %v3182
      %v3447 = vmul.f32 %v3183, %v3183
      %v3448 = vmul.f32 %v3184, %v3184
      %v3449 = vmul.f32 %v3185, %v3185
      %v3450 = vmul.f32 %v3186, %v3186
      %v3451 = vmul.f32 %v3187, %v3187
      %v3452 = vmul.f32 %v3188, %v3188
      %v3453 = vmul.f32 %v3189, %v3189
      %v3454 = vmul.f32 %v3190, %v3190
      %v3455 = vmul.f32 %v3191, %v3191
      %v3456 = vmul.f32 %v3192, %v3192
      %v3457 = vmul.f32 %v3193, %v3193
      %v3458 = vmul.f32 %v3194, %v3194
      %v3459 = vmul.f32 %v3195, %v3195
      %v3460 = vmul.f32 %v3196, %v3196
      %v3461 = vmul.f32 %v3197, %v3197
      %v3462 = vmul.f32 %v3198, %v3198
      %v3463 = vmul.f32 %v3199, %v3199
      %v3464 = vmul.f32 %v3200, %v3200
      %v3465 = vmul.f32 %v3201, %v3201
      %v3466 = vmul.f32 %v3202, %v3202
      %v3467 = vmul.f32 %v3203, %v3203
      %v3468 = vmul.f32 %v3204, %v3204
      %v3469 = vmul.f32 %v3205, %v3205
      %v3470 = vmul.f32 %v3206, %v3206
      %v3471 = vmul.f32 %v3207, %v3207
      %v3472 = vmul.f32 %v3208, %v3208
      %v3473 = vmul.f32 %v3209, %v3209
      %v3474 = vmul.f32 %v3210, %v3210
      %v3475 = vmul.f32 %v3211, %v3211
      %v3476 = vsel %vm1267, %v3444, 0.0
      %v3477 = vsel %vm1267, %v3445, 0.0
      %v3478 = vadd.f32 %v3476, %v3477
      %v3479 = vsel %vm1267, %v3446, 0.0
      %v3480 = vadd.f32 %v3478, %v3479
      %v3481 = vsel %vm1267, %v3447, 0.0
      %v3482 = vadd.f32 %v3480, %v3481
      %v3483 = vsel %vm1267, %v3448, 0.0
      %v3484 = vadd.f32 %v3482, %v3483
      %v3485 = vsel %vm1267, %v3449, 0.0
      %v3486 = vadd.f32 %v3484, %v3485
      %v3487 = vsel %vm1267, %v3450, 0.0
      %v3488 = vadd.f32 %v3486, %v3487
      %v3489 = vsel %vm1267, %v3451, 0.0
      %v3490 = vadd.f32 %v3488, %v3489
      %v3491 = vsel %vm1267, %v3452, 0.0
      %v3492 = vadd.f32 %v3490, %v3491
      %v3493 = vsel %vm1267, %v3453, 0.0
      %v3494 = vadd.f32 %v3492, %v3493
      %v3495 = vsel %vm1267, %v3454, 0.0
      %v3496 = vadd.f32 %v3494, %v3495
      %v3497 = vsel %vm1267, %v3455, 0.0
      %v3498 = vadd.f32 %v3496, %v3497
      %v3499 = vsel %vm1267, %v3456, 0.0
      %v3500 = vadd.f32 %v3498, %v3499
      %v3501 = vsel %vm1267, %v3457, 0.0
      %v3502 = vadd.f32 %v3500, %v3501
      %v3503 = vsel %vm1267, %v3458, 0.0
      %v3504 = vadd.f32 %v3502, %v3503
      %v3505 = vsel %vm1267, %v3459, 0.0
      %v3506 = vadd.f32 %v3504, %v3505
      %v3507 = vsel %vm1267, %v3460, 0.0
      %v3508 = vadd.f32 %v3506, %v3507
      %v3509 = vsel %vm1267, %v3461, 0.0
      %v3510 = vadd.f32 %v3508, %v3509
      %v3511 = vsel %vm1267, %v3462, 0.0
      %v3512 = vadd.f32 %v3510, %v3511
      %v3513 = vsel %vm1267, %v3463, 0.0
      %v3514 = vadd.f32 %v3512, %v3513
      %v3515 = vsel %vm1267, %v3464, 0.0
      %v3516 = vadd.f32 %v3514, %v3515
      %v3517 = vsel %vm1267, %v3465, 0.0
      %v3518 = vadd.f32 %v3516, %v3517
      %v3519 = vsel %vm1267, %v3466, 0.0
      %v3520 = vadd.f32 %v3518, %v3519
      %v3521 = vsel %vm1267, %v3467, 0.0
      %v3522 = vadd.f32 %v3520, %v3521
      %v3523 = vsel %vm1267, %v3468, 0.0
      %v3524 = vadd.f32 %v3522, %v3523
      %v3525 = vsel %vm1267, %v3469, 0.0
      %v3526 = vadd.f32 %v3524, %v3525
      %v3527 = vsel %vm1267, %v3470, 0.0
      %v3528 = vadd.f32 %v3526, %v3527
      %v3529 = vsel %vm1267, %v3471, 0.0
      %v3530 = vadd.f32 %v3528, %v3529
      %v3531 = vsel %vm1267, %v3472, 0.0
      %v3532 = vadd.f32 %v3530, %v3531
      %v3533 = vsel %vm1267, %v3473, 0.0
      %v3534 = vadd.f32 %v3532, %v3533
      %v3535 = vsel %vm1267, %v3474, 0.0
      %v3536 = vadd.f32 %v3534, %v3535
      %v3537 = vsel %vm1267, %v3475, 0.0
      %v3538 = vadd.f32 %v3536, %v3537
      %v3539 = vrot.slane %v3538, 4
      %v3540 = vadd.f32 %v3538, %v3539
      %v3541 = vrot.slane %v3540, 2
      %v3542 = vadd.f32 %v3540, %v3541
      %v3543 = vrot.slane %v3542, 1
      %v3544 = vadd.f32 %v3542, %v3543
      %3545 = vst.msk [vmem:[%s602 + $0x1] sm:$0x1] %vm3442, %v3544
      %s3546 = smul.u32 16, %s29
      %p3547 = scmp.lt.s32.totalorder %s28, 1
      %s3548 = scalar_select %p3547, %s28, 1
      %p3549 = scmp.lt.s32.totalorder %s3546, 15
      %s3550 = scalar_select %p3549, %s3546, 15
      %s3551 = smul.addr %s3550, 2
      %s3552 = smul.addr %s3548, 32
      %s3553 = sadd.s32 %s3551, %s3552
      %s3554 = smul.addr %s3553, 4
      %s3555 = scalar_lea.vmem %s11, %s3554
      %p3556 = scmp.lt.s32.totalorder %s28, 1
      %s3557 = scalar_select %p3556, %s28, 1
      %p3558 = scmp.lt.s32.totalorder %s29, 0
      %s3559 = scalar_select %p3558, %s29, 0
      %s3560 = sadd.s32 %s3559, %s3557
      %s3561 = smul.addr %s3560, 2
      %s3562 = scalar_lea.vmem %s12, %s3561
      // Predicated region
      $region69: #{model_forward.4} parent=63 // pred_check
        %p3563 = pneg %p322
      $region70: #{model_forward.4} parent=63 // pred_check_branch
        %3565 = sbr.rel (%p3563) target = $region72
      $region71: #{model_forward.4} parent=63 // pred_region
        %s3566 = smul.u32 16, %s29
      $region72: #{model_forward.4} parent=63 // pred_fallthru
        _
      // Predicated region
      $region73: #{model_forward.4} parent=63 // pred_check
        %p3567 = pneg %p350
      $region74: #{model_forward.4} parent=63 // pred_check_branch
        %3569 = sbr.rel (%p3567) target = $region76
      $region75: #{model_forward.4} parent=63 // pred_region
        _
      $region76: #{model_forward.4} parent=63 // pred_fallthru
        _
    $region64: #{model_forward.4} parent=5 // pred_fallthru
      _
    %p3570 = scmp.le.s32.totalorder 2, %s19
    // Predicated region
    $region77: #{model_forward.4} parent=5 // pred_check
      %p3571 = pneg %p3570
    $region78: #{model_forward.4} parent=5 // pred_check_branch
      %3573 = sbr.rel (%p3571) target = $region80
    $region79: #{model_forward.4} parent=5 // pred_region
      %s3574 = ssub.s32 %s19, 2
      // Predicated region
      $region81: #{model_forward.4} parent=79 // pred_check
        %p3575 = pneg %p328
      $region82: #{model_forward.4} parent=79 // pred_check_branch
        %3577 = sbr.rel (%p3575) target = $region84
      $region83: #{model_forward.4} parent=79 // pred_region
        %s3578 = smul.u32 16, %s31
        %p3579 = scmp.lt.s32.totalorder %s30, 1
        %s3580 = scalar_select %p3579, %s30, 1
        %p3581 = scmp.lt.s32.totalorder %s3578, 15
        %s3582 = scalar_select %p3581, %s3578, 15
        %s3583 = smul.addr %s3582, 2
        %s3584 = smul.addr %s3580, 32
        %s3585 = sadd.s32 %s3583, %s3584
        %s3586 = smul.addr %s3585, 4
        %s3587 = scalar_lea.vmem %s11, %s3586
      $region84: #{model_forward.4} parent=79 // pred_fallthru
        _
      // Predicated region
      $region85: #{model_forward.4} parent=79 // pred_check
        %p3588 = pneg %p356
      $region86: #{model_forward.4} parent=79 // pred_check_branch
        %3590 = sbr.rel (%p3588) target = $region88
      $region87: #{model_forward.4} parent=79 // pred_region
        %p3591 = scmp.lt.s32.totalorder %s30, 1
        %s3592 = scalar_select %p3591, %s30, 1
        %p3593 = scmp.lt.s32.totalorder %s31, 0
        %s3594 = scalar_select %p3593, %s31, 0
        %s3595 = sadd.s32 %s3594, %s3592
        %s3596 = smul.addr %s3595, 2
        %s3597 = scalar_lea.vmem %s12, %s3596
      $region88: #{model_forward.4} parent=79 // pred_fallthru
        _
    $region80: #{model_forward.4} parent=5 // pred_fallthru
      _
  $region6: #{model_forward.4} parent=0 // loop_footer
    %s23 = sadd.s32 1, %s19
  $region7: #{model_forward.4} parent=0 // loop_footer_branch
    %18 = sbr.rel target = $region3
  $region8: #{model_forward.4} parent=0 // loop_exit
    _

</llo_original>
